<compile_context>
chip_gen: v7x
topology: tpu7x:2x2x1
jax: 0.10.0
libtpu: 0.0.40
codegen_flags: <defaults>
</compile_context>

<pallas_src>
import jax
import jax.numpy as jnp
from jax.experimental import pallas as pl
from jax.experimental.pallas import tpu as pltpu


def _round_up(x, m):
    return (x + m - 1) // m * m


# ------------------------------ Pallas kernels ------------------------------

def _conv_pool_kernel(p_ref, w_ref, b_ref, o_ref):
    """Fused conv-GEMM + bias + ReLU + 2x2 max-pool.

    p_ref: (4, TM, K)  bf16 im2col patches, one slab per 2x2 pool position.
    w_ref: (K, Np)     bf16 (C*kh*kw, O) weight slab, O zero-padded to 128.
    b_ref: (1, Np)     f32 zero-padded bias.
    o_ref: (TM, Np)    bf16 pooled + activated rows (b, hp, wp) x channels.
    """
    w = w_ref[...]
    z = jnp.dot(p_ref[0], w, preferred_element_type=jnp.float32)
    for s in range(1, 4):
        z = jnp.maximum(z, jnp.dot(p_ref[s], w,
                                   preferred_element_type=jnp.float32))
    # max over the pool window commutes with the monotone bias-add + ReLU.
    o_ref[...] = jnp.maximum(z + b_ref[...], 0.0).astype(o_ref.dtype)


def _fc_stack_kernel(x_ref, w1_ref, b1_ref, w2_ref, b2_ref, w3_ref, b3_ref,
                     o_ref):
    """fc1+ReLU -> fc2+ReLU -> fc3 fused; intermediates stay on-chip."""
    h = jnp.dot(x_ref[...], w1_ref[...],
                preferred_element_type=jnp.float32) + b1_ref[...]
    h = jnp.maximum(h, 0.0).astype(w2_ref.dtype)
    h = jnp.dot(h, w2_ref[...],
                preferred_element_type=jnp.float32) + b2_ref[...]
    h = jnp.maximum(h, 0.0).astype(w3_ref.dtype)
    o = jnp.dot(h, w3_ref[...],
                preferred_element_type=jnp.float32) + b3_ref[...]
    o_ref[...] = o.astype(o_ref.dtype)


# ------------------------------- wrappers -----------------------------------

def _im2col_pool4(x, kh, kw, pad):
    """NHWC im2col, pre-split into the four 2x2 max-pool window positions.

    Returns (4, B*Hp*Wp, C*kh*kw) with K ordered (C, kh, kw) to match the
    PyTorch Conv2d weight layout (no K padding), plus (Hp, Wp).
    """
    B, H, W, C = x.shape
    if pad:
        x = jnp.pad(x, ((0, 0), (pad, pad), (pad, pad), (0, 0)))
    Ho = H + 2 * pad - kh + 1
    Wo = W + 2 * pad - kw + 1
    taps = [x[:, i:i + Ho, j:j + Wo, :] for i in range(kh) for j in range(kw)]
    cols = jnp.stack(taps, axis=-1)                 # (B, Ho, Wo, C, kh*kw)
    cols = cols.reshape(B, Ho, Wo, C * kh * kw)     # K order = (C, kh, kw)
    Hp, Wp = Ho // 2, Wo // 2
    subs = [cols[:, a::2, c::2, :] for a in range(2) for c in range(2)]
    p4 = jnp.stack(subs, axis=0)                    # (4, B, Hp, Wp, K)
    return p4.reshape(4, B * Hp * Wp, C * kh * kw), Hp, Wp


def conv_relu_pool(x, w_slab, b_slab, *, kh, kw, pad, out_ch, tm_max=512):
    """x: (B,H,W,C) bf16 NHWC; w_slab: (K, Np) bf16; -> (B,Hp,Wp,out_ch) bf16."""
    B = x.shape[0]
    p4, Hp, Wp = _im2col_pool4(x, kh, kw, pad)
    _, M, K = p4.shape
    Np = w_slab.shape[1]

    # >= 2 M tiles so both v7x TensorCores get work; tm_max bounds VMEM at
    # large batch (raise to 1024-2048 on single-TC v5e/v6e parts).
    TM = min(tm_max, max(8, _round_up(pl.cdiv(M, 2), 8)))
    Mp = _round_up(M, TM)
    if Mp != M:
        p4 = jnp.pad(p4, ((0, 0), (0, Mp - M), (0, 0)))

    out = pl.pallas_call(
        _conv_pool_kernel,
        out_shape=jax.ShapeDtypeStruct((Mp, Np), jnp.bfloat16),
        grid=(Mp // TM,),
        in_specs=[
            pl.BlockSpec((4, TM, K), lambda m: (0, m, 0)),
            pl.BlockSpec((K, Np), lambda m: (0, 0)),
            pl.BlockSpec((1, Np), lambda m: (0, 0)),
        ],
        out_specs=pl.BlockSpec((TM, Np), lambda m: (m, 0)),
        compiler_params=pltpu.CompilerParams(
            dimension_semantics=("parallel",)),
    )(p4, w_slab, b_slab)

    return out[:M, :out_ch].reshape(B, Hp, Wp, out_ch)


def fc_stack(y, packed, *, out_dim=10, tb_max=256):
    """y: (B,Hf,Wf,Cf) bf16 NHWC pooled conv features -> (B, out_dim) f32."""
    B, Hf, Wf, Cf = y.shape
    F = Hf * Wf * Cf
    feat = y.reshape(B, F)                          # NHWC flatten, bf16

    TB = min(tb_max, _round_up(B, 8))
    Bp = _round_up(B, TB)
    if Bp != B:
        feat = jnp.pad(feat, ((0, Bp - B), (0, 0)))

    w1, b1 = packed["fc_w1"], packed["fc_b1"]
    w2, b2 = packed["fc_w2"], packed["fc_b2"]
    w3, b3 = packed["fc_w3"], packed["fc_b3"]
    Np = w3.shape[1]

    out = pl.pallas_call(
        _fc_stack_kernel,
        out_shape=jax.ShapeDtypeStruct((Bp, Np), jnp.float32),
        grid=(Bp // TB,),
        in_specs=[
            pl.BlockSpec((TB, F), lambda b: (b, 0)),
            pl.BlockSpec(w1.shape, lambda b: (0, 0)),
            pl.BlockSpec(b1.shape, lambda b: (0, 0)),
            pl.BlockSpec(w2.shape, lambda b: (0, 0)),
            pl.BlockSpec(b2.shape, lambda b: (0, 0)),
            pl.BlockSpec(w3.shape, lambda b: (0, 0)),
            pl.BlockSpec(b3.shape, lambda b: (0, 0)),
        ],
        out_specs=pl.BlockSpec((TB, Np), lambda b: (b, 0)),
        compiler_params=pltpu.CompilerParams(
            dimension_semantics=("parallel",)),
    )(feat, w1, b1, w2, b2, w3, b3)
    return out[:B, :out_dim]


# ------------------------------ param packing --------------------------------

def prepare_params(params, *, lane=128):
    """One-time weight packing (PyTorch layouts -> lane-dense bf16 slabs)."""

    def conv_slab(w, b):
        O, C, kh, kw = w.shape
        K = C * kh * kw
        Np = _round_up(O, lane)
        w_slab = jnp.pad(w.reshape(O, K).T,
                         ((0, 0), (0, Np - O))).astype(jnp.bfloat16)
        b_slab = jnp.pad(b, (0, Np - O)).reshape(1, Np).astype(jnp.float32)
        return w_slab, b_slab

    def fc_slab(w, b, in_pad_to=None):
        out_f, in_f = w.shape
        Np = _round_up(out_f, lane)
        Kp = in_f if in_pad_to is None else in_pad_to
        w_slab = jnp.pad(w.T, ((0, Kp - in_f),
                               (0, Np - out_f))).astype(jnp.bfloat16)
        b_slab = jnp.pad(b, (0, Np - out_f)).reshape(1, Np).astype(jnp.float32)
        return w_slab, b_slab

    c1w, c1b = conv_slab(params["conv1_w"], params["conv1_b"])
    c2w, c2b = conv_slab(params["conv2_w"], params["conv2_b"])

    # fc1: permute input dim from torch's NCHW flatten order (C,H,W) to our
    # NHWC flatten order (H,W,C) -> identical function to .view(B,-1)+Linear.
    w1 = params["fc1_w"]
    H1 = w1.shape[0]
    Cf, Hf, Wf = 16, 5, 5
    w1 = w1.reshape(H1, Cf, Hf, Wf).transpose(0, 2, 3, 1).reshape(H1, Cf * Hf * Wf)

    f1w, f1b = fc_slab(w1, params["fc1_b"])                       # (400,128)
    f2w, f2b = fc_slab(params["fc2_w"], params["fc2_b"], 128)     # (128,128)
    f3w, f3b = fc_slab(params["fc3_w"], params["fc3_b"], 128)     # (128,128)

    return {
        "c1_w": c1w, "c1_b": c1b, "c2_w": c2w, "c2_b": c2b,
        "fc_w1": f1w, "fc_b1": f1b, "fc_w2": f2w, "fc_b2": f2b,
        "fc_w3": f3w, "fc_b3": f3b,
    }


# -------------------------------- LeNet --------------------------------------

def init_params(key):
    ks = jax.random.split(key, 10)

    def w(k, shape, fan_in):
        return (jax.random.normal(k, shape, jnp.float32)
                / jnp.sqrt(jnp.float32(fan_in)))

    return {
        "conv1_w": w(ks[0], (6, 1, 5, 5), 25),   "conv1_b": w(ks[1], (6,), 25),
        "conv2_w": w(ks[2], (16, 6, 5, 5), 150), "conv2_b": w(ks[3], (16,), 150),
        "fc1_w":   w(ks[4], (120, 400), 400),    "fc1_b":   w(ks[5], (120,), 400),
        "fc2_w":   w(ks[6], (84, 120), 120),     "fc2_b":   w(ks[7], (84,), 120),
        "fc3_w":   w(ks[8], (10, 84), 84),       "fc3_b":   w(ks[9], (10,), 84),
    }


def lenet_forward(packed, x):
    # x: (B, 1, 28, 28) NCHW float32 (PyTorch convention at the boundary).
    x = jnp.transpose(x, (0, 2, 3, 1)).astype(jnp.bfloat16)      # NHWC, once
    x = conv_relu_pool(x, packed["c1_w"], packed["c1_b"],
                       kh=5, kw=5, pad=2, out_ch=6)              # (B,14,14,6)
    x = conv_relu_pool(x, packed["c2_w"], packed["c2_b"],
                       kh=5, kw=5, pad=0, out_ch=16)             # (B,5,5,16)
    return fc_stack(x, packed)                                   # (B,10) f32


def lenet_reference(params, x):
    """Pure-XLA f32 reference (lax.conv / reduce_window / dot) for validation."""
    hp = jax.lax.Precision.HIGHEST

    def conv(z, w, b, pad):
        y = jax.lax.conv_general_dilated(
            z, jnp.transpose(w, (2, 3, 1, 0)), (1, 1),
            [(pad, pad), (pad, pad)],
            dimension_numbers=("NHWC", "HWIO", "NHWC"), precision=hp)
        return jnp.maximum(y + b, 0.0)

    def pool(z):
        return jax.lax.reduce_window(z, -jnp.inf, jax.lax.max,
                                     (1, 2, 2, 1), (1, 2, 2, 1), "VALID")

    y = jnp.transpose(x, (0, 2, 3, 1))
    y = pool(conv(y, params["conv1_w"], params["conv1_b"], 2))
    y = pool(conv(y, params["conv2_w"], params["conv2_b"], 0))
    B = y.shape[0]
    feat = jnp.transpose(y, (0, 3, 1, 2)).reshape(B, -1)   # torch .view(B,-1)
    y = jnp.maximum(jnp.dot(feat, params["fc1_w"].T, precision=hp)
                    + params["fc1_b"], 0.0)
    y = jnp.maximum(jnp.dot(y, params["fc2_w"].T, precision=hp)
                    + params["fc2_b"], 0.0)
    return jnp.dot(y, params["fc3_w"].T, precision=hp) + params["fc3_b"]


if __name__ == "__main__":
    # LeNet's fc1 (16*5*5 inputs) implies a 28x28 single-channel input.
    x = jax.random.normal(jax.random.PRNGKey(0), (2, 1, 28, 28),
                          dtype=jnp.float32)
    params = init_params(jax.random.PRNGKey(42))
    packed = prepare_params(params)                     # packed once, not per call

    out = jax.block_until_ready(jax.jit(lenet_forward)(packed, x))
    assert out.shape == (2, 10) and out.dtype == jnp.float32, (out.shape,
                                                               out.dtype)

    ref = jax.block_until_ready(jax.jit(lenet_reference)(params, x))
    err = float(jnp.max(jnp.abs(out - ref)))
    # bf16 GEMM operands (f32 accumulate) vs an f32 HIGHEST-precision reference.
    assert err < 5e-2, f"mismatch vs reference: max abs err = {err}"
    print("KERNEL_OK")
</pallas_src>

<mosaic_0001>
module attributes {stable_mosaic.version = 11 : i64} {
  func.func @_conv_pool_kernel(%arg0: i32, %arg1: memref<4x200x25xbf16, #tpu.memory_space<vmem>>, %arg2: memref<25x128xbf16, #tpu.memory_space<vmem>>, %arg3: memref<1x128xf32, #tpu.memory_space<vmem>>, %arg4: memref<200x128xbf16, #tpu.memory_space<vmem>>) attributes {dimension_semantics = [#tpu.dimension_semantics<parallel>], iteration_bounds = array<i64: 2>, scalar_prefetch = 0 : i64, scratch_operands = 0 : i64, tpu.core_type = #tpu.core_type<tc>, window_params = [{transform_indices = @transform_0, window_bounds = array<i64: 4, 200, 25>}, {pipeline_mode = #tpu.pipeline_mode<synchronous>, transform_indices = @transform_1, window_bounds = array<i64: 25, 128>}, {pipeline_mode = #tpu.pipeline_mode<synchronous>, transform_indices = @transform_2, window_bounds = array<i64: 1, 128>}, {transform_indices = @transform_3, window_bounds = array<i64: 200, 128>}]} {
    %c0 = arith.constant 0 : index
    %c0_0 = arith.constant 0 : index
    %0 = vector.load %arg2[%c0, %c0_0] : memref<25x128xbf16, #tpu.memory_space<vmem>>, vector<25x128xbf16>
    %c0_1 = arith.constant 0 : index
    %c0_2 = arith.constant 0 : index
    %c0_3 = arith.constant 0 : index
    %1 = vector.load %arg1[%c0_1, %c0_2, %c0_3] : memref<4x200x25xbf16, #tpu.memory_space<vmem>>, vector<1x200x25xbf16>
    %2 = vector.shape_cast %1 : vector<1x200x25xbf16> to vector<200x25xbf16>
    %cst = arith.constant dense<0.000000e+00> : vector<200x128xf32>
    %3 = tpu.matmul %2, %0, %cst {dimension_numbers = #tpu.dot_dimension_numbers<[1], [0], [0], [1], [0, 0, 1, 1], [], []>} : vector<200x25xbf16>, vector<25x128xbf16>, vector<200x128xf32> -> vector<200x128xf32>
    %c1 = arith.constant 1 : index
    %c0_4 = arith.constant 0 : index
    %c0_5 = arith.constant 0 : index
    %4 = vector.load %arg1[%c1, %c0_4, %c0_5] : memref<4x200x25xbf16, #tpu.memory_space<vmem>>, vector<1x200x25xbf16>
    %5 = vector.shape_cast %4 : vector<1x200x25xbf16> to vector<200x25xbf16>
    %cst_6 = arith.constant dense<0.000000e+00> : vector<200x128xf32>
    %6 = tpu.matmul %5, %0, %cst_6 {dimension_numbers = #tpu.dot_dimension_numbers<[1], [0], [0], [1], [0, 0, 1, 1], [], []>} : vector<200x25xbf16>, vector<25x128xbf16>, vector<200x128xf32> -> vector<200x128xf32>
    %7 = arith.maximumf %3, %6 : vector<200x128xf32>
    %c2 = arith.constant 2 : index
    %c0_7 = arith.constant 0 : index
    %c0_8 = arith.constant 0 : index
    %8 = vector.load %arg1[%c2, %c0_7, %c0_8] : memref<4x200x25xbf16, #tpu.memory_space<vmem>>, vector<1x200x25xbf16>
    %9 = vector.shape_cast %8 : vector<1x200x25xbf16> to vector<200x25xbf16>
    %cst_9 = arith.constant dense<0.000000e+00> : vector<200x128xf32>
    %10 = tpu.matmul %9, %0, %cst_9 {dimension_numbers = #tpu.dot_dimension_numbers<[1], [0], [0], [1], [0, 0, 1, 1], [], []>} : vector<200x25xbf16>, vector<25x128xbf16>, vector<200x128xf32> -> vector<200x128xf32>
    %11 = arith.maximumf %7, %10 : vector<200x128xf32>
    %c3 = arith.constant 3 : index
    %c0_10 = arith.constant 0 : index
    %c0_11 = arith.constant 0 : index
    %12 = vector.load %arg1[%c3, %c0_10, %c0_11] : memref<4x200x25xbf16, #tpu.memory_space<vmem>>, vector<1x200x25xbf16>
    %13 = vector.shape_cast %12 : vector<1x200x25xbf16> to vector<200x25xbf16>
    %cst_12 = arith.constant dense<0.000000e+00> : vector<200x128xf32>
    %14 = tpu.matmul %13, %0, %cst_12 {dimension_numbers = #tpu.dot_dimension_numbers<[1], [0], [0], [1], [0, 0, 1, 1], [], []>} : vector<200x25xbf16>, vector<25x128xbf16>, vector<200x128xf32> -> vector<200x128xf32>
    %15 = arith.maximumf %11, %14 : vector<200x128xf32>
    %c0_13 = arith.constant 0 : index
    %c0_14 = arith.constant 0 : index
    %16 = vector.load %arg3[%c0_13, %c0_14] : memref<1x128xf32, #tpu.memory_space<vmem>>, vector<1x128xf32>
    %17 = vector.broadcast %16 : vector<1x128xf32> to vector<200x128xf32>
    %18 = arith.addf %15, %17 : vector<200x128xf32>
    %cst_15 = arith.constant 0.000000e+00 : f32
    %19 = vector.broadcast %cst_15 : f32 to vector<200x128xf32>
    %20 = arith.maximumf %18, %19 : vector<200x128xf32>
    %21 = arith.truncf %20 : vector<200x128xf32> to vector<200x128xbf16>
    %c0_16 = arith.constant 0 : index
    %c0_17 = arith.constant 0 : index
    %22 = vector.load %arg4[%c0_16, %c0_17] : memref<200x128xbf16, #tpu.memory_space<vmem>>, vector<200x128xbf16>
    tpu.vector_store %arg4[%c0_16, %c0_17], %21 {strides = array<i32>} : memref<200x128xbf16, #tpu.memory_space<vmem>>, vector<200x128xbf16>,
    return
  }
  func.func @transform_0(%arg0: i32) -> (i32, i32, i32) {
    %c0_i32 = arith.constant 0 : i32
    %c0_i32_0 = arith.constant 0 : i32
    %c0_i32_1 = arith.constant 0 : i32
    return %c0_i32, %arg0, %c0_i32_0 : i32, i32, i32
  }
  func.func @transform_1(%arg0: i32) -> (i32, i32) {
    %c0_i32 = arith.constant 0 : i32
    %c0_i32_0 = arith.constant 0 : i32
    %c0_i32_1 = arith.constant 0 : i32
    return %c0_i32, %c0_i32_0 : i32, i32
  }
  func.func @transform_2(%arg0: i32) -> (i32, i32) {
    %c0_i32 = arith.constant 0 : i32
    %c0_i32_0 = arith.constant 0 : i32
    %c0_i32_1 = arith.constant 0 : i32
    return %c0_i32, %c0_i32_0 : i32, i32
  }
  func.func @transform_3(%arg0: i32) -> (i32, i32) {
    %c0_i32 = arith.constant 0 : i32
    %c0_i32_0 = arith.constant 0 : i32
    return %arg0, %c0_i32 : i32, i32
  }
}

module attributes {stable_mosaic.version = 11 : i64} {
  func.func @_conv_pool_kernel(%arg0: i32, %arg1: memref<4x32x150xbf16, #tpu.memory_space<vmem>>, %arg2: memref<150x128xbf16, #tpu.memory_space<vmem>>, %arg3: memref<1x128xf32, #tpu.memory_space<vmem>>, %arg4: memref<32x128xbf16, #tpu.memory_space<vmem>>) attributes {dimension_semantics = [#tpu.dimension_semantics<parallel>], iteration_bounds = array<i64: 2>, scalar_prefetch = 0 : i64, scratch_operands = 0 : i64, tpu.core_type = #tpu.core_type<tc>, window_params = [{transform_indices = @transform_0, window_bounds = array<i64: 4, 32, 150>}, {pipeline_mode = #tpu.pipeline_mode<synchronous>, transform_indices = @transform_1, window_bounds = array<i64: 150, 128>}, {pipeline_mode = #tpu.pipeline_mode<synchronous>, transform_indices = @transform_2, window_bounds = array<i64: 1, 128>}, {transform_indices = @transform_3, window_bounds = array<i64: 32, 128>}]} {
    %c0 = arith.constant 0 : index
    %c0_0 = arith.constant 0 : index
    %0 = vector.load %arg2[%c0, %c0_0] : memref<150x128xbf16, #tpu.memory_space<vmem>>, vector<150x128xbf16>
    %c0_1 = arith.constant 0 : index
    %c0_2 = arith.constant 0 : index
    %c0_3 = arith.constant 0 : index
    %1 = vector.load %arg1[%c0_1, %c0_2, %c0_3] : memref<4x32x150xbf16, #tpu.memory_space<vmem>>, vector<1x32x150xbf16>
    %2 = vector.shape_cast %1 : vector<1x32x150xbf16> to vector<32x150xbf16>
    %cst = arith.constant dense<0.000000e+00> : vector<32x128xf32>
    %3 = tpu.matmul %2, %0, %cst {dimension_numbers = #tpu.dot_dimension_numbers<[1], [0], [0], [1], [0, 0, 1, 1], [], []>} : vector<32x150xbf16>, vector<150x128xbf16>, vector<32x128xf32> -> vector<32x128xf32>
    %c1 = arith.constant 1 : index
    %c0_4 = arith.constant 0 : index
    %c0_5 = arith.constant 0 : index
    %4 = vector.load %arg1[%c1, %c0_4, %c0_5] : memref<4x32x150xbf16, #tpu.memory_space<vmem>>, vector<1x32x150xbf16>
    %5 = vector.shape_cast %4 : vector<1x32x150xbf16> to vector<32x150xbf16>
    %cst_6 = arith.constant dense<0.000000e+00> : vector<32x128xf32>
    %6 = tpu.matmul %5, %0, %cst_6 {dimension_numbers = #tpu.dot_dimension_numbers<[1], [0], [0], [1], [0, 0, 1, 1], [], []>} : vector<32x150xbf16>, vector<150x128xbf16>, vector<32x128xf32> -> vector<32x128xf32>
    %7 = arith.maximumf %3, %6 : vector<32x128xf32>
    %c2 = arith.constant 2 : index
    %c0_7 = arith.constant 0 : index
    %c0_8 = arith.constant 0 : index
    %8 = vector.load %arg1[%c2, %c0_7, %c0_8] : memref<4x32x150xbf16, #tpu.memory_space<vmem>>, vector<1x32x150xbf16>
    %9 = vector.shape_cast %8 : vector<1x32x150xbf16> to vector<32x150xbf16>
    %cst_9 = arith.constant dense<0.000000e+00> : vector<32x128xf32>
    %10 = tpu.matmul %9, %0, %cst_9 {dimension_numbers = #tpu.dot_dimension_numbers<[1], [0], [0], [1], [0, 0, 1, 1], [], []>} : vector<32x150xbf16>, vector<150x128xbf16>, vector<32x128xf32> -> vector<32x128xf32>
    %11 = arith.maximumf %7, %10 : vector<32x128xf32>
    %c3 = arith.constant 3 : index
    %c0_10 = arith.constant 0 : index
    %c0_11 = arith.constant 0 : index
    %12 = vector.load %arg1[%c3, %c0_10, %c0_11] : memref<4x32x150xbf16, #tpu.memory_space<vmem>>, vector<1x32x150xbf16>
    %13 = vector.shape_cast %12 : vector<1x32x150xbf16> to vector<32x150xbf16>
    %cst_12 = arith.constant dense<0.000000e+00> : vector<32x128xf32>
    %14 = tpu.matmul %13, %0, %cst_12 {dimension_numbers = #tpu.dot_dimension_numbers<[1], [0], [0], [1], [0, 0, 1, 1], [], []>} : vector<32x150xbf16>, vector<150x128xbf16>, vector<32x128xf32> -> vector<32x128xf32>
    %15 = arith.maximumf %11, %14 : vector<32x128xf32>
    %c0_13 = arith.constant 0 : index
    %c0_14 = arith.constant 0 : index
    %16 = vector.load %arg3[%c0_13, %c0_14] : memref<1x128xf32, #tpu.memory_space<vmem>>, vector<1x128xf32>
    %17 = vector.broadcast %16 : vector<1x128xf32> to vector<32x128xf32>
    %18 = arith.addf %15, %17 : vector<32x128xf32>
    %cst_15 = arith.constant 0.000000e+00 : f32
    %19 = vector.broadcast %cst_15 : f32 to vector<32x128xf32>
    %20 = arith.maximumf %18, %19 : vector<32x128xf32>
    %21 = arith.truncf %20 : vector<32x128xf32> to vector<32x128xbf16>
    %c0_16 = arith.constant 0 : index
    %c0_17 = arith.constant 0 : index
    %22 = vector.load %arg4[%c0_16, %c0_17] : memref<32x128xbf16, #tpu.memory_space<vmem>>, vector<32x128xbf16>
    tpu.vector_store %arg4[%c0_16, %c0_17], %21 {strides = array<i32>} : memref<32x128xbf16, #tpu.memory_space<vmem>>, vector<32x128xbf16>,
    return
  }
  func.func @transform_0(%arg0: i32) -> (i32, i32, i32) {
    %c0_i32 = arith.constant 0 : i32
    %c0_i32_0 = arith.constant 0 : i32
    %c0_i32_1 = arith.constant 0 : i32
    return %c0_i32, %arg0, %c0_i32_0 : i32, i32, i32
  }
  func.func @transform_1(%arg0: i32) -> (i32, i32) {
    %c0_i32 = arith.constant 0 : i32
    %c0_i32_0 = arith.constant 0 : i32
    %c0_i32_1 = arith.constant 0 : i32
    return %c0_i32, %c0_i32_0 : i32, i32
  }
  func.func @transform_2(%arg0: i32) -> (i32, i32) {
    %c0_i32 = arith.constant 0 : i32
    %c0_i32_0 = arith.constant 0 : i32
    %c0_i32_1 = arith.constant 0 : i32
    return %c0_i32, %c0_i32_0 : i32, i32
  }
  func.func @transform_3(%arg0: i32) -> (i32, i32) {
    %c0_i32 = arith.constant 0 : i32
    %c0_i32_0 = arith.constant 0 : i32
    return %arg0, %c0_i32 : i32, i32
  }
}

module attributes {stable_mosaic.version = 11 : i64} {
  func.func @_fc_stack_kernel(%arg0: i32, %arg1: memref<8x400xbf16, #tpu.memory_space<vmem>>, %arg2: memref<400x128xbf16, #tpu.memory_space<vmem>>, %arg3: memref<1x128xf32, #tpu.memory_space<vmem>>, %arg4: memref<128x128xbf16, #tpu.memory_space<vmem>>, %arg5: memref<1x128xf32, #tpu.memory_space<vmem>>, %arg6: memref<128x128xbf16, #tpu.memory_space<vmem>>, %arg7: memref<1x128xf32, #tpu.memory_space<vmem>>, %arg8: memref<8x128xf32, #tpu.memory_space<vmem>>) attributes {dimension_semantics = [#tpu.dimension_semantics<parallel>], iteration_bounds = array<i64: 1>, scalar_prefetch = 0 : i64, scratch_operands = 0 : i64, tpu.core_type = #tpu.core_type<tc>, window_params = [{transform_indices = @transform_0, window_bounds = array<i64: 8, 400>}, {pipeline_mode = #tpu.pipeline_mode<synchronous>, transform_indices = @transform_1, window_bounds = array<i64: 400, 128>}, {pipeline_mode = #tpu.pipeline_mode<synchronous>, transform_indices = @transform_2, window_bounds = array<i64: 1, 128>}, {pipeline_mode = #tpu.pipeline_mode<synchronous>, transform_indices = @transform_3, window_bounds = array<i64: 128, 128>}, {pipeline_mode = #tpu.pipeline_mode<synchronous>, transform_indices = @transform_4, window_bounds = array<i64: 1, 128>}, {pipeline_mode = #tpu.pipeline_mode<synchronous>, transform_indices = @transform_5, window_bounds = array<i64: 128, 128>}, {pipeline_mode = #tpu.pipeline_mode<synchronous>, transform_indices = @transform_6, window_bounds = array<i64: 1, 128>}, {transform_indices = @transform_7, window_bounds = array<i64: 8, 128>}]} {
    %c0 = arith.constant 0 : index
    %c0_0 = arith.constant 0 : index
    %0 = vector.load %arg1[%c0, %c0_0] : memref<8x400xbf16, #tpu.memory_space<vmem>>, vector<8x400xbf16>
    %c0_1 = arith.constant 0 : index
    %c0_2 = arith.constant 0 : index
    %1 = vector.load %arg2[%c0_1, %c0_2] : memref<400x128xbf16, #tpu.memory_space<vmem>>, vector<400x128xbf16>
    %cst = arith.constant dense<0.000000e+00> : vector<8x128xf32>
    %2 = tpu.matmul %0, %1, %cst {dimension_numbers = #tpu.dot_dimension_numbers<[1], [0], [0], [1], [0, 0, 1, 1], [], []>} : vector<8x400xbf16>, vector<400x128xbf16>, vector<8x128xf32> -> vector<8x128xf32>
    %c0_3 = arith.constant 0 : index
    %c0_4 = arith.constant 0 : index
    %3 = vector.load %arg3[%c0_3, %c0_4] : memref<1x128xf32, #tpu.memory_space<vmem>>, vector<1x128xf32>
    %4 = vector.broadcast %3 : vector<1x128xf32> to vector<8x128xf32>
    %5 = arith.addf %2, %4 : vector<8x128xf32>
    %cst_5 = arith.constant 0.000000e+00 : f32
    %6 = vector.broadcast %cst_5 : f32 to vector<8x128xf32>
    %7 = arith.maximumf %5, %6 : vector<8x128xf32>
    %8 = arith.truncf %7 : vector<8x128xf32> to vector<8x128xbf16>
    %c0_6 = arith.constant 0 : index
    %c0_7 = arith.constant 0 : index
    %9 = vector.load %arg4[%c0_6, %c0_7] : memref<128x128xbf16, #tpu.memory_space<vmem>>, vector<128x128xbf16>
    %cst_8 = arith.constant dense<0.000000e+00> : vector<8x128xf32>
    %10 = tpu.matmul %8, %9, %cst_8 {dimension_numbers = #tpu.dot_dimension_numbers<[1], [0], [0], [1], [0, 0, 1, 1], [], []>} : vector<8x128xbf16>, vector<128x128xbf16>, vector<8x128xf32> -> vector<8x128xf32>
    %c0_9 = arith.constant 0 : index
    %c0_10 = arith.constant 0 : index
    %11 = vector.load %arg5[%c0_9, %c0_10] : memref<1x128xf32, #tpu.memory_space<vmem>>, vector<1x128xf32>
    %12 = vector.broadcast %11 : vector<1x128xf32> to vector<8x128xf32>
    %13 = arith.addf %10, %12 : vector<8x128xf32>
    %cst_11 = arith.constant 0.000000e+00 : f32
    %14 = vector.broadcast %cst_11 : f32 to vector<8x128xf32>
    %15 = arith.maximumf %13, %14 : vector<8x128xf32>
    %16 = arith.truncf %15 : vector<8x128xf32> to vector<8x128xbf16>
    %c0_12 = arith.constant 0 : index
    %c0_13 = arith.constant 0 : index
    %17 = vector.load %arg6[%c0_12, %c0_13] : memref<128x128xbf16, #tpu.memory_space<vmem>>, vector<128x128xbf16>
    %cst_14 = arith.constant dense<0.000000e+00> : vector<8x128xf32>
    %18 = tpu.matmul %16, %17, %cst_14 {dimension_numbers = #tpu.dot_dimension_numbers<[1], [0], [0], [1], [0, 0, 1, 1], [], []>} : vector<8x128xbf16>, vector<128x128xbf16>, vector<8x128xf32> -> vector<8x128xf32>
    %c0_15 = arith.constant 0 : index
    %c0_16 = arith.constant 0 : index
    %19 = vector.load %arg7[%c0_15, %c0_16] : memref<1x128xf32, #tpu.memory_space<vmem>>, vector<1x128xf32>
    %20 = vector.broadcast %19 : vector<1x128xf32> to vector<8x128xf32>
    %21 = arith.addf %18, %20 : vector<8x128xf32>
    %c0_17 = arith.constant 0 : index
    %c0_18 = arith.constant 0 : index
    %22 = vector.load %arg8[%c0_17, %c0_18] : memref<8x128xf32, #tpu.memory_space<vmem>>, vector<8x128xf32>
    tpu.vector_store %arg8[%c0_17, %c0_18], %21 {strides = array<i32>} : memref<8x128xf32, #tpu.memory_space<vmem>>, vector<8x128xf32>,
    return
  }
  func.func @transform_0(%arg0: i32) -> (i32, i32) {
    %c0_i32 = arith.constant 0 : i32
    %c0_i32_0 = arith.constant 0 : i32
    return %arg0, %c0_i32 : i32, i32
  }
  func.func @transform_1(%arg0: i32) -> (i32, i32) {
    %c0_i32 = arith.constant 0 : i32
    %c0_i32_0 = arith.constant 0 : i32
    %c0_i32_1 = arith.constant 0 : i32
    return %c0_i32, %c0_i32_0 : i32, i32
  }
  func.func @transform_2(%arg0: i32) -> (i32, i32) {
    %c0_i32 = arith.constant 0 : i32
    %c0_i32_0 = arith.constant 0 : i32
    %c0_i32_1 = arith.constant 0 : i32
    return %c0_i32, %c0_i32_0 : i32, i32
  }
  func.func @transform_3(%arg0: i32) -> (i32, i32) {
    %c0_i32 = arith.constant 0 : i32
    %c0_i32_0 = arith.constant 0 : i32
    %c0_i32_1 = arith.constant 0 : i32
    return %c0_i32, %c0_i32_0 : i32, i32
  }
  func.func @transform_4(%arg0: i32) -> (i32, i32) {
    %c0_i32 = arith.constant 0 : i32
    %c0_i32_0 = arith.constant 0 : i32
    %c0_i32_1 = arith.constant 0 : i32
    return %c0_i32, %c0_i32_0 : i32, i32
  }
  func.func @transform_5(%arg0: i32) -> (i32, i32) {
    %c0_i32 = arith.constant 0 : i32
    %c0_i32_0 = arith.constant 0 : i32
    %c0_i32_1 = arith.constant 0 : i32
    return %c0_i32, %c0_i32_0 : i32, i32
  }
  func.func @transform_6(%arg0: i32) -> (i32, i32) {
    %c0_i32 = arith.constant 0 : i32
    %c0_i32_0 = arith.constant 0 : i32
    %c0_i32_1 = arith.constant 0 : i32
    return %c0_i32, %c0_i32_0 : i32, i32
  }
  func.func @transform_7(%arg0: i32) -> (i32, i32) {
    %c0_i32 = arith.constant 0 : i32
    %c0_i32_0 = arith.constant 0 : i32
    return %arg0, %c0_i32 : i32, i32
  }
}

</mosaic_0001>

<llo_original>
// kernel: lenet_forward.3
$region0: #{lenet_forward.3}
  #allocation0 [shape = 'u32[]', space=smem, size = 0x4, offset = 0x4, fixed_abs, tag = 'smem constant byte address 0x4 - core index']
  #allocation1 [shape = 'u32[144,128]{1,0:T(1,128)}', space=vmem, size = 0x12000, scoped, tag = 'internal scratch']
  %s0 = inlined_call_operand.vmem [shape: bf16[4,400,25], index: 0, kind: input, shape index: {}]
  %s1 = inlined_call_operand.vmem [shape: bf16[25,128], index: 1, kind: input, shape index: {}]
  %s2 = inlined_call_operand.vmem [shape: f32[1,128], index: 2, kind: input, shape index: {}]
  %s3 = inlined_call_operand.vmem [shape: bf16[400,128], index: 3, kind: output, shape index: {}]
  %s4 = sld [smem:[#allocation0]]
  $region86: #{lenet_forward.3} parent=0
    _
  %s6 = ssub.s32 1, %s4
  %s7 = scalar_select 0, %s6, %s4
  $region1: #{lenet_forward.3} parent=0
    #allocation2 [shape = 'u8[409600]{0}', space=vmem, size = 0x64000, scoped, tag = 'input window, operand 0']
    loop: start=0, step=1, limit=4
    $region2: #{lenet_forward.3} parent=1 // loop_pre_header
      _
    $region3: #{lenet_forward.3} parent=1 // loop_header
      %s9 = sphi 0, %s13
      %p10 = scmp.ge.s32.totalorder %s9, 4
      %s19 = sphi 0, %s21
      %s22 = sphi 0, %s19
      %s23 = sphi 0, %s22
      %s39 = sphi 0, %s23
      %s43 = sphi 0, %s43
      %s45 = sphi 0, %s43
      %s46 = sphi 0, %s45
      %s60 = sphi 0, %s46
      %s64 = sphi 0, %s64
      %s66 = sphi 0, %s64
      %s67 = sphi 0, %s66
      %s81 = sphi 0, %s67
      %s87 = sphi 0, %s89
      %s90 = sphi 0, %s87
      %s91 = sphi 0, %s90
      %s107 = sphi 0, %s91
    $region4: #{lenet_forward.3} parent=1 // loop_header_branch
      %12 = sbr.rel (%p10) target = $region8
    $region5: #{lenet_forward.3} parent=1 // loop_body
      %s14 = ssub.s32 %s9, 1
      %s15 = ssub.s32 %s9, 2
      %s16 = sadd.s32 %s9, 1
      %s17 = ssub.s32 %s9, %s16
      %p18 = scmp.eq.s32.totalorder %s17, 0
      %s20 = sadd.s32 %s19, 1
      %s21 = scalar_select %p18, %s19, %s20
      %p24 = pneg %p18
      %p25 = scmp.eq.s32.totalorder %s9, 1
      %p26 = por %p24, %p25
      %p27 = scmp.ne.s32.totalorder %s19, %s22
      %p28 = scmp.eq.s32.totalorder %s9, 0
      %p29 = por %p27, %p28
      %p30 = scmp.ne.s32.totalorder %s19, %s22
      %p31 = scmp.eq.s32.totalorder %s14, 1
      %p32 = por %p30, %p31
      %p33 = scmp.ne.s32.totalorder %s22, %s23
      %p34 = scmp.eq.s32.totalorder %s14, 0
      %p35 = por %p33, %p34
      %p36 = scmp.ne.s32.totalorder %s22, %s23
      %p37 = scmp.eq.s32.totalorder %s15, 1
      %p38 = por %p36, %p37
      %p40 = scmp.ne.s32.totalorder %s23, %s39
      %p41 = scmp.eq.s32.totalorder %s15, 0
      %p42 = por %p40, %p41
      %s44 = sadd.s32 %s43, 1
      %p47 = scmp.eq.s32.totalorder %s9, 1
      %p48 = scmp.ne.s32.totalorder %s43, %s45
      %p49 = scmp.eq.s32.totalorder %s9, 0
      %p50 = por %p48, %p49
      %p51 = scmp.ne.s32.totalorder %s43, %s45
      %p52 = scmp.eq.s32.totalorder %s14, 1
      %p53 = por %p51, %p52
      %p54 = scmp.ne.s32.totalorder %s45, %s46
      %p55 = scmp.eq.s32.totalorder %s14, 0
      %p56 = por %p54, %p55
      %p57 = scmp.ne.s32.totalorder %s45, %s46
      %p58 = scmp.eq.s32.totalorder %s15, 1
      %p59 = por %p57, %p58
      %p61 = scmp.ne.s32.totalorder %s46, %s60
      %p62 = scmp.eq.s32.totalorder %s15, 0
      %p63 = por %p61, %p62
      %s65 = sadd.s32 %s64, 1
      %p68 = scmp.eq.s32.totalorder %s9, 1
      %p69 = scmp.ne.s32.totalorder %s64, %s66
      %p70 = scmp.eq.s32.totalorder %s9, 0
      %p71 = por %p69, %p70
      %p72 = scmp.ne.s32.totalorder %s64, %s66
      %p73 = scmp.eq.s32.totalorder %s14, 1
      %p74 = por %p72, %p73
      %p75 = scmp.ne.s32.totalorder %s66, %s67
      %p76 = scmp.eq.s32.totalorder %s14, 0
      %p77 = por %p75, %p76
      %p78 = scmp.ne.s32.totalorder %s66, %s67
      %p79 = scmp.eq.s32.totalorder %s15, 1
      %p80 = por %p78, %p79
      %p82 = scmp.ne.s32.totalorder %s67, %s81
      %p83 = scmp.eq.s32.totalorder %s15, 0
      %p84 = por %p82, %p83
      %s85 = ssub.s32 %s9, %s16
      %p86 = scmp.eq.s32.totalorder %s85, 0
      %s88 = sadd.s32 %s87, 1
      %s89 = scalar_select %p86, %s87, %s88
      %p92 = pneg %p86
      %p93 = scmp.eq.s32.totalorder %s9, 1
      %p94 = por %p92, %p93
      %p95 = scmp.ne.s32.totalorder %s87, %s90
      %p96 = scmp.eq.s32.totalorder %s9, 0
      %p97 = por %p95, %p96
      %p98 = scmp.ne.s32.totalorder %s87, %s90
      %p99 = scmp.eq.s32.totalorder %s14, 1
      %p100 = por %p98, %p99
      %p101 = scmp.ne.s32.totalorder %s90, %s91
      %p102 = scmp.eq.s32.totalorder %s14, 0
      %p103 = por %p101, %p102
      %p104 = scmp.ne.s32.totalorder %s90, %s91
      %p105 = scmp.eq.s32.totalorder %s15, 1
      %p106 = por %p104, %p105
      %p108 = scmp.ne.s32.totalorder %s91, %s107
      %p109 = scmp.eq.s32.totalorder %s15, 0
      %p110 = por %p108, %p109
      %p111 = scmp.le.s32.totalorder 1, %s9
      %p112 = scmp.lt.s32.totalorder %s9, 3
      %p113 = pnand %p111, %p112
      %p114 = pneg %p113
      // Predicated region
      $region9: #{lenet_forward.3} parent=5 // pred_check
        _
      $region10: #{lenet_forward.3} parent=5 // pred_check_branch
        %116 = sbr.rel (%p113) target = $region12
      $region11: #{lenet_forward.3} parent=5 // pred_region
        %s117 = ssub.s32 %s9, 1
        // Predicated region
        $region13: #{lenet_forward.3} parent=11 // pred_check
          %p118 = pneg %p56
        $region14: #{lenet_forward.3} parent=11 // pred_check_branch
          %120 = sbr.rel (%p118) target = $region16
        $region15: #{lenet_forward.3} parent=11 // pred_region
          _
        $region16: #{lenet_forward.3} parent=11 // pred_fallthru
          _
        // Predicated region
        $region17: #{lenet_forward.3} parent=11 // pred_check
          %p121 = pneg %p77
        $region18: #{lenet_forward.3} parent=11 // pred_check_branch
          %123 = sbr.rel (%p121) target = $region20
        $region19: #{lenet_forward.3} parent=11 // pred_region
          _
        $region20: #{lenet_forward.3} parent=11 // pred_fallthru
          _
      $region12: #{lenet_forward.3} parent=5 // pred_fallthru
        _
      %p124 = scmp.lt.s32.totalorder %s9, 2
      // Predicated region
      $region21: #{lenet_forward.3} parent=5 // pred_check
        %p125 = pneg %p124
      $region22: #{lenet_forward.3} parent=5 // pred_check_branch
        %127 = sbr.rel (%p125) target = $region24
      $region23: #{lenet_forward.3} parent=5 // pred_region
        // Predicated region
        $region25: #{lenet_forward.3} parent=23 // pred_check
          %p128 = pneg %p29
        $region26: #{lenet_forward.3} parent=23 // pred_check_branch
          %130 = sbr.rel (%p128) target = $region28
        $region27: #{lenet_forward.3} parent=23 // pred_region
          %s131 = sand.u32 %s19, 1
          %s132 = sand.u32 %s19, 1
          %s133 = smul.addr %s132, 400
          %s134 = scalar_lea.vmem [#allocation2], %s133
          %s135 = smul.u32 25, %s9
          %s136 = smul.addr %s135, 4
          %s137 = scalar_lea.vmem %s0, %s136
          // Predicated region
          $region29: #{lenet_forward.3} parent=27 // pred_check
            _
          $region30: #{lenet_forward.3} parent=27 // pred_check_branch
            %139 = sbr.rel (0) target = $region32
          $region31: #{lenet_forward.3} parent=27 // pred_region
            // Predicated region
            $region33: #{lenet_forward.3} parent=31 // pred_check
              _
            $region34: #{lenet_forward.3} parent=31 // pred_check_branch
              %141 = sbr.rel target = $region36
            $region35: #{lenet_forward.3} parent=31 // pred_region
              // Predicated region
              $region48: #{lenet_forward.3} parent=35 // pred_check
                _
              $region49: #{lenet_forward.3} parent=35 // pred_check_branch
                %354 = sbr.rel (0) target = $region51
              $region50: #{lenet_forward.3} parent=35 // pred_region
                loop: start=0, step=1, limit=1
                $region52: #{lenet_forward.3} parent=50 // loop_pre_header
                  _
                $region53: #{lenet_forward.3} parent=50 // loop_header
                  %s356 = sphi 0, %s360
                  %p357 = scmp.ge.s32.totalorder %s356, 1
                  %s361 = sphi %s137, %s137
                  %s362 = sphi %s134, %s134
                $region54: #{lenet_forward.3} parent=50 // loop_header_branch
                  %359 = sbr.rel (%p357) target = $region58
                $region55: #{lenet_forward.3} parent=50 // loop_body
                  _
                $region56: #{lenet_forward.3} parent=50 // loop_footer
                  %s360 = sadd.s32 1, %s356
                $region57: #{lenet_forward.3} parent=50 // loop_footer_branch
                  %355 = sbr.rel target = $region53
                $region58: #{lenet_forward.3} parent=50 // loop_exit
                  _
                loop: start=0, step=1, limit=1
                $region59: #{lenet_forward.3} parent=50 // loop_pre_header
                  _
                $region60: #{lenet_forward.3} parent=50 // loop_header
                  %s365 = sphi 0, %s369
                  %p366 = scmp.ge.s32.totalorder %s365, 1
                  %s370 = sphi %s137, %s137
                  %s371 = sphi %s134, %s134
                $region61: #{lenet_forward.3} parent=50 // loop_header_branch
                  %368 = sbr.rel (%p366) target = $region65
                $region62: #{lenet_forward.3} parent=50 // loop_body
                  %v372 = vld [vmem:[%s370] sm:$0xf]
                  %373 = vst [vmem:[%s371] sm:$0xf] %v372
                  %v374 = vld [vmem:[%s370 + $0x4] sm:$0xf]
                  %375 = vst [vmem:[%s371 + $0x4] sm:$0xf] %v374
                  %v376 = vld [vmem:[%s370 + $0x8] sm:$0xf]
                  %377 = vst [vmem:[%s371 + $0x8] sm:$0xf] %v376
                  %v378 = vld [vmem:[%s370 + $0xc] sm:$0xf]
                  %379 = vst [vmem:[%s371 + $0xc] sm:$0xf] %v378
                  %v380 = vld [vmem:[%s370 + $0x10] sm:$0xf]
                  %381 = vst [vmem:[%s371 + $0x10] sm:$0xf] %v380
                  %v382 = vld [vmem:[%s370 + $0x14] sm:$0xf]
                  %383 = vst [vmem:[%s371 + $0x14] sm:$0xf] %v382
                  %v384 = vld [vmem:[%s370 + $0x18] sm:$0xf]
                  %385 = vst [vmem:[%s371 + $0x18] sm:$0xf] %v384
                  %v386 = vld [vmem:[%s370 + $0x1c] sm:$0xf]
                  %387 = vst [vmem:[%s371 + $0x1c] sm:$0xf] %v386
                  %v388 = vld [vmem:[%s370 + $0x20] sm:$0xf]
                  %389 = vst [vmem:[%s371 + $0x20] sm:$0xf] %v388
                  %v390 = vld [vmem:[%s370 + $0x24] sm:$0xf]
                  %391 = vst [vmem:[%s371 + $0x24] sm:$0xf] %v390
                  %v392 = vld [vmem:[%s370 + $0x28] sm:$0xf]
                  %393 = vst [vmem:[%s371 + $0x28] sm:$0xf] %v392
                  %v394 = vld [vmem:[%s370 + $0x2c] sm:$0xf]
                  %395 = vst [vmem:[%s371 + $0x2c] sm:$0xf] %v394
                  %v396 = vld [vmem:[%s370 + $0x30] sm:$0xf]
                  %397 = vst [vmem:[%s371 + $0x30] sm:$0xf] %v396
                  %v398 = vld [vmem:[%s370 + $0x34] sm:$0xf]
                  %399 = vst [vmem:[%s371 + $0x34] sm:$0xf] %v398
                  %v400 = vld [vmem:[%s370 + $0x38] sm:$0xf]
                  %401 = vst [vmem:[%s371 + $0x38] sm:$0xf] %v400
                  %v402 = vld [vmem:[%s370 + $0x3c] sm:$0xf]
                  %403 = vst [vmem:[%s371 + $0x3c] sm:$0xf] %v402
                  %v404 = vld [vmem:[%s370 + $0x40] sm:$0xf]
                  %405 = vst [vmem:[%s371 + $0x40] sm:$0xf] %v404
                  %v406 = vld [vmem:[%s370 + $0x44] sm:$0xf]
                  %407 = vst [vmem:[%s371 + $0x44] sm:$0xf] %v406
                  %v408 = vld [vmem:[%s370 + $0x48] sm:$0xf]
                  %409 = vst [vmem:[%s371 + $0x48] sm:$0xf] %v408
                  %v410 = vld [vmem:[%s370 + $0x4c] sm:$0xf]
                  %411 = vst [vmem:[%s371 + $0x4c] sm:$0xf] %v410
                  %v412 = vld [vmem:[%s370 + $0x50] sm:$0xf]
                  %413 = vst [vmem:[%s371 + $0x50] sm:$0xf] %v412
                  %v414 = vld [vmem:[%s370 + $0x54] sm:$0xf]
                  %415 = vst [vmem:[%s371 + $0x54] sm:$0xf] %v414
                  %v416 = vld [vmem:[%s370 + $0x58] sm:$0xf]
                  %417 = vst [vmem:[%s371 + $0x58] sm:$0xf] %v416
                  %v418 = vld [vmem:[%s370 + $0x5c] sm:$0xf]
                  %419 = vst [vmem:[%s371 + $0x5c] sm:$0xf] %v418
                  %v420 = vld [vmem:[%s370 + $0x60] sm:$0xf]
                  %421 = vst [vmem:[%s371 + $0x60] sm:$0xf] %v420
                  %v422 = vld [vmem:[%s370 + $0xc8] sm:$0xf]
                  %423 = vst [vmem:[%s371 + $0x64] sm:$0xf] %v422
                  %v424 = vld [vmem:[%s370 + $0xcc] sm:$0xf]
                  %425 = vst [vmem:[%s371 + $0x68] sm:$0xf] %v424
                  %v426 = vld [vmem:[%s370 + $0xd0] sm:$0xf]
                  %427 = vst [vmem:[%s371 + $0x6c] sm:$0xf] %v426
                  %v428 = vld [vmem:[%s370 + $0xd4] sm:$0xf]
                  %429 = vst [vmem:[%s371 + $0x70] sm:$0xf] %v428
                  %v430 = vld [vmem:[%s370 + $0xd8] sm:$0xf]
                  %431 = vst [vmem:[%s371 + $0x74] sm:$0xf] %v430
                  %v432 = vld [vmem:[%s370 + $0xdc] sm:$0xf]
                  %433 = vst [vmem:[%s371 + $0x78] sm:$0xf] %v432
                  %v434 = vld [vmem:[%s370 + $0xe0] sm:$0xf]
                  %435 = vst [vmem:[%s371 + $0x7c] sm:$0xf] %v434
                  %v436 = vld [vmem:[%s370 + $0xe4] sm:$0xf]
                  %437 = vst [vmem:[%s371 + $0x80] sm:$0xf] %v436
                  %v438 = vld [vmem:[%s370 + $0xe8] sm:$0xf]
                  %439 = vst [vmem:[%s371 + $0x84] sm:$0xf] %v438
                  %v440 = vld [vmem:[%s370 + $0xec] sm:$0xf]
                  %441 = vst [vmem:[%s371 + $0x88] sm:$0xf] %v440
                  %v442 = vld [vmem:[%s370 + $0xf0] sm:$0xf]
                  %443 = vst [vmem:[%s371 + $0x8c] sm:$0xf] %v442
                  %v444 = vld [vmem:[%s370 + $0xf4] sm:$0xf]
                  %445 = vst [vmem:[%s371 + $0x90] sm:$0xf] %v444
                  %v446 = vld [vmem:[%s370 + $0xf8] sm:$0xf]
                  %447 = vst [vmem:[%s371 + $0x94] sm:$0xf] %v446
                  %v448 = vld [vmem:[%s370 + $0xfc] sm:$0xf]
                  %449 = vst [vmem:[%s371 + $0x98] sm:$0xf] %v448
                  %v450 = vld [vmem:[%s370 + $0x100] sm:$0xf]
                  %451 = vst [vmem:[%s371 + $0x9c] sm:$0xf] %v450
                  %v452 = vld [vmem:[%s370 + $0x104] sm:$0xf]
                  %453 = vst [vmem:[%s371 + $0xa0] sm:$0xf] %v452
                  %v454 = vld [vmem:[%s370 + $0x108] sm:$0xf]
                  %455 = vst [vmem:[%s371 + $0xa4] sm:$0xf] %v454
                  %v456 = vld [vmem:[%s370 + $0x10c] sm:$0xf]
                  %457 = vst [vmem:[%s371 + $0xa8] sm:$0xf] %v456
                  %v458 = vld [vmem:[%s370 + $0x110] sm:$0xf]
                  %459 = vst [vmem:[%s371 + $0xac] sm:$0xf] %v458
                  %v460 = vld [vmem:[%s370 + $0x114] sm:$0xf]
                  %461 = vst [vmem:[%s371 + $0xb0] sm:$0xf] %v460
                  %v462 = vld [vmem:[%s370 + $0x118] sm:$0xf]
                  %463 = vst [vmem:[%s371 + $0xb4] sm:$0xf] %v462
                  %v464 = vld [vmem:[%s370 + $0x11c] sm:$0xf]
                  %465 = vst [vmem:[%s371 + $0xb8] sm:$0xf] %v464
                  %v466 = vld [vmem:[%s370 + $0x120] sm:$0xf]
                  %467 = vst [vmem:[%s371 + $0xbc] sm:$0xf] %v466
                  %v468 = vld [vmem:[%s370 + $0x124] sm:$0xf]
                  %469 = vst [vmem:[%s371 + $0xc0] sm:$0xf] %v468
                  %v470 = vld [vmem:[%s370 + $0x128] sm:$0xf]
                  %471 = vst [vmem:[%s371 + $0xc4] sm:$0xf] %v470
                  %v472 = vld [vmem:[%s370 + $0x190] sm:$0xf]
                  %473 = vst [vmem:[%s371 + $0xc8] sm:$0xf] %v472
                  %v474 = vld [vmem:[%s370 + $0x194] sm:$0xf]
                  %475 = vst [vmem:[%s371 + $0xcc] sm:$0xf] %v474
                  %v476 = vld [vmem:[%s370 + $0x198] sm:$0xf]
                  %477 = vst [vmem:[%s371 + $0xd0] sm:$0xf] %v476
                  %v478 = vld [vmem:[%s370 + $0x19c] sm:$0xf]
                  %479 = vst [vmem:[%s371 + $0xd4] sm:$0xf] %v478
                  %v480 = vld [vmem:[%s370 + $0x1a0] sm:$0xf]
                  %481 = vst [vmem:[%s371 + $0xd8] sm:$0xf] %v480
                  %v482 = vld [vmem:[%s370 + $0x1a4] sm:$0xf]
                  %483 = vst [vmem:[%s371 + $0xdc] sm:$0xf] %v482
                  %v484 = vld [vmem:[%s370 + $0x1a8] sm:$0xf]
                  %485 = vst [vmem:[%s371 + $0xe0] sm:$0xf] %v484
                  %v486 = vld [vmem:[%s370 + $0x1ac] sm:$0xf]
                  %487 = vst [vmem:[%s371 + $0xe4] sm:$0xf] %v486
                  %v488 = vld [vmem:[%s370 + $0x1b0] sm:$0xf]
                  %489 = vst [vmem:[%s371 + $0xe8] sm:$0xf] %v488
                  %v490 = vld [vmem:[%s370 + $0x1b4] sm:$0xf]
                  %491 = vst [vmem:[%s371 + $0xec] sm:$0xf] %v490
                  %v492 = vld [vmem:[%s370 + $0x1b8] sm:$0xf]
                  %493 = vst [vmem:[%s371 + $0xf0] sm:$0xf] %v492
                  %v494 = vld [vmem:[%s370 + $0x1bc] sm:$0xf]
                  %495 = vst [vmem:[%s371 + $0xf4] sm:$0xf] %v494
                  %v496 = vld [vmem:[%s370 + $0x1c0] sm:$0xf]
                  %497 = vst [vmem:[%s371 + $0xf8] sm:$0xf] %v496
                  %v498 = vld [vmem:[%s370 + $0x1c4] sm:$0xf]
                  %499 = vst [vmem:[%s371 + $0xfc] sm:$0xf] %v498
                  %v500 = vld [vmem:[%s370 + $0x1c8] sm:$0xf]
                  %501 = vst [vmem:[%s371 + $0x100] sm:$0xf] %v500
                  %v502 = vld [vmem:[%s370 + $0x1cc] sm:$0xf]
                  %503 = vst [vmem:[%s371 + $0x104] sm:$0xf] %v502
                  %v504 = vld [vmem:[%s370 + $0x1d0] sm:$0xf]
                  %505 = vst [vmem:[%s371 + $0x108] sm:$0xf] %v504
                  %v506 = vld [vmem:[%s370 + $0x1d4] sm:$0xf]
                  %507 = vst [vmem:[%s371 + $0x10c] sm:$0xf] %v506
                  %v508 = vld [vmem:[%s370 + $0x1d8] sm:$0xf]
                  %509 = vst [vmem:[%s371 + $0x110] sm:$0xf] %v508
                  %v510 = vld [vmem:[%s370 + $0x1dc] sm:$0xf]
                  %511 = vst [vmem:[%s371 + $0x114] sm:$0xf] %v510
                  %v512 = vld [vmem:[%s370 + $0x1e0] sm:$0xf]
                  %513 = vst [vmem:[%s371 + $0x118] sm:$0xf] %v512
                  %v514 = vld [vmem:[%s370 + $0x1e4] sm:$0xf]
                  %515 = vst [vmem:[%s371 + $0x11c] sm:$0xf] %v514
                  %v516 = vld [vmem:[%s370 + $0x1e8] sm:$0xf]
                  %517 = vst [vmem:[%s371 + $0x120] sm:$0xf] %v516
                  %v518 = vld [vmem:[%s370 + $0x1ec] sm:$0xf]
                  %519 = vst [vmem:[%s371 + $0x124] sm:$0xf] %v518
                  %v520 = vld [vmem:[%s370 + $0x1f0] sm:$0xf]
                  %521 = vst [vmem:[%s371 + $0x128] sm:$0xf] %v520
                  %v522 = vld [vmem:[%s370 + $0x258] sm:$0xf]
                  %523 = vst [vmem:[%s371 + $0x12c] sm:$0xf] %v522
                  %v524 = vld [vmem:[%s370 + $0x25c] sm:$0xf]
                  %525 = vst [vmem:[%s371 + $0x130] sm:$0xf] %v524
                  %v526 = vld [vmem:[%s370 + $0x260] sm:$0xf]
                  %527 = vst [vmem:[%s371 + $0x134] sm:$0xf] %v526
                  %v528 = vld [vmem:[%s370 + $0x264] sm:$0xf]
                  %529 = vst [vmem:[%s371 + $0x138] sm:$0xf] %v528
                  %v530 = vld [vmem:[%s370 + $0x268] sm:$0xf]
                  %531 = vst [vmem:[%s371 + $0x13c] sm:$0xf] %v530
                  %v532 = vld [vmem:[%s370 + $0x26c] sm:$0xf]
                  %533 = vst [vmem:[%s371 + $0x140] sm:$0xf] %v532
                  %v534 = vld [vmem:[%s370 + $0x270] sm:$0xf]
                  %535 = vst [vmem:[%s371 + $0x144] sm:$0xf] %v534
                  %v536 = vld [vmem:[%s370 + $0x274] sm:$0xf]
                  %537 = vst [vmem:[%s371 + $0x148] sm:$0xf] %v536
                  %v538 = vld [vmem:[%s370 + $0x278] sm:$0xf]
                  %539 = vst [vmem:[%s371 + $0x14c] sm:$0xf] %v538
                  %v540 = vld [vmem:[%s370 + $0x27c] sm:$0xf]
                  %541 = vst [vmem:[%s371 + $0x150] sm:$0xf] %v540
                  %v542 = vld [vmem:[%s370 + $0x280] sm:$0xf]
                  %543 = vst [vmem:[%s371 + $0x154] sm:$0xf] %v542
                  %v544 = vld [vmem:[%s370 + $0x284] sm:$0xf]
                  %545 = vst [vmem:[%s371 + $0x158] sm:$0xf] %v544
                  %v546 = vld [vmem:[%s370 + $0x288] sm:$0xf]
                  %547 = vst [vmem:[%s371 + $0x15c] sm:$0xf] %v546
                  %v548 = vld [vmem:[%s370 + $0x28c] sm:$0xf]
                  %549 = vst [vmem:[%s371 + $0x160] sm:$0xf] %v548
                  %v550 = vld [vmem:[%s370 + $0x290] sm:$0xf]
                  %551 = vst [vmem:[%s371 + $0x164] sm:$0xf] %v550
                  %v552 = vld [vmem:[%s370 + $0x294] sm:$0xf]
                  %553 = vst [vmem:[%s371 + $0x168] sm:$0xf] %v552
                  %v554 = vld [vmem:[%s370 + $0x298] sm:$0xf]
                  %555 = vst [vmem:[%s371 + $0x16c] sm:$0xf] %v554
                  %v556 = vld [vmem:[%s370 + $0x29c] sm:$0xf]
                  %557 = vst [vmem:[%s371 + $0x170] sm:$0xf] %v556
                  %v558 = vld [vmem:[%s370 + $0x2a0] sm:$0xf]
                  %559 = vst [vmem:[%s371 + $0x174] sm:$0xf] %v558
                  %v560 = vld [vmem:[%s370 + $0x2a4] sm:$0xf]
                  %561 = vst [vmem:[%s371 + $0x178] sm:$0xf] %v560
                  %v562 = vld [vmem:[%s370 + $0x2a8] sm:$0xf]
                  %563 = vst [vmem:[%s371 + $0x17c] sm:$0xf] %v562
                  %v564 = vld [vmem:[%s370 + $0x2ac] sm:$0xf]
                  %565 = vst [vmem:[%s371 + $0x180] sm:$0xf] %v564
                  %v566 = vld [vmem:[%s370 + $0x2b0] sm:$0xf]
                  %567 = vst [vmem:[%s371 + $0x184] sm:$0xf] %v566
                  %v568 = vld [vmem:[%s370 + $0x2b4] sm:$0xf]
                  %569 = vst [vmem:[%s371 + $0x188] sm:$0xf] %v568
                  %v570 = vld [vmem:[%s370 + $0x2b8] sm:$0xf]
                  %571 = vst [vmem:[%s371 + $0x18c] sm:$0xf] %v570
                $region63: #{lenet_forward.3} parent=50 // loop_footer
                  %s369 = sadd.s32 1, %s365
                $region64: #{lenet_forward.3} parent=50 // loop_footer_branch
                  %364 = sbr.rel target = $region60
                $region65: #{lenet_forward.3} parent=50 // loop_exit
                  _
              $region51: #{lenet_forward.3} parent=35 // pred_fallthru
                _
            $region36: #{lenet_forward.3} parent=31 // pred_fallthru
              _
            // Predicated region
            $region37: #{lenet_forward.3} parent=31 // pred_check
              _
            $region38: #{lenet_forward.3} parent=31 // pred_check_branch
              %143 = sbr.rel (0) target = $region40
            $region39: #{lenet_forward.3} parent=31 // pred_region
              loop: start=0, step=1, limit=1
              $region41: #{lenet_forward.3} parent=39 // loop_pre_header
                _
              $region42: #{lenet_forward.3} parent=39 // loop_header
                %s146 = sphi 0, %s150
                %p147 = scmp.ge.s32.totalorder %s146, 1
                %s151 = sphi %s137, %s137
                %s152 = sphi %s134, %s134
              $region43: #{lenet_forward.3} parent=39 // loop_header_branch
                %149 = sbr.rel (%p147) target = $region47
              $region44: #{lenet_forward.3} parent=39 // loop_body
                %v153 = vld [vmem:[%s151] sm:$0xf]
                %154 = vst [vmem:[%s152] sm:$0xf] %v153
                %v155 = vld [vmem:[%s151 + $0x4] sm:$0xf]
                %156 = vst [vmem:[%s152 + $0x4] sm:$0xf] %v155
                %v157 = vld [vmem:[%s151 + $0x8] sm:$0xf]
                %158 = vst [vmem:[%s152 + $0x8] sm:$0xf] %v157
                %v159 = vld [vmem:[%s151 + $0xc] sm:$0xf]
                %160 = vst [vmem:[%s152 + $0xc] sm:$0xf] %v159
                %v161 = vld [vmem:[%s151 + $0x10] sm:$0xf]
                %162 = vst [vmem:[%s152 + $0x10] sm:$0xf] %v161
                %v163 = vld [vmem:[%s151 + $0x14] sm:$0xf]
                %164 = vst [vmem:[%s152 + $0x14] sm:$0xf] %v163
                %v165 = vld [vmem:[%s151 + $0x18] sm:$0xf]
                %166 = vst [vmem:[%s152 + $0x18] sm:$0xf] %v165
                %v167 = vld [vmem:[%s151 + $0x1c] sm:$0xf]
                %168 = vst [vmem:[%s152 + $0x1c] sm:$0xf] %v167
                %v169 = vld [vmem:[%s151 + $0x20] sm:$0xf]
                %170 = vst [vmem:[%s152 + $0x20] sm:$0xf] %v169
                %v171 = vld [vmem:[%s151 + $0x24] sm:$0xf]
                %172 = vst [vmem:[%s152 + $0x24] sm:$0xf] %v171
                %v173 = vld [vmem:[%s151 + $0x28] sm:$0xf]
                %174 = vst [vmem:[%s152 + $0x28] sm:$0xf] %v173
                %v175 = vld [vmem:[%s151 + $0x2c] sm:$0xf]
                %176 = vst [vmem:[%s152 + $0x2c] sm:$0xf] %v175
                %v177 = vld [vmem:[%s151 + $0x30] sm:$0xf]
                %178 = vst [vmem:[%s152 + $0x30] sm:$0xf] %v177
                %v179 = vld [vmem:[%s151 + $0x34] sm:$0xf]
                %180 = vst [vmem:[%s152 + $0x34] sm:$0xf] %v179
                %v181 = vld [vmem:[%s151 + $0x38] sm:$0xf]
                %182 = vst [vmem:[%s152 + $0x38] sm:$0xf] %v181
                %v183 = vld [vmem:[%s151 + $0x3c] sm:$0xf]
                %184 = vst [vmem:[%s152 + $0x3c] sm:$0xf] %v183
                %v185 = vld [vmem:[%s151 + $0x40] sm:$0xf]
                %186 = vst [vmem:[%s152 + $0x40] sm:$0xf] %v185
                %v187 = vld [vmem:[%s151 + $0x44] sm:$0xf]
                %188 = vst [vmem:[%s152 + $0x44] sm:$0xf] %v187
                %v189 = vld [vmem:[%s151 + $0x48] sm:$0xf]
                %190 = vst [vmem:[%s152 + $0x48] sm:$0xf] %v189
                %v191 = vld [vmem:[%s151 + $0x4c] sm:$0xf]
                %192 = vst [vmem:[%s152 + $0x4c] sm:$0xf] %v191
                %v193 = vld [vmem:[%s151 + $0x50] sm:$0xf]
                %194 = vst [vmem:[%s152 + $0x50] sm:$0xf] %v193
                %v195 = vld [vmem:[%s151 + $0x54] sm:$0xf]
                %196 = vst [vmem:[%s152 + $0x54] sm:$0xf] %v195
                %v197 = vld [vmem:[%s151 + $0x58] sm:$0xf]
                %198 = vst [vmem:[%s152 + $0x58] sm:$0xf] %v197
                %v199 = vld [vmem:[%s151 + $0x5c] sm:$0xf]
                %200 = vst [vmem:[%s152 + $0x5c] sm:$0xf] %v199
                %v201 = vld [vmem:[%s151 + $0x60] sm:$0xf]
                %202 = vst [vmem:[%s152 + $0x60] sm:$0xf] %v201
                %v203 = vld [vmem:[%s151 + $0xc8] sm:$0xf]
                %204 = vst [vmem:[%s152 + $0x64] sm:$0xf] %v203
                %v205 = vld [vmem:[%s151 + $0xcc] sm:$0xf]
                %206 = vst [vmem:[%s152 + $0x68] sm:$0xf] %v205
                %v207 = vld [vmem:[%s151 + $0xd0] sm:$0xf]
                %208 = vst [vmem:[%s152 + $0x6c] sm:$0xf] %v207
                %v209 = vld [vmem:[%s151 + $0xd4] sm:$0xf]
                %210 = vst [vmem:[%s152 + $0x70] sm:$0xf] %v209
                %v211 = vld [vmem:[%s151 + $0xd8] sm:$0xf]
                %212 = vst [vmem:[%s152 + $0x74] sm:$0xf] %v211
                %v213 = vld [vmem:[%s151 + $0xdc] sm:$0xf]
                %214 = vst [vmem:[%s152 + $0x78] sm:$0xf] %v213
                %v215 = vld [vmem:[%s151 + $0xe0] sm:$0xf]
                %216 = vst [vmem:[%s152 + $0x7c] sm:$0xf] %v215
                %v217 = vld [vmem:[%s151 + $0xe4] sm:$0xf]
                %218 = vst [vmem:[%s152 + $0x80] sm:$0xf] %v217
                %v219 = vld [vmem:[%s151 + $0xe8] sm:$0xf]
                %220 = vst [vmem:[%s152 + $0x84] sm:$0xf] %v219
                %v221 = vld [vmem:[%s151 + $0xec] sm:$0xf]
                %222 = vst [vmem:[%s152 + $0x88] sm:$0xf] %v221
                %v223 = vld [vmem:[%s151 + $0xf0] sm:$0xf]
                %224 = vst [vmem:[%s152 + $0x8c] sm:$0xf] %v223
                %v225 = vld [vmem:[%s151 + $0xf4] sm:$0xf]
                %226 = vst [vmem:[%s152 + $0x90] sm:$0xf] %v225
                %v227 = vld [vmem:[%s151 + $0xf8] sm:$0xf]
                %228 = vst [vmem:[%s152 + $0x94] sm:$0xf] %v227
                %v229 = vld [vmem:[%s151 + $0xfc] sm:$0xf]
                %230 = vst [vmem:[%s152 + $0x98] sm:$0xf] %v229
                %v231 = vld [vmem:[%s151 + $0x100] sm:$0xf]
                %232 = vst [vmem:[%s152 + $0x9c] sm:$0xf] %v231
                %v233 = vld [vmem:[%s151 + $0x104] sm:$0xf]
                %234 = vst [vmem:[%s152 + $0xa0] sm:$0xf] %v233
                %v235 = vld [vmem:[%s151 + $0x108] sm:$0xf]
                %236 = vst [vmem:[%s152 + $0xa4] sm:$0xf] %v235
                %v237 = vld [vmem:[%s151 + $0x10c] sm:$0xf]
                %238 = vst [vmem:[%s152 + $0xa8] sm:$0xf] %v237
                %v239 = vld [vmem:[%s151 + $0x110] sm:$0xf]
                %240 = vst [vmem:[%s152 + $0xac] sm:$0xf] %v239
                %v241 = vld [vmem:[%s151 + $0x114] sm:$0xf]
                %242 = vst [vmem:[%s152 + $0xb0] sm:$0xf] %v241
                %v243 = vld [vmem:[%s151 + $0x118] sm:$0xf]
                %244 = vst [vmem:[%s152 + $0xb4] sm:$0xf] %v243
                %v245 = vld [vmem:[%s151 + $0x11c] sm:$0xf]
                %246 = vst [vmem:[%s152 + $0xb8] sm:$0xf] %v245
                %v247 = vld [vmem:[%s151 + $0x120] sm:$0xf]
                %248 = vst [vmem:[%s152 + $0xbc] sm:$0xf] %v247
                %v249 = vld [vmem:[%s151 + $0x124] sm:$0xf]
                %250 = vst [vmem:[%s152 + $0xc0] sm:$0xf] %v249
                %v251 = vld [vmem:[%s151 + $0x128] sm:$0xf]
                %252 = vst [vmem:[%s152 + $0xc4] sm:$0xf] %v251
                %v253 = vld [vmem:[%s151 + $0x190] sm:$0xf]
                %254 = vst [vmem:[%s152 + $0xc8] sm:$0xf] %v253
                %v255 = vld [vmem:[%s151 + $0x194] sm:$0xf]
                %256 = vst [vmem:[%s152 + $0xcc] sm:$0xf] %v255
                %v257 = vld [vmem:[%s151 + $0x198] sm:$0xf]
                %258 = vst [vmem:[%s152 + $0xd0] sm:$0xf] %v257
                %v259 = vld [vmem:[%s151 + $0x19c] sm:$0xf]
                %260 = vst [vmem:[%s152 + $0xd4] sm:$0xf] %v259
                %v261 = vld [vmem:[%s151 + $0x1a0] sm:$0xf]
                %262 = vst [vmem:[%s152 + $0xd8] sm:$0xf] %v261
                %v263 = vld [vmem:[%s151 + $0x1a4] sm:$0xf]
                %264 = vst [vmem:[%s152 + $0xdc] sm:$0xf] %v263
                %v265 = vld [vmem:[%s151 + $0x1a8] sm:$0xf]
                %266 = vst [vmem:[%s152 + $0xe0] sm:$0xf] %v265
                %v267 = vld [vmem:[%s151 + $0x1ac] sm:$0xf]
                %268 = vst [vmem:[%s152 + $0xe4] sm:$0xf] %v267
                %v269 = vld [vmem:[%s151 + $0x1b0] sm:$0xf]
                %270 = vst [vmem:[%s152 + $0xe8] sm:$0xf] %v269
                %v271 = vld [vmem:[%s151 + $0x1b4] sm:$0xf]
                %272 = vst [vmem:[%s152 + $0xec] sm:$0xf] %v271
                %v273 = vld [vmem:[%s151 + $0x1b8] sm:$0xf]
                %274 = vst [vmem:[%s152 + $0xf0] sm:$0xf] %v273
                %v275 = vld [vmem:[%s151 + $0x1bc] sm:$0xf]
                %276 = vst [vmem:[%s152 + $0xf4] sm:$0xf] %v275
                %v277 = vld [vmem:[%s151 + $0x1c0] sm:$0xf]
                %278 = vst [vmem:[%s152 + $0xf8] sm:$0xf] %v277
                %v279 = vld [vmem:[%s151 + $0x1c4] sm:$0xf]
                %280 = vst [vmem:[%s152 + $0xfc] sm:$0xf] %v279
                %v281 = vld [vmem:[%s151 + $0x1c8] sm:$0xf]
                %282 = vst [vmem:[%s152 + $0x100] sm:$0xf] %v281
                %v283 = vld [vmem:[%s151 + $0x1cc] sm:$0xf]
                %284 = vst [vmem:[%s152 + $0x104] sm:$0xf] %v283
                %v285 = vld [vmem:[%s151 + $0x1d0] sm:$0xf]
                %286 = vst [vmem:[%s152 + $0x108] sm:$0xf] %v285
                %v287 = vld [vmem:[%s151 + $0x1d4] sm:$0xf]
                %288 = vst [vmem:[%s152 + $0x10c] sm:$0xf] %v287
                %v289 = vld [vmem:[%s151 + $0x1d8] sm:$0xf]
                %290 = vst [vmem:[%s152 + $0x110] sm:$0xf] %v289
                %v291 = vld [vmem:[%s151 + $0x1dc] sm:$0xf]
                %292 = vst [vmem:[%s152 + $0x114] sm:$0xf] %v291
                %v293 = vld [vmem:[%s151 + $0x1e0] sm:$0xf]
                %294 = vst [vmem:[%s152 + $0x118] sm:$0xf] %v293
                %v295 = vld [vmem:[%s151 + $0x1e4] sm:$0xf]
                %296 = vst [vmem:[%s152 + $0x11c] sm:$0xf] %v295
                %v297 = vld [vmem:[%s151 + $0x1e8] sm:$0xf]
                %298 = vst [vmem:[%s152 + $0x120] sm:$0xf] %v297
                %v299 = vld [vmem:[%s151 + $0x1ec] sm:$0xf]
                %300 = vst [vmem:[%s152 + $0x124] sm:$0xf] %v299
                %v301 = vld [vmem:[%s151 + $0x1f0] sm:$0xf]
                %302 = vst [vmem:[%s152 + $0x128] sm:$0xf] %v301
                %v303 = vld [vmem:[%s151 + $0x258] sm:$0xf]
                %304 = vst [vmem:[%s152 + $0x12c] sm:$0xf] %v303
                %v305 = vld [vmem:[%s151 + $0x25c] sm:$0xf]
                %306 = vst [vmem:[%s152 + $0x130] sm:$0xf] %v305
                %v307 = vld [vmem:[%s151 + $0x260] sm:$0xf]
                %308 = vst [vmem:[%s152 + $0x134] sm:$0xf] %v307
                %v309 = vld [vmem:[%s151 + $0x264] sm:$0xf]
                %310 = vst [vmem:[%s152 + $0x138] sm:$0xf] %v309
                %v311 = vld [vmem:[%s151 + $0x268] sm:$0xf]
                %312 = vst [vmem:[%s152 + $0x13c] sm:$0xf] %v311
                %v313 = vld [vmem:[%s151 + $0x26c] sm:$0xf]
                %314 = vst [vmem:[%s152 + $0x140] sm:$0xf] %v313
                %v315 = vld [vmem:[%s151 + $0x270] sm:$0xf]
                %316 = vst [vmem:[%s152 + $0x144] sm:$0xf] %v315
                %v317 = vld [vmem:[%s151 + $0x274] sm:$0xf]
                %318 = vst [vmem:[%s152 + $0x148] sm:$0xf] %v317
                %v319 = vld [vmem:[%s151 + $0x278] sm:$0xf]
                %320 = vst [vmem:[%s152 + $0x14c] sm:$0xf] %v319
                %v321 = vld [vmem:[%s151 + $0x27c] sm:$0xf]
                %322 = vst [vmem:[%s152 + $0x150] sm:$0xf] %v321
                %v323 = vld [vmem:[%s151 + $0x280] sm:$0xf]
                %324 = vst [vmem:[%s152 + $0x154] sm:$0xf] %v323
                %v325 = vld [vmem:[%s151 + $0x284] sm:$0xf]
                %326 = vst [vmem:[%s152 + $0x158] sm:$0xf] %v325
                %v327 = vld [vmem:[%s151 + $0x288] sm:$0xf]
                %328 = vst [vmem:[%s152 + $0x15c] sm:$0xf] %v327
                %v329 = vld [vmem:[%s151 + $0x28c] sm:$0xf]
                %330 = vst [vmem:[%s152 + $0x160] sm:$0xf] %v329
                %v331 = vld [vmem:[%s151 + $0x290] sm:$0xf]
                %332 = vst [vmem:[%s152 + $0x164] sm:$0xf] %v331
                %v333 = vld [vmem:[%s151 + $0x294] sm:$0xf]
                %334 = vst [vmem:[%s152 + $0x168] sm:$0xf] %v333
                %v335 = vld [vmem:[%s151 + $0x298] sm:$0xf]
                %336 = vst [vmem:[%s152 + $0x16c] sm:$0xf] %v335
                %v337 = vld [vmem:[%s151 + $0x29c] sm:$0xf]
                %338 = vst [vmem:[%s152 + $0x170] sm:$0xf] %v337
                %v339 = vld [vmem:[%s151 + $0x2a0] sm:$0xf]
                %340 = vst [vmem:[%s152 + $0x174] sm:$0xf] %v339
                %v341 = vld [vmem:[%s151 + $0x2a4] sm:$0xf]
                %342 = vst [vmem:[%s152 + $0x178] sm:$0xf] %v341
                %v343 = vld [vmem:[%s151 + $0x2a8] sm:$0xf]
                %344 = vst [vmem:[%s152 + $0x17c] sm:$0xf] %v343
                %v345 = vld [vmem:[%s151 + $0x2ac] sm:$0xf]
                %346 = vst [vmem:[%s152 + $0x180] sm:$0xf] %v345
                %v347 = vld [vmem:[%s151 + $0x2b0] sm:$0xf]
                %348 = vst [vmem:[%s152 + $0x184] sm:$0xf] %v347
                %v349 = vld [vmem:[%s151 + $0x2b4] sm:$0xf]
                %350 = vst [vmem:[%s152 + $0x188] sm:$0xf] %v349
                %v351 = vld [vmem:[%s151 + $0x2b8] sm:$0xf]
                %352 = vst [vmem:[%s152 + $0x18c] sm:$0xf] %v351
              $region45: #{lenet_forward.3} parent=39 // loop_footer
                %s150 = sadd.s32 1, %s146
              $region46: #{lenet_forward.3} parent=39 // loop_footer_branch
                %145 = sbr.rel target = $region42
              $region47: #{lenet_forward.3} parent=39 // loop_exit
                _
            $region40: #{lenet_forward.3} parent=31 // pred_fallthru
              _
          $region32: #{lenet_forward.3} parent=27 // pred_fallthru
            _
          %572 = vnop
        $region28: #{lenet_forward.3} parent=23 // pred_fallthru
          _
      $region24: #{lenet_forward.3} parent=5 // pred_fallthru
        _
      %p573 = scmp.le.s32.totalorder 1, %s9
      %p574 = scmp.lt.s32.totalorder %s9, 3
      %p575 = pnand %p573, %p574
      %p576 = pneg %p575
      // Predicated region
      $region66: #{lenet_forward.3} parent=5 // pred_check
        _
      $region67: #{lenet_forward.3} parent=5 // pred_check_branch
        %578 = sbr.rel (%p575) target = $region69
      $region68: #{lenet_forward.3} parent=5 // pred_region
        %s579 = ssub.s32 %s9, 1
        %s580 = sand.u32 %s22, 1
        %s581 = sand.u32 %s22, 1
        %s582 = smul.addr %s581, 400
        %s583 = scalar_lea.vmem [#allocation2], %s582
        // Predicated region
        $region70: #{lenet_forward.3} parent=68 // pred_check
          %p584 = pneg %p35
        $region71: #{lenet_forward.3} parent=68 // pred_check_branch
          %586 = sbr.rel (%p584) target = $region73
        $region72: #{lenet_forward.3} parent=68 // pred_region
          _
        $region73: #{lenet_forward.3} parent=68 // pred_fallthru
          _
        %s587 = sand.u32 %s22, 1
        %s588 = sand.u32 %s22, 1
        %s589 = smul.addr %s588, 400
        %s590 = scalar_lea.vmem [#allocation2], %s589
        %p591 = pneg %p35
        %p592 = pneg %p32
        %p593 = pneg %p56
        %p594 = pneg %p53
        %p595 = pneg %p77
        %p596 = pneg %p74
        %p597 = pneg %p103
        %p598 = pneg %p100
        %s599 = smul.u32 25, %s14
        %p600 = scmp.lt.s32.totalorder %s599, 49
        %s601 = scalar_select %p600, %s599, 49
        %s602 = smul.addr %s601, 4
        %s603 = scalar_lea.vmem %s3, %s602
        %s604 = smul.u32 25, %s14
        %s605 = smul.u32 25, %s14
        %p606 = scmp.lt.s32.totalorder %s605, 49
        %s607 = scalar_select %p606, %s605, 49
        %s608 = smul.addr %s607, 4
        %s609 = scalar_lea.vmem %s3, %s608
        %s610 = smul.u32 25, %s14
        %v612 = vld [vmem:[%s1] sm:$0xf]
        %v613 = vld [vmem:[%s1 + $0x4] sm:$0xf]
        %v614 = vld [vmem:[%s1 + $0x8] sm:$0xf]
        %v615 = vld [vmem:[%s1 + $0xc] sm:$0x1]
        %v616 = vld [vmem:[%s583] sm:$0xf]
        %v617 = vld [vmem:[%s583 + $0x4] sm:$0xf]
        %v618 = vld [vmem:[%s583 + $0x8] sm:$0xf]
        %v619 = vld [vmem:[%s583 + $0xc] sm:$0xf]
        %v620 = vld [vmem:[%s583 + $0x10] sm:$0xf]
        %v621 = vld [vmem:[%s583 + $0x14] sm:$0xf]
        %v622 = vld [vmem:[%s583 + $0x18] sm:$0xf]
        %v623 = vld [vmem:[%s583 + $0x1c] sm:$0xf]
        %v624 = vld [vmem:[%s583 + $0x20] sm:$0xf]
        %v625 = vld [vmem:[%s583 + $0x24] sm:$0xf]
        %v626 = vld [vmem:[%s583 + $0x28] sm:$0xf]
        %v627 = vld [vmem:[%s583 + $0x2c] sm:$0xf]
        %v628 = vld [vmem:[%s583 + $0x30] sm:$0xf]
        %v629 = vld [vmem:[%s583 + $0x34] sm:$0xf]
        %v630 = vld [vmem:[%s583 + $0x38] sm:$0xf]
        %v631 = vld [vmem:[%s583 + $0x3c] sm:$0xf]
        %v632 = vld [vmem:[%s583 + $0x40] sm:$0xf]
        %v633 = vld [vmem:[%s583 + $0x44] sm:$0xf]
        %v634 = vld [vmem:[%s583 + $0x48] sm:$0xf]
        %v635 = vld [vmem:[%s583 + $0x4c] sm:$0xf]
        %v636 = vld [vmem:[%s583 + $0x50] sm:$0xf]
        %v637 = vld [vmem:[%s583 + $0x54] sm:$0xf]
        %v638 = vld [vmem:[%s583 + $0x58] sm:$0xf]
        %v639 = vld [vmem:[%s583 + $0x5c] sm:$0xf]
        %v640 = vld [vmem:[%s583 + $0x60] sm:$0xf]
        %v666 = vunpack.c.l.b16 %v616
        %v667 = vunpack.c.l.b16 %v617
        %v668 = vunpack.c.l.b16 %v618
        %v669 = vunpack.c.l.b16 %v619
        %v670 = vunpack.c.l.b16 %v620
        %v671 = vunpack.c.l.b16 %v621
        %v672 = vunpack.c.l.b16 %v622
        %v673 = vunpack.c.l.b16 %v623
        %v674 = vunpack.c.l.b16 %v624
        %v675 = vunpack.c.l.b16 %v625
        %v676 = vunpack.c.l.b16 %v626
        %v677 = vunpack.c.l.b16 %v627
        %v678 = vunpack.c.l.b16 %v628
        %v679 = vunpack.c.l.b16 %v629
        %v680 = vunpack.c.l.b16 %v630
        %v681 = vunpack.c.l.b16 %v631
        %v682 = vunpack.c.l.b16 %v632
        %v683 = vunpack.c.l.b16 %v633
        %v684 = vunpack.c.l.b16 %v634
        %v685 = vunpack.c.l.b16 %v635
        %v686 = vunpack.c.l.b16 %v636
        %v687 = vunpack.c.l.b16 %v637
        %v688 = vunpack.c.l.b16 %v638
        %v689 = vunpack.c.l.b16 %v639
        %v690 = vunpack.c.l.b16 %v640
        %v691 = vpack.c.b16 %v667, %v666
        %v692 = vpack.c.b16 %v669, %v668
        %v693 = vpack.c.b16 %v671, %v670
        %v694 = vpack.c.b16 %v673, %v672
        %v695 = vpack.c.b16 %v675, %v674
        %v696 = vpack.c.b16 %v677, %v676
        %v697 = vpack.c.b16 %v679, %v678
        %v698 = vpack.c.b16 %v681, %v680
        %v699 = vpack.c.b16 %v683, %v682
        %v700 = vpack.c.b16 %v685, %v684
        %v701 = vpack.c.b16 %v687, %v686
        %v702 = vpack.c.b16 %v689, %v688
        %v703 = vpack.c.b16 %v690, %v690
        %v708 = vunpack.c.l.b16 %v612
        %v709 = vunpack.c.l.b16 %v613
        %v710 = vunpack.c.l.b16 %v614
        %v711 = vunpack.c.l.b16 %v615
        %v712 = vpack.c.b16 %v709, %v708
        %v713 = vpack.c.b16 %v711, %v710
        %vm715 = vcmask 203776
        %v717 = vsel %vm715, %v691, 0
        %v720 = vsel %vm715, %v692, 0
        %v723 = vsel %vm715, %v693, 0
        %v726 = vsel %vm715, %v694, 0
        %v729 = vsel %vm715, %v695, 0
        %v732 = vsel %vm715, %v696, 0
        %v735 = vsel %vm715, %v697, 0
        %v738 = vsel %vm715, %v698, 0
        %v741 = vsel %vm715, %v699, 0
        %v744 = vsel %vm715, %v700, 0
        %v747 = vsel %vm715, %v701, 0
        %v750 = vsel %vm715, %v702, 0
        %v753 = vsel %vm715, %v703, 0
        %vm755 = vcmask 1043456
        %vm756 = vcmask 1044480
        %v757 = vsel %vm755, 4294967295, 65535
        %v758 = vsel %vm756, %v757, 0
        %v760 = vand.u32 %v713, %v758
        %762 = vmatprep.subr.bf16.mxu0 0
        %763 = vmatpush1.bf16.msra.mxu0 %v712
        %764 = vmatprep.subr.bf16.mxu0 0
        %765 = vmatpush1.bf16.msra.mxu0 %v760
        %766 = vmatprep.subr.bf16.mxu0 0
        %767 = vmatpush1.bf16.msra.mxu0 0
        %768 = vmatprep.subr.bf16.mxu0 0
        %769 = vmatpush1.bf16.msra.mxu0 0
        %770 = vmatprep.subr.bf16.mxu0 0
        %771 = vmatpush1.bf16.msra.mxu0 0
        %772 = vmatprep.subr.bf16.mxu0 0
        %773 = vmatpush1.bf16.msra.mxu0 0
        %774 = vmatprep.subr.bf16.mxu0 0
        %775 = vmatpush1.bf16.msra.mxu0 0
        %776 = vmatprep.subr.bf16.mxu0 0
        %777 = vmatpush1.bf16.msra.mxu0 0
        %778 = vmatprep.subr.bf16.mxu0 0
        %779 = vmatpush1.bf16.msra.mxu0 0
        %780 = vmatprep.subr.bf16.mxu0 0
        %781 = vmatpush1.bf16.msra.mxu0 0
        %782 = vmatprep.subr.bf16.mxu0 0
        %783 = vmatpush1.bf16.msra.mxu0 0
        %784 = vmatprep.subr.bf16.mxu0 0
        %785 = vmatpush1.bf16.msra.mxu0 0
        %786 = vmatprep.subr.bf16.mxu0 0
        %787 = vmatpush1.bf16.msra.mxu0 0
        %788 = vmatprep.subr.bf16.mxu0 0
        %789 = vmatpush1.bf16.msra.mxu0 0
        %790 = vmatprep.subr.bf16.mxu0 0
        %791 = vmatpush1.bf16.msra.mxu0 0
        %792 = vmatprep.subr.bf16.mxu0 0
        %793 = vmatpush1.bf16.msra.mxu0 0
        %794 = vmatprep.mubr.bf16.mxu0 0
        %795 = vmatmul.mubr.bf16.gmra.mrb[0].mxu0 %v717
        %v796 = vpop.f32.mrb[0].mxu0
        %v797 = vadd.f32 0.0, %v796
        %v798 = vpop.f32.mrb[0].mxu0
        %v799 = vpop.f32.mrb[0].mxu0
        %v800 = vadd.f32 0.0, %v799
        %v801 = vpop.f32.mrb[0].mxu0
        %802 = vmatprep.mubr.bf16.mxu0 0
        %803 = vmatmul.mubr.bf16.gmra.mrb[0].mxu0 %v720
        %v804 = vpop.f32.mrb[0].mxu0
        %v805 = vadd.f32 0.0, %v804
        %v806 = vpop.f32.mrb[0].mxu0
        %v807 = vpop.f32.mrb[0].mxu0
        %v808 = vadd.f32 0.0, %v807
        %v809 = vpop.f32.mrb[0].mxu0
        %810 = vmatprep.mubr.bf16.mxu0 0
        %811 = vmatmul.mubr.bf16.gmra.mrb[0].mxu0 %v723
        %v812 = vpop.f32.mrb[0].mxu0
        %v813 = vadd.f32 0.0, %v812
        %v814 = vpop.f32.mrb[0].mxu0
        %v815 = vpop.f32.mrb[0].mxu0
        %v816 = vadd.f32 0.0, %v815
        %v817 = vpop.f32.mrb[0].mxu0
        %818 = vmatprep.mubr.bf16.mxu0 0
        %819 = vmatmul.mubr.bf16.gmra.mrb[0].mxu0 %v726
        %v820 = vpop.f32.mrb[0].mxu0
        %v821 = vadd.f32 0.0, %v820
        %v822 = vpop.f32.mrb[0].mxu0
        %v823 = vpop.f32.mrb[0].mxu0
        %v824 = vadd.f32 0.0, %v823
        %v825 = vpop.f32.mrb[0].mxu0
        %826 = vmatprep.mubr.bf16.mxu0 0
        %827 = vmatmul.mubr.bf16.gmra.mrb[0].mxu0 %v729
        %v828 = vpop.f32.mrb[0].mxu0
        %v829 = vadd.f32 0.0, %v828
        %v830 = vpop.f32.mrb[0].mxu0
        %v831 = vpop.f32.mrb[0].mxu0
        %v832 = vadd.f32 0.0, %v831
        %v833 = vpop.f32.mrb[0].mxu0
        %834 = vmatprep.mubr.bf16.mxu0 0
        %835 = vmatmul.mubr.bf16.gmra.mrb[0].mxu0 %v732
        %v836 = vpop.f32.mrb[0].mxu0
        %v837 = vadd.f32 0.0, %v836
        %v838 = vpop.f32.mrb[0].mxu0
        %v839 = vpop.f32.mrb[0].mxu0
        %v840 = vadd.f32 0.0, %v839
        %v841 = vpop.f32.mrb[0].mxu0
        %842 = vmatprep.mubr.bf16.mxu0 0
        %843 = vmatmul.mubr.bf16.gmra.mrb[0].mxu0 %v735
        %v844 = vpop.f32.mrb[0].mxu0
        %v845 = vadd.f32 0.0, %v844
        %v846 = vpop.f32.mrb[0].mxu0
        %v847 = vpop.f32.mrb[0].mxu0
        %v848 = vadd.f32 0.0, %v847
        %v849 = vpop.f32.mrb[0].mxu0
        %850 = vmatprep.mubr.bf16.mxu0 0
        %851 = vmatmul.mubr.bf16.gmra.mrb[0].mxu0 %v738
        %v852 = vpop.f32.mrb[0].mxu0
        %v853 = vadd.f32 0.0, %v852
        %v854 = vpop.f32.mrb[0].mxu0
        %v855 = vpop.f32.mrb[0].mxu0
        %v856 = vadd.f32 0.0, %v855
        %v857 = vpop.f32.mrb[0].mxu0
        %858 = vmatprep.mubr.bf16.mxu0 0
        %859 = vmatmul.mubr.bf16.gmra.mrb[0].mxu0 %v741
        %v860 = vpop.f32.mrb[0].mxu0
        %v861 = vadd.f32 0.0, %v860
        %v862 = vpop.f32.mrb[0].mxu0
        %v863 = vpop.f32.mrb[0].mxu0
        %v864 = vadd.f32 0.0, %v863
        %v865 = vpop.f32.mrb[0].mxu0
        %866 = vmatprep.mubr.bf16.mxu0 0
        %867 = vmatmul.mubr.bf16.gmra.mrb[0].mxu0 %v744
        %v868 = vpop.f32.mrb[0].mxu0
        %v869 = vadd.f32 0.0, %v868
        %v870 = vpop.f32.mrb[0].mxu0
        %v871 = vpop.f32.mrb[0].mxu0
        %v872 = vadd.f32 0.0, %v871
        %v873 = vpop.f32.mrb[0].mxu0
        %874 = vmatprep.mubr.bf16.mxu0 0
        %875 = vmatmul.mubr.bf16.gmra.mrb[0].mxu0 %v747
        %v876 = vpop.f32.mrb[0].mxu0
        %v877 = vadd.f32 0.0, %v876
        %v878 = vpop.f32.mrb[0].mxu0
        %v879 = vpop.f32.mrb[0].mxu0
        %v880 = vadd.f32 0.0, %v879
        %v881 = vpop.f32.mrb[0].mxu0
        %882 = vmatprep.mubr.bf16.mxu0 0
        %883 = vmatmul.mubr.bf16.gmra.mrb[0].mxu0 %v750
        %v884 = vpop.f32.mrb[0].mxu0
        %v885 = vadd.f32 0.0, %v884
        %v886 = vpop.f32.mrb[0].mxu0
        %v887 = vpop.f32.mrb[0].mxu0
        %v888 = vadd.f32 0.0, %v887
        %v889 = vpop.f32.mrb[0].mxu0
        %890 = vmatprep.mubr.bf16.mxu0 0
        %891 = vmatmul.mubr.bf16.gmra.mrb[0].mxu0 %v753
        %v892 = vpop.f32.mrb[0].mxu0
        %v893 = vadd.f32 0.0, %v892
        %v894 = vpop.f32.mrb[0].mxu0
        %v895 = vpop.f32.mrb[0].mxu0
        %v896 = vpop.f32.mrb[0].mxu0
        %897 = vdwg.mxu0
        %s898 = scalar_lea.vmem %s583, 100 [#allocation2]
        %v899 = vld [vmem:[%s898] sm:$0xf]
        %v900 = vld [vmem:[%s898 + $0x4] sm:$0xf]
        %v901 = vld [vmem:[%s898 + $0x8] sm:$0xf]
        %v902 = vld [vmem:[%s898 + $0xc] sm:$0xf]
        %v903 = vld [vmem:[%s898 + $0x10] sm:$0xf]
        %v904 = vld [vmem:[%s898 + $0x14] sm:$0xf]
        %v905 = vld [vmem:[%s898 + $0x18] sm:$0xf]
        %v906 = vld [vmem:[%s898 + $0x1c] sm:$0xf]
        %v907 = vld [vmem:[%s898 + $0x20] sm:$0xf]
        %v908 = vld [vmem:[%s898 + $0x24] sm:$0xf]
        %v909 = vld [vmem:[%s898 + $0x28] sm:$0xf]
        %v910 = vld [vmem:[%s898 + $0x2c] sm:$0xf]
        %v911 = vld [vmem:[%s898 + $0x30] sm:$0xf]
        %v912 = vld [vmem:[%s898 + $0x34] sm:$0xf]
        %v913 = vld [vmem:[%s898 + $0x38] sm:$0xf]
        %v914 = vld [vmem:[%s898 + $0x3c] sm:$0xf]
        %v915 = vld [vmem:[%s898 + $0x40] sm:$0xf]
        %v916 = vld [vmem:[%s898 + $0x44] sm:$0xf]
        %v917 = vld [vmem:[%s898 + $0x48] sm:$0xf]
        %v918 = vld [vmem:[%s898 + $0x4c] sm:$0xf]
        %v919 = vld [vmem:[%s898 + $0x50] sm:$0xf]
        %v920 = vld [vmem:[%s898 + $0x54] sm:$0xf]
        %v921 = vld [vmem:[%s898 + $0x58] sm:$0xf]
        %v922 = vld [vmem:[%s898 + $0x5c] sm:$0xf]
        %v923 = vld [vmem:[%s898 + $0x60] sm:$0xf]
        %v949 = vunpack.c.l.b16 %v899
        %v950 = vunpack.c.l.b16 %v900
        %v951 = vunpack.c.l.b16 %v901
        %v952 = vunpack.c.l.b16 %v902
        %v953 = vunpack.c.l.b16 %v903
        %v954 = vunpack.c.l.b16 %v904
        %v955 = vunpack.c.l.b16 %v905
        %v956 = vunpack.c.l.b16 %v906
        %v957 = vunpack.c.l.b16 %v907
        %v958 = vunpack.c.l.b16 %v908
        %v959 = vunpack.c.l.b16 %v909
        %v960 = vunpack.c.l.b16 %v910
        %v961 = vunpack.c.l.b16 %v911
        %v962 = vunpack.c.l.b16 %v912
        %v963 = vunpack.c.l.b16 %v913
        %v964 = vunpack.c.l.b16 %v914
        %v965 = vunpack.c.l.b16 %v915
        %v966 = vunpack.c.l.b16 %v916
        %v967 = vunpack.c.l.b16 %v917
        %v968 = vunpack.c.l.b16 %v918
        %v969 = vunpack.c.l.b16 %v919
        %v970 = vunpack.c.l.b16 %v920
        %v971 = vunpack.c.l.b16 %v921
        %v972 = vunpack.c.l.b16 %v922
        %v973 = vunpack.c.l.b16 %v923
        %v974 = vpack.c.b16 %v950, %v949
        %v975 = vpack.c.b16 %v952, %v951
        %v976 = vpack.c.b16 %v954, %v953
        %v977 = vpack.c.b16 %v956, %v955
        %v978 = vpack.c.b16 %v958, %v957
        %v979 = vpack.c.b16 %v960, %v959
        %v980 = vpack.c.b16 %v962, %v961
        %v981 = vpack.c.b16 %v964, %v963
        %v982 = vpack.c.b16 %v966, %v965
        %v983 = vpack.c.b16 %v968, %v967
        %v984 = vpack.c.b16 %v970, %v969
        %v985 = vpack.c.b16 %v972, %v971
        %v986 = vpack.c.b16 %v973, %v973
        %v988 = vsel %vm715, %v974, 0
        %v991 = vsel %vm715, %v975, 0
        %v994 = vsel %vm715, %v976, 0
        %v997 = vsel %vm715, %v977, 0
        %v1000 = vsel %vm715, %v978, 0
        %v1003 = vsel %vm715, %v979, 0
        %v1006 = vsel %vm715, %v980, 0
        %v1009 = vsel %vm715, %v981, 0
        %v1012 = vsel %vm715, %v982, 0
        %v1015 = vsel %vm715, %v983, 0
        %v1018 = vsel %vm715, %v984, 0
        %v1021 = vsel %vm715, %v985, 0
        %v1024 = vsel %vm715, %v986, 0
        %1026 = vmatprep.subr.bf16.mxu0 0
        %1027 = vmatpush1.bf16.msra.mxu0 %v712
        %1028 = vmatprep.subr.bf16.mxu0 0
        %1029 = vmatpush1.bf16.msra.mxu0 %v760
        %1030 = vmatprep.subr.bf16.mxu0 0
        %1031 = vmatpush1.bf16.msra.mxu0 0
        %1032 = vmatprep.subr.bf16.mxu0 0
        %1033 = vmatpush1.bf16.msra.mxu0 0
        %1034 = vmatprep.subr.bf16.mxu0 0
        %1035 = vmatpush1.bf16.msra.mxu0 0
        %1036 = vmatprep.subr.bf16.mxu0 0
        %1037 = vmatpush1.bf16.msra.mxu0 0
        %1038 = vmatprep.subr.bf16.mxu0 0
        %1039 = vmatpush1.bf16.msra.mxu0 0
        %1040 = vmatprep.subr.bf16.mxu0 0
        %1041 = vmatpush1.bf16.msra.mxu0 0
        %1042 = vmatprep.subr.bf16.mxu0 0
        %1043 = vmatpush1.bf16.msra.mxu0 0
        %1044 = vmatprep.subr.bf16.mxu0 0
        %1045 = vmatpush1.bf16.msra.mxu0 0
        %1046 = vmatprep.subr.bf16.mxu0 0
        %1047 = vmatpush1.bf16.msra.mxu0 0
        %1048 = vmatprep.subr.bf16.mxu0 0
        %1049 = vmatpush1.bf16.msra.mxu0 0
        %1050 = vmatprep.subr.bf16.mxu0 0
        %1051 = vmatpush1.bf16.msra.mxu0 0
        %1052 = vmatprep.subr.bf16.mxu0 0
        %1053 = vmatpush1.bf16.msra.mxu0 0
        %1054 = vmatprep.subr.bf16.mxu0 0
        %1055 = vmatpush1.bf16.msra.mxu0 0
        %1056 = vmatprep.subr.bf16.mxu0 0
        %1057 = vmatpush1.bf16.msra.mxu0 0
        %1058 = vmatprep.mubr.bf16.mxu0 0
        %1059 = vmatmul.mubr.bf16.gmra.mrb[0].mxu0 %v988
        %v1060 = vpop.f32.mrb[0].mxu0
        %v1061 = vadd.f32 0.0, %v1060
        %v1062 = vpop.f32.mrb[0].mxu0
        %v1063 = vpop.f32.mrb[0].mxu0
        %v1064 = vadd.f32 0.0, %v1063
        %v1065 = vpop.f32.mrb[0].mxu0
        %1066 = vmatprep.mubr.bf16.mxu0 0
        %1067 = vmatmul.mubr.bf16.gmra.mrb[0].mxu0 %v991
        %v1068 = vpop.f32.mrb[0].mxu0
        %v1069 = vadd.f32 0.0, %v1068
        %v1070 = vpop.f32.mrb[0].mxu0
        %v1071 = vpop.f32.mrb[0].mxu0
        %v1072 = vadd.f32 0.0, %v1071
        %v1073 = vpop.f32.mrb[0].mxu0
        %1074 = vmatprep.mubr.bf16.mxu0 0
        %1075 = vmatmul.mubr.bf16.gmra.mrb[0].mxu0 %v994
        %v1076 = vpop.f32.mrb[0].mxu0
        %v1077 = vadd.f32 0.0, %v1076
        %v1078 = vpop.f32.mrb[0].mxu0
        %v1079 = vpop.f32.mrb[0].mxu0
        %v1080 = vadd.f32 0.0, %v1079
        %v1081 = vpop.f32.mrb[0].mxu0
        %1082 = vmatprep.mubr.bf16.mxu0 0
        %1083 = vmatmul.mubr.bf16.gmra.mrb[0].mxu0 %v997
        %v1084 = vpop.f32.mrb[0].mxu0
        %v1085 = vadd.f32 0.0, %v1084
        %v1086 = vpop.f32.mrb[0].mxu0
        %v1087 = vpop.f32.mrb[0].mxu0
        %v1088 = vadd.f32 0.0, %v1087
        %v1089 = vpop.f32.mrb[0].mxu0
        %1090 = vmatprep.mubr.bf16.mxu0 0
        %1091 = vmatmul.mubr.bf16.gmra.mrb[0].mxu0 %v1000
        %v1092 = vpop.f32.mrb[0].mxu0
        %v1093 = vadd.f32 0.0, %v1092
        %v1094 = vpop.f32.mrb[0].mxu0
        %v1095 = vpop.f32.mrb[0].mxu0
        %v1096 = vadd.f32 0.0, %v1095
        %v1097 = vpop.f32.mrb[0].mxu0
        %1098 = vmatprep.mubr.bf16.mxu0 0
        %1099 = vmatmul.mubr.bf16.gmra.mrb[0].mxu0 %v1003
        %v1100 = vpop.f32.mrb[0].mxu0
        %v1101 = vadd.f32 0.0, %v1100
        %v1102 = vpop.f32.mrb[0].mxu0
        %v1103 = vpop.f32.mrb[0].mxu0
        %v1104 = vadd.f32 0.0, %v1103
        %v1105 = vpop.f32.mrb[0].mxu0
        %1106 = vmatprep.mubr.bf16.mxu0 0
        %1107 = vmatmul.mubr.bf16.gmra.mrb[0].mxu0 %v1006
        %v1108 = vpop.f32.mrb[0].mxu0
        %v1109 = vadd.f32 0.0, %v1108
        %v1110 = vpop.f32.mrb[0].mxu0
        %v1111 = vpop.f32.mrb[0].mxu0
        %v1112 = vadd.f32 0.0, %v1111
        %v1113 = vpop.f32.mrb[0].mxu0
        %1114 = vmatprep.mubr.bf16.mxu0 0
        %1115 = vmatmul.mubr.bf16.gmra.mrb[0].mxu0 %v1009
        %v1116 = vpop.f32.mrb[0].mxu0
        %v1117 = vadd.f32 0.0, %v1116
        %v1118 = vpop.f32.mrb[0].mxu0
        %v1119 = vpop.f32.mrb[0].mxu0
        %v1120 = vadd.f32 0.0, %v1119
        %v1121 = vpop.f32.mrb[0].mxu0
        %1122 = vmatprep.mubr.bf16.mxu0 0
        %1123 = vmatmul.mubr.bf16.gmra.mrb[0].mxu0 %v1012
        %v1124 = vpop.f32.mrb[0].mxu0
        %v1125 = vadd.f32 0.0, %v1124
        %v1126 = vpop.f32.mrb[0].mxu0
        %v1127 = vpop.f32.mrb[0].mxu0
        %v1128 = vadd.f32 0.0, %v1127
        %v1129 = vpop.f32.mrb[0].mxu0
        %1130 = vmatprep.mubr.bf16.mxu0 0
        %1131 = vmatmul.mubr.bf16.gmra.mrb[0].mxu0 %v1015
        %v1132 = vpop.f32.mrb[0].mxu0
        %v1133 = vadd.f32 0.0, %v1132
        %v1134 = vpop.f32.mrb[0].mxu0
        %v1135 = vpop.f32.mrb[0].mxu0
        %v1136 = vadd.f32 0.0, %v1135
        %v1137 = vpop.f32.mrb[0].mxu0
        %1138 = vmatprep.mubr.bf16.mxu0 0
        %1139 = vmatmul.mubr.bf16.gmra.mrb[0].mxu0 %v1018
        %v1140 = vpop.f32.mrb[0].mxu0
        %v1141 = vadd.f32 0.0, %v1140
        %v1142 = vpop.f32.mrb[0].mxu0
        %v1143 = vpop.f32.mrb[0].mxu0
        %v1144 = vadd.f32 0.0, %v1143
        %v1145 = vpop.f32.mrb[0].mxu0
        %1146 = vmatprep.mubr.bf16.mxu0 0
        %1147 = vmatmul.mubr.bf16.gmra.mrb[0].mxu0 %v1021
        %v1148 = vpop.f32.mrb[0].mxu0
        %v1149 = vadd.f32 0.0, %v1148
        %v1150 = vpop.f32.mrb[0].mxu0
        %v1151 = vpop.f32.mrb[0].mxu0
        %v1152 = vadd.f32 0.0, %v1151
        %v1153 = vpop.f32.mrb[0].mxu0
        %1154 = vmatprep.mubr.bf16.mxu0 0
        %1155 = vmatmul.mubr.bf16.gmra.mrb[0].mxu0 %v1024
        %v1156 = vpop.f32.mrb[0].mxu0
        %v1157 = vadd.f32 0.0, %v1156
        %v1158 = vpop.f32.mrb[0].mxu0
        %v1159 = vpop.f32.mrb[0].mxu0
        %v1160 = vpop.f32.mrb[0].mxu0
        %1161 = vdwg.mxu0
        %v1162 = vmax.f32 %v797, %v1061
        %v1163 = vmax.f32 %v800, %v1064
        %v1164 = vmax.f32 %v805, %v1069
        %v1165 = vmax.f32 %v808, %v1072
        %v1166 = vmax.f32 %v813, %v1077
        %v1167 = vmax.f32 %v816, %v1080
        %v1168 = vmax.f32 %v821, %v1085
        %v1169 = vmax.f32 %v824, %v1088
        %v1170 = vmax.f32 %v829, %v1093
        %v1171 = vmax.f32 %v832, %v1096
        %v1172 = vmax.f32 %v837, %v1101
        %v1173 = vmax.f32 %v840, %v1104
        %v1174 = vmax.f32 %v845, %v1109
        %v1175 = vmax.f32 %v848, %v1112
        %v1176 = vmax.f32 %v853, %v1117
        %v1177 = vmax.f32 %v856, %v1120
        %v1178 = vmax.f32 %v861, %v1125
        %v1179 = vmax.f32 %v864, %v1128
        %v1180 = vmax.f32 %v869, %v1133
        %v1181 = vmax.f32 %v872, %v1136
        %v1182 = vmax.f32 %v877, %v1141
        %v1183 = vmax.f32 %v880, %v1144
        %v1184 = vmax.f32 %v885, %v1149
        %v1185 = vmax.f32 %v888, %v1152
        %v1186 = vmax.f32 %v893, %v1157
        %s1187 = scalar_lea.vmem %s583, 200 [#allocation2]
        %v1188 = vld [vmem:[%s1187] sm:$0xf]
        %v1189 = vld [vmem:[%s1187 + $0x4] sm:$0xf]
        %v1190 = vld [vmem:[%s1187 + $0x8] sm:$0xf]
        %v1191 = vld [vmem:[%s1187 + $0xc] sm:$0xf]
        %v1192 = vld [vmem:[%s1187 + $0x10] sm:$0xf]
        %v1193 = vld [vmem:[%s1187 + $0x14] sm:$0xf]
        %v1194 = vld [vmem:[%s1187 + $0x18] sm:$0xf]
        %v1195 = vld [vmem:[%s1187 + $0x1c] sm:$0xf]
        %v1196 = vld [vmem:[%s1187 + $0x20] sm:$0xf]
        %v1197 = vld [vmem:[%s1187 + $0x24] sm:$0xf]
        %v1198 = vld [vmem:[%s1187 + $0x28] sm:$0xf]
        %v1199 = vld [vmem:[%s1187 + $0x2c] sm:$0xf]
        %v1200 = vld [vmem:[%s1187 + $0x30] sm:$0xf]
        %v1201 = vld [vmem:[%s1187 + $0x34] sm:$0xf]
        %v1202 = vld [vmem:[%s1187 + $0x38] sm:$0xf]
        %v1203 = vld [vmem:[%s1187 + $0x3c] sm:$0xf]
        %v1204 = vld [vmem:[%s1187 + $0x40] sm:$0xf]
        %v1205 = vld [vmem:[%s1187 + $0x44] sm:$0xf]
        %v1206 = vld [vmem:[%s1187 + $0x48] sm:$0xf]
        %v1207 = vld [vmem:[%s1187 + $0x4c] sm:$0xf]
        %v1208 = vld [vmem:[%s1187 + $0x50] sm:$0xf]
        %v1209 = vld [vmem:[%s1187 + $0x54] sm:$0xf]
        %v1210 = vld [vmem:[%s1187 + $0x58] sm:$0xf]
        %v1211 = vld [vmem:[%s1187 + $0x5c] sm:$0xf]
        %v1212 = vld [vmem:[%s1187 + $0x60] sm:$0xf]
        %v1238 = vunpack.c.l.b16 %v1188
        %v1239 = vunpack.c.l.b16 %v1189
        %v1240 = vunpack.c.l.b16 %v1190
        %v1241 = vunpack.c.l.b16 %v1191
        %v1242 = vunpack.c.l.b16 %v1192
        %v1243 = vunpack.c.l.b16 %v1193
        %v1244 = vunpack.c.l.b16 %v1194
        %v1245 = vunpack.c.l.b16 %v1195
        %v1246 = vunpack.c.l.b16 %v1196
        %v1247 = vunpack.c.l.b16 %v1197
        %v1248 = vunpack.c.l.b16 %v1198
        %v1249 = vunpack.c.l.b16 %v1199
        %v1250 = vunpack.c.l.b16 %v1200
        %v1251 = vunpack.c.l.b16 %v1201
        %v1252 = vunpack.c.l.b16 %v1202
        %v1253 = vunpack.c.l.b16 %v1203
        %v1254 = vunpack.c.l.b16 %v1204
        %v1255 = vunpack.c.l.b16 %v1205
        %v1256 = vunpack.c.l.b16 %v1206
        %v1257 = vunpack.c.l.b16 %v1207
        %v1258 = vunpack.c.l.b16 %v1208
        %v1259 = vunpack.c.l.b16 %v1209
        %v1260 = vunpack.c.l.b16 %v1210
        %v1261 = vunpack.c.l.b16 %v1211
        %v1262 = vunpack.c.l.b16 %v1212
        %v1263 = vpack.c.b16 %v1239, %v1238
        %v1264 = vpack.c.b16 %v1241, %v1240
        %v1265 = vpack.c.b16 %v1243, %v1242
        %v1266 = vpack.c.b16 %v1245, %v1244
        %v1267 = vpack.c.b16 %v1247, %v1246
        %v1268 = vpack.c.b16 %v1249, %v1248
        %v1269 = vpack.c.b16 %v1251, %v1250
        %v1270 = vpack.c.b16 %v1253, %v1252
        %v1271 = vpack.c.b16 %v1255, %v1254
        %v1272 = vpack.c.b16 %v1257, %v1256
        %v1273 = vpack.c.b16 %v1259, %v1258
        %v1274 = vpack.c.b16 %v1261, %v1260
        %v1275 = vpack.c.b16 %v1262, %v1262
        %v1277 = vsel %vm715, %v1263, 0
        %v1280 = vsel %vm715, %v1264, 0
        %v1283 = vsel %vm715, %v1265, 0
        %v1286 = vsel %vm715, %v1266, 0
        %v1289 = vsel %vm715, %v1267, 0
        %v1292 = vsel %vm715, %v1268, 0
        %v1295 = vsel %vm715, %v1269, 0
        %v1298 = vsel %vm715, %v1270, 0
        %v1301 = vsel %vm715, %v1271, 0
        %v1304 = vsel %vm715, %v1272, 0
        %v1307 = vsel %vm715, %v1273, 0
        %v1310 = vsel %vm715, %v1274, 0
        %v1313 = vsel %vm715, %v1275, 0
        %1315 = vmatprep.subr.bf16.mxu0 0
        %1316 = vmatpush1.bf16.msra.mxu0 %v712
        %1317 = vmatprep.subr.bf16.mxu0 0
        %1318 = vmatpush1.bf16.msra.mxu0 %v760
        %1319 = vmatprep.subr.bf16.mxu0 0
        %1320 = vmatpush1.bf16.msra.mxu0 0
        %1321 = vmatprep.subr.bf16.mxu0 0
        %1322 = vmatpush1.bf16.msra.mxu0 0
        %1323 = vmatprep.subr.bf16.mxu0 0
        %1324 = vmatpush1.bf16.msra.mxu0 0
        %1325 = vmatprep.subr.bf16.mxu0 0
        %1326 = vmatpush1.bf16.msra.mxu0 0
        %1327 = vmatprep.subr.bf16.mxu0 0
        %1328 = vmatpush1.bf16.msra.mxu0 0
        %1329 = vmatprep.subr.bf16.mxu0 0
        %1330 = vmatpush1.bf16.msra.mxu0 0
        %1331 = vmatprep.subr.bf16.mxu0 0
        %1332 = vmatpush1.bf16.msra.mxu0 0
        %1333 = vmatprep.subr.bf16.mxu0 0
        %1334 = vmatpush1.bf16.msra.mxu0 0
        %1335 = vmatprep.subr.bf16.mxu0 0
        %1336 = vmatpush1.bf16.msra.mxu0 0
        %1337 = vmatprep.subr.bf16.mxu0 0
        %1338 = vmatpush1.bf16.msra.mxu0 0
        %1339 = vmatprep.subr.bf16.mxu0 0
        %1340 = vmatpush1.bf16.msra.mxu0 0
        %1341 = vmatprep.subr.bf16.mxu0 0
        %1342 = vmatpush1.bf16.msra.mxu0 0
        %1343 = vmatprep.subr.bf16.mxu0 0
        %1344 = vmatpush1.bf16.msra.mxu0 0
        %1345 = vmatprep.subr.bf16.mxu0 0
        %1346 = vmatpush1.bf16.msra.mxu0 0
        %1347 = vmatprep.mubr.bf16.mxu0 0
        %1348 = vmatmul.mubr.bf16.gmra.mrb[0].mxu0 %v1277
        %v1349 = vpop.f32.mrb[0].mxu0
        %v1350 = vadd.f32 0.0, %v1349
        %v1351 = vpop.f32.mrb[0].mxu0
        %v1352 = vpop.f32.mrb[0].mxu0
        %v1353 = vadd.f32 0.0, %v1352
        %v1354 = vpop.f32.mrb[0].mxu0
        %1355 = vmatprep.mubr.bf16.mxu0 0
        %1356 = vmatmul.mubr.bf16.gmra.mrb[0].mxu0 %v1280
        %v1357 = vpop.f32.mrb[0].mxu0
        %v1358 = vadd.f32 0.0, %v1357
        %v1359 = vpop.f32.mrb[0].mxu0
        %v1360 = vpop.f32.mrb[0].mxu0
        %v1361 = vadd.f32 0.0, %v1360
        %v1362 = vpop.f32.mrb[0].mxu0
        %1363 = vmatprep.mubr.bf16.mxu0 0
        %1364 = vmatmul.mubr.bf16.gmra.mrb[0].mxu0 %v1283
        %v1365 = vpop.f32.mrb[0].mxu0
        %v1366 = vadd.f32 0.0, %v1365
        %v1367 = vpop.f32.mrb[0].mxu0
        %v1368 = vpop.f32.mrb[0].mxu0
        %v1369 = vadd.f32 0.0, %v1368
        %v1370 = vpop.f32.mrb[0].mxu0
        %1371 = vmatprep.mubr.bf16.mxu0 0
        %1372 = vmatmul.mubr.bf16.gmra.mrb[0].mxu0 %v1286
        %v1373 = vpop.f32.mrb[0].mxu0
        %v1374 = vadd.f32 0.0, %v1373
        %v1375 = vpop.f32.mrb[0].mxu0
        %v1376 = vpop.f32.mrb[0].mxu0
        %v1377 = vadd.f32 0.0, %v1376
        %v1378 = vpop.f32.mrb[0].mxu0
        %1379 = vmatprep.mubr.bf16.mxu0 0
        %1380 = vmatmul.mubr.bf16.gmra.mrb[0].mxu0 %v1289
        %v1381 = vpop.f32.mrb[0].mxu0
        %v1382 = vadd.f32 0.0, %v1381
        %v1383 = vpop.f32.mrb[0].mxu0
        %v1384 = vpop.f32.mrb[0].mxu0
        %v1385 = vadd.f32 0.0, %v1384
        %v1386 = vpop.f32.mrb[0].mxu0
        %1387 = vmatprep.mubr.bf16.mxu0 0
        %1388 = vmatmul.mubr.bf16.gmra.mrb[0].mxu0 %v1292
        %v1389 = vpop.f32.mrb[0].mxu0
        %v1390 = vadd.f32 0.0, %v1389
        %v1391 = vpop.f32.mrb[0].mxu0
        %v1392 = vpop.f32.mrb[0].mxu0
        %v1393 = vadd.f32 0.0, %v1392
        %v1394 = vpop.f32.mrb[0].mxu0
        %1395 = vmatprep.mubr.bf16.mxu0 0
        %1396 = vmatmul.mubr.bf16.gmra.mrb[0].mxu0 %v1295
        %v1397 = vpop.f32.mrb[0].mxu0
        %v1398 = vadd.f32 0.0, %v1397
        %v1399 = vpop.f32.mrb[0].mxu0
        %v1400 = vpop.f32.mrb[0].mxu0
        %v1401 = vadd.f32 0.0, %v1400
        %v1402 = vpop.f32.mrb[0].mxu0
        %1403 = vmatprep.mubr.bf16.mxu0 0
        %1404 = vmatmul.mubr.bf16.gmra.mrb[0].mxu0 %v1298
        %v1405 = vpop.f32.mrb[0].mxu0
        %v1406 = vadd.f32 0.0, %v1405
        %v1407 = vpop.f32.mrb[0].mxu0
        %v1408 = vpop.f32.mrb[0].mxu0
        %v1409 = vadd.f32 0.0, %v1408
        %v1410 = vpop.f32.mrb[0].mxu0
        %1411 = vmatprep.mubr.bf16.mxu0 0
        %1412 = vmatmul.mubr.bf16.gmra.mrb[0].mxu0 %v1301
        %v1413 = vpop.f32.mrb[0].mxu0
        %v1414 = vadd.f32 0.0, %v1413
        %v1415 = vpop.f32.mrb[0].mxu0
        %v1416 = vpop.f32.mrb[0].mxu0
        %v1417 = vadd.f32 0.0, %v1416
        %v1418 = vpop.f32.mrb[0].mxu0
        %1419 = vmatprep.mubr.bf16.mxu0 0
        %1420 = vmatmul.mubr.bf16.gmra.mrb[0].mxu0 %v1304
        %v1421 = vpop.f32.mrb[0].mxu0
        %v1422 = vadd.f32 0.0, %v1421
        %v1423 = vpop.f32.mrb[0].mxu0
        %v1424 = vpop.f32.mrb[0].mxu0
        %v1425 = vadd.f32 0.0, %v1424
        %v1426 = vpop.f32.mrb[0].mxu0
        %1427 = vmatprep.mubr.bf16.mxu0 0
        %1428 = vmatmul.mubr.bf16.gmra.mrb[0].mxu0 %v1307
        %v1429 = vpop.f32.mrb[0].mxu0
        %v1430 = vadd.f32 0.0, %v1429
        %v1431 = vpop.f32.mrb[0].mxu0
        %v1432 = vpop.f32.mrb[0].mxu0
        %v1433 = vadd.f32 0.0, %v1432
        %v1434 = vpop.f32.mrb[0].mxu0
        %1435 = vmatprep.mubr.bf16.mxu0 0
        %1436 = vmatmul.mubr.bf16.gmra.mrb[0].mxu0 %v1310
        %v1437 = vpop.f32.mrb[0].mxu0
        %v1438 = vadd.f32 0.0, %v1437
        %v1439 = vpop.f32.mrb[0].mxu0
        %v1440 = vpop.f32.mrb[0].mxu0
        %v1441 = vadd.f32 0.0, %v1440
        %v1442 = vpop.f32.mrb[0].mxu0
        %1443 = vmatprep.mubr.bf16.mxu0 0
        %1444 = vmatmul.mubr.bf16.gmra.mrb[0].mxu0 %v1313
        %v1445 = vpop.f32.mrb[0].mxu0
        %v1446 = vadd.f32 0.0, %v1445
        %v1447 = vpop.f32.mrb[0].mxu0
        %v1448 = vpop.f32.mrb[0].mxu0
        %v1449 = vpop.f32.mrb[0].mxu0
        %1450 = vdwg.mxu0
        %v1451 = vmax.f32 %v1162, %v1350
        %v1452 = vmax.f32 %v1163, %v1353
        %v1453 = vmax.f32 %v1164, %v1358
        %v1454 = vmax.f32 %v1165, %v1361
        %v1455 = vmax.f32 %v1166, %v1366
        %v1456 = vmax.f32 %v1167, %v1369
        %v1457 = vmax.f32 %v1168, %v1374
        %v1458 = vmax.f32 %v1169, %v1377
        %v1459 = vmax.f32 %v1170, %v1382
        %v1460 = vmax.f32 %v1171, %v1385
        %v1461 = vmax.f32 %v1172, %v1390
        %v1462 = vmax.f32 %v1173, %v1393
        %v1463 = vmax.f32 %v1174, %v1398
        %v1464 = vmax.f32 %v1175, %v1401
        %v1465 = vmax.f32 %v1176, %v1406
        %v1466 = vmax.f32 %v1177, %v1409
        %v1467 = vmax.f32 %v1178, %v1414
        %v1468 = vmax.f32 %v1179, %v1417
        %v1469 = vmax.f32 %v1180, %v1422
        %v1470 = vmax.f32 %v1181, %v1425
        %v1471 = vmax.f32 %v1182, %v1430
        %v1472 = vmax.f32 %v1183, %v1433
        %v1473 = vmax.f32 %v1184, %v1438
        %v1474 = vmax.f32 %v1185, %v1441
        %v1475 = vmax.f32 %v1186, %v1446
        %s1476 = scalar_lea.vmem %s583, 300 [#allocation2]
        %v1477 = vld [vmem:[%s1476] sm:$0xf]
        %v1478 = vld [vmem:[%s1476 + $0x4] sm:$0xf]
        %v1479 = vld [vmem:[%s1476 + $0x8] sm:$0xf]
        %v1480 = vld [vmem:[%s1476 + $0xc] sm:$0xf]
        %v1481 = vld [vmem:[%s1476 + $0x10] sm:$0xf]
        %v1482 = vld [vmem:[%s1476 + $0x14] sm:$0xf]
        %v1483 = vld [vmem:[%s1476 + $0x18] sm:$0xf]
        %v1484 = vld [vmem:[%s1476 + $0x1c] sm:$0xf]
        %v1485 = vld [vmem:[%s1476 + $0x20] sm:$0xf]
        %v1486 = vld [vmem:[%s1476 + $0x24] sm:$0xf]
        %v1487 = vld [vmem:[%s1476 + $0x28] sm:$0xf]
        %v1488 = vld [vmem:[%s1476 + $0x2c] sm:$0xf]
        %v1489 = vld [vmem:[%s1476 + $0x30] sm:$0xf]
        %v1490 = vld [vmem:[%s1476 + $0x34] sm:$0xf]
        %v1491 = vld [vmem:[%s1476 + $0x38] sm:$0xf]
        %v1492 = vld [vmem:[%s1476 + $0x3c] sm:$0xf]
        %v1493 = vld [vmem:[%s1476 + $0x40] sm:$0xf]
        %v1494 = vld [vmem:[%s1476 + $0x44] sm:$0xf]
        %v1495 = vld [vmem:[%s1476 + $0x48] sm:$0xf]
        %v1496 = vld [vmem:[%s1476 + $0x4c] sm:$0xf]
        %v1497 = vld [vmem:[%s1476 + $0x50] sm:$0xf]
        %v1498 = vld [vmem:[%s1476 + $0x54] sm:$0xf]
        %v1499 = vld [vmem:[%s1476 + $0x58] sm:$0xf]
        %v1500 = vld [vmem:[%s1476 + $0x5c] sm:$0xf]
        %v1501 = vld [vmem:[%s1476 + $0x60] sm:$0xf]
        %v1527 = vunpack.c.l.b16 %v1477
        %v1528 = vunpack.c.l.b16 %v1478
        %v1529 = vunpack.c.l.b16 %v1479
        %v1530 = vunpack.c.l.b16 %v1480
        %v1531 = vunpack.c.l.b16 %v1481
        %v1532 = vunpack.c.l.b16 %v1482
        %v1533 = vunpack.c.l.b16 %v1483
        %v1534 = vunpack.c.l.b16 %v1484
        %v1535 = vunpack.c.l.b16 %v1485
        %v1536 = vunpack.c.l.b16 %v1486
        %v1537 = vunpack.c.l.b16 %v1487
        %v1538 = vunpack.c.l.b16 %v1488
        %v1539 = vunpack.c.l.b16 %v1489
        %v1540 = vunpack.c.l.b16 %v1490
        %v1541 = vunpack.c.l.b16 %v1491
        %v1542 = vunpack.c.l.b16 %v1492
        %v1543 = vunpack.c.l.b16 %v1493
        %v1544 = vunpack.c.l.b16 %v1494
        %v1545 = vunpack.c.l.b16 %v1495
        %v1546 = vunpack.c.l.b16 %v1496
        %v1547 = vunpack.c.l.b16 %v1497
        %v1548 = vunpack.c.l.b16 %v1498
        %v1549 = vunpack.c.l.b16 %v1499
        %v1550 = vunpack.c.l.b16 %v1500
        %v1551 = vunpack.c.l.b16 %v1501
        %v1552 = vpack.c.b16 %v1528, %v1527
        %v1553 = vpack.c.b16 %v1530, %v1529
        %v1554 = vpack.c.b16 %v1532, %v1531
        %v1555 = vpack.c.b16 %v1534, %v1533
        %v1556 = vpack.c.b16 %v1536, %v1535
        %v1557 = vpack.c.b16 %v1538, %v1537
        %v1558 = vpack.c.b16 %v1540, %v1539
        %v1559 = vpack.c.b16 %v1542, %v1541
        %v1560 = vpack.c.b16 %v1544, %v1543
        %v1561 = vpack.c.b16 %v1546, %v1545
        %v1562 = vpack.c.b16 %v1548, %v1547
        %v1563 = vpack.c.b16 %v1550, %v1549
        %v1564 = vpack.c.b16 %v1551, %v1551
        %v1566 = vsel %vm715, %v1552, 0
        %v1569 = vsel %vm715, %v1553, 0
        %v1572 = vsel %vm715, %v1554, 0
        %v1575 = vsel %vm715, %v1555, 0
        %v1578 = vsel %vm715, %v1556, 0
        %v1581 = vsel %vm715, %v1557, 0
        %v1584 = vsel %vm715, %v1558, 0
        %v1587 = vsel %vm715, %v1559, 0
        %v1590 = vsel %vm715, %v1560, 0
        %v1593 = vsel %vm715, %v1561, 0
        %v1596 = vsel %vm715, %v1562, 0
        %v1599 = vsel %vm715, %v1563, 0
        %v1602 = vsel %vm715, %v1564, 0
        %1604 = vmatprep.subr.bf16.mxu0 0
        %1605 = vmatpush1.bf16.msra.mxu0 %v712
        %1606 = vmatprep.subr.bf16.mxu0 0
        %1607 = vmatpush1.bf16.msra.mxu0 %v760
        %1608 = vmatprep.subr.bf16.mxu0 0
        %1609 = vmatpush1.bf16.msra.mxu0 0
        %1610 = vmatprep.subr.bf16.mxu0 0
        %1611 = vmatpush1.bf16.msra.mxu0 0
        %1612 = vmatprep.subr.bf16.mxu0 0
        %1613 = vmatpush1.bf16.msra.mxu0 0
        %1614 = vmatprep.subr.bf16.mxu0 0
        %1615 = vmatpush1.bf16.msra.mxu0 0
        %1616 = vmatprep.subr.bf16.mxu0 0
        %1617 = vmatpush1.bf16.msra.mxu0 0
        %1618 = vmatprep.subr.bf16.mxu0 0
        %1619 = vmatpush1.bf16.msra.mxu0 0
        %1620 = vmatprep.subr.bf16.mxu0 0
        %1621 = vmatpush1.bf16.msra.mxu0 0
        %1622 = vmatprep.subr.bf16.mxu0 0
        %1623 = vmatpush1.bf16.msra.mxu0 0
        %1624 = vmatprep.subr.bf16.mxu0 0
        %1625 = vmatpush1.bf16.msra.mxu0 0
        %1626 = vmatprep.subr.bf16.mxu0 0
        %1627 = vmatpush1.bf16.msra.mxu0 0
        %1628 = vmatprep.subr.bf16.mxu0 0
        %1629 = vmatpush1.bf16.msra.mxu0 0
        %1630 = vmatprep.subr.bf16.mxu0 0
        %1631 = vmatpush1.bf16.msra.mxu0 0
        %1632 = vmatprep.subr.bf16.mxu0 0
        %1633 = vmatpush1.bf16.msra.mxu0 0
        %1634 = vmatprep.subr.bf16.mxu0 0
        %1635 = vmatpush1.bf16.msra.mxu0 0
        %1636 = vmatprep.mubr.bf16.mxu0 0
        %1637 = vmatmul.mubr.bf16.gmra.mrb[0].mxu0 %v1566
        %v1638 = vpop.f32.mrb[0].mxu0
        %v1639 = vadd.f32 0.0, %v1638
        %v1640 = vpop.f32.mrb[0].mxu0
        %v1641 = vpop.f32.mrb[0].mxu0
        %v1642 = vadd.f32 0.0, %v1641
        %v1643 = vpop.f32.mrb[0].mxu0
        %1644 = vmatprep.mubr.bf16.mxu0 0
        %1645 = vmatmul.mubr.bf16.gmra.mrb[0].mxu0 %v1569
        %v1646 = vpop.f32.mrb[0].mxu0
        %v1647 = vadd.f32 0.0, %v1646
        %v1648 = vpop.f32.mrb[0].mxu0
        %v1649 = vpop.f32.mrb[0].mxu0
        %v1650 = vadd.f32 0.0, %v1649
        %v1651 = vpop.f32.mrb[0].mxu0
        %1652 = vmatprep.mubr.bf16.mxu0 0
        %1653 = vmatmul.mubr.bf16.gmra.mrb[0].mxu0 %v1572
        %v1654 = vpop.f32.mrb[0].mxu0
        %v1655 = vadd.f32 0.0, %v1654
        %v1656 = vpop.f32.mrb[0].mxu0
        %v1657 = vpop.f32.mrb[0].mxu0
        %v1658 = vadd.f32 0.0, %v1657
        %v1659 = vpop.f32.mrb[0].mxu0
        %1660 = vmatprep.mubr.bf16.mxu0 0
        %1661 = vmatmul.mubr.bf16.gmra.mrb[0].mxu0 %v1575
        %v1662 = vpop.f32.mrb[0].mxu0
        %v1663 = vadd.f32 0.0, %v1662
        %v1664 = vpop.f32.mrb[0].mxu0
        %v1665 = vpop.f32.mrb[0].mxu0
        %v1666 = vadd.f32 0.0, %v1665
        %v1667 = vpop.f32.mrb[0].mxu0
        %1668 = vmatprep.mubr.bf16.mxu0 0
        %1669 = vmatmul.mubr.bf16.gmra.mrb[0].mxu0 %v1578
        %v1670 = vpop.f32.mrb[0].mxu0
        %v1671 = vadd.f32 0.0, %v1670
        %v1672 = vpop.f32.mrb[0].mxu0
        %v1673 = vpop.f32.mrb[0].mxu0
        %v1674 = vadd.f32 0.0, %v1673
        %v1675 = vpop.f32.mrb[0].mxu0
        %1676 = vmatprep.mubr.bf16.mxu0 0
        %1677 = vmatmul.mubr.bf16.gmra.mrb[0].mxu0 %v1581
        %v1678 = vpop.f32.mrb[0].mxu0
        %v1679 = vadd.f32 0.0, %v1678
        %v1680 = vpop.f32.mrb[0].mxu0
        %v1681 = vpop.f32.mrb[0].mxu0
        %v1682 = vadd.f32 0.0, %v1681
        %v1683 = vpop.f32.mrb[0].mxu0
        %1684 = vmatprep.mubr.bf16.mxu0 0
        %1685 = vmatmul.mubr.bf16.gmra.mrb[0].mxu0 %v1584
        %v1686 = vpop.f32.mrb[0].mxu0
        %v1687 = vadd.f32 0.0, %v1686
        %v1688 = vpop.f32.mrb[0].mxu0
        %v1689 = vpop.f32.mrb[0].mxu0
        %v1690 = vadd.f32 0.0, %v1689
        %v1691 = vpop.f32.mrb[0].mxu0
        %1692 = vmatprep.mubr.bf16.mxu0 0
        %1693 = vmatmul.mubr.bf16.gmra.mrb[0].mxu0 %v1587
        %v1694 = vpop.f32.mrb[0].mxu0
        %v1695 = vadd.f32 0.0, %v1694
        %v1696 = vpop.f32.mrb[0].mxu0
        %v1697 = vpop.f32.mrb[0].mxu0
        %v1698 = vadd.f32 0.0, %v1697
        %v1699 = vpop.f32.mrb[0].mxu0
        %1700 = vmatprep.mubr.bf16.mxu0 0
        %1701 = vmatmul.mubr.bf16.gmra.mrb[0].mxu0 %v1590
        %v1702 = vpop.f32.mrb[0].mxu0
        %v1703 = vadd.f32 0.0, %v1702
        %v1704 = vpop.f32.mrb[0].mxu0
        %v1705 = vpop.f32.mrb[0].mxu0
        %v1706 = vadd.f32 0.0, %v1705
        %v1707 = vpop.f32.mrb[0].mxu0
        %1708 = vmatprep.mubr.bf16.mxu0 0
        %1709 = vmatmul.mubr.bf16.gmra.mrb[0].mxu0 %v1593
        %v1710 = vpop.f32.mrb[0].mxu0
        %v1711 = vadd.f32 0.0, %v1710
        %v1712 = vpop.f32.mrb[0].mxu0
        %v1713 = vpop.f32.mrb[0].mxu0
        %v1714 = vadd.f32 0.0, %v1713
        %v1715 = vpop.f32.mrb[0].mxu0
        %1716 = vmatprep.mubr.bf16.mxu0 0
        %1717 = vmatmul.mubr.bf16.gmra.mrb[0].mxu0 %v1596
        %v1718 = vpop.f32.mrb[0].mxu0
        %v1719 = vadd.f32 0.0, %v1718
        %v1720 = vpop.f32.mrb[0].mxu0
        %v1721 = vpop.f32.mrb[0].mxu0
        %v1722 = vadd.f32 0.0, %v1721
        %v1723 = vpop.f32.mrb[0].mxu0
        %1724 = vmatprep.mubr.bf16.mxu0 0
        %1725 = vmatmul.mubr.bf16.gmra.mrb[0].mxu0 %v1599
        %v1726 = vpop.f32.mrb[0].mxu0
        %v1727 = vadd.f32 0.0, %v1726
        %v1728 = vpop.f32.mrb[0].mxu0
        %v1729 = vpop.f32.mrb[0].mxu0
        %v1730 = vadd.f32 0.0, %v1729
        %v1731 = vpop.f32.mrb[0].mxu0
        %1732 = vmatprep.mubr.bf16.mxu0 0
        %1733 = vmatmul.mubr.bf16.gmra.mrb[0].mxu0 %v1602
        %v1734 = vpop.f32.mrb[0].mxu0
        %v1735 = vadd.f32 0.0, %v1734
        %v1736 = vpop.f32.mrb[0].mxu0
        %v1737 = vpop.f32.mrb[0].mxu0
        %v1738 = vpop.f32.mrb[0].mxu0
        %1739 = vdwg.mxu0
        %v1740 = vmax.f32 %v1451, %v1639
        %v1741 = vmax.f32 %v1452, %v1642
        %v1742 = vmax.f32 %v1453, %v1647
        %v1743 = vmax.f32 %v1454, %v1650
        %v1744 = vmax.f32 %v1455, %v1655
        %v1745 = vmax.f32 %v1456, %v1658
        %v1746 = vmax.f32 %v1457, %v1663
        %v1747 = vmax.f32 %v1458, %v1666
        %v1748 = vmax.f32 %v1459, %v1671
        %v1749 = vmax.f32 %v1460, %v1674
        %v1750 = vmax.f32 %v1461, %v1679
        %v1751 = vmax.f32 %v1462, %v1682
        %v1752 = vmax.f32 %v1463, %v1687
        %v1753 = vmax.f32 %v1464, %v1690
        %v1754 = vmax.f32 %v1465, %v1695
        %v1755 = vmax.f32 %v1466, %v1698
        %v1756 = vmax.f32 %v1467, %v1703
        %v1757 = vmax.f32 %v1468, %v1706
        %v1758 = vmax.f32 %v1469, %v1711
        %v1759 = vmax.f32 %v1470, %v1714
        %v1760 = vmax.f32 %v1471, %v1719
        %v1761 = vmax.f32 %v1472, %v1722
        %v1762 = vmax.f32 %v1473, %v1727
        %v1763 = vmax.f32 %v1474, %v1730
        %v1764 = vmax.f32 %v1475, %v1735
        %v1765 = vld [vmem:[%s2] sm:$0x1]
        %v1767 = vlaneseq
        %v1768 = vshrl.u32 %v1767, 7
        %v1769 = vsub.s32 0, %v1768
        %v1770 = vrot.slane %v1765, %v1769
        %v1772 = vadd.f32 %v1740, %v1770
        %v1773 = vadd.f32 %v1741, %v1770
        %v1774 = vadd.f32 %v1742, %v1770
        %v1775 = vadd.f32 %v1743, %v1770
        %v1776 = vadd.f32 %v1744, %v1770
        %v1777 = vadd.f32 %v1745, %v1770
        %v1778 = vadd.f32 %v1746, %v1770
        %v1779 = vadd.f32 %v1747, %v1770
        %v1780 = vadd.f32 %v1748, %v1770
        %v1781 = vadd.f32 %v1749, %v1770
        %v1782 = vadd.f32 %v1750, %v1770
        %v1783 = vadd.f32 %v1751, %v1770
        %v1784 = vadd.f32 %v1752, %v1770
        %v1785 = vadd.f32 %v1753, %v1770
        %v1786 = vadd.f32 %v1754, %v1770
        %v1787 = vadd.f32 %v1755, %v1770
        %v1788 = vadd.f32 %v1756, %v1770
        %v1789 = vadd.f32 %v1757, %v1770
        %v1790 = vadd.f32 %v1758, %v1770
        %v1791 = vadd.f32 %v1759, %v1770
        %v1792 = vadd.f32 %v1760, %v1770
        %v1793 = vadd.f32 %v1761, %v1770
        %v1794 = vadd.f32 %v1762, %v1770
        %v1795 = vadd.f32 %v1763, %v1770
        %v1796 = vadd.f32 %v1764, %v1770
        %v1797 = vmax.f32 %v1772, 0.0
        %v1798 = vmax.f32 %v1773, 0.0
        %v1799 = vmax.f32 %v1774, 0.0
        %v1800 = vmax.f32 %v1775, 0.0
        %v1801 = vmax.f32 %v1776, 0.0
        %v1802 = vmax.f32 %v1777, 0.0
        %v1803 = vmax.f32 %v1778, 0.0
        %v1804 = vmax.f32 %v1779, 0.0
        %v1805 = vmax.f32 %v1780, 0.0
        %v1806 = vmax.f32 %v1781, 0.0
        %v1807 = vmax.f32 %v1782, 0.0
        %v1808 = vmax.f32 %v1783, 0.0
        %v1809 = vmax.f32 %v1784, 0.0
        %v1810 = vmax.f32 %v1785, 0.0
        %v1811 = vmax.f32 %v1786, 0.0
        %v1812 = vmax.f32 %v1787, 0.0
        %v1813 = vmax.f32 %v1788, 0.0
        %v1814 = vmax.f32 %v1789, 0.0
        %v1815 = vmax.f32 %v1790, 0.0
        %v1816 = vmax.f32 %v1791, 0.0
        %v1817 = vmax.f32 %v1792, 0.0
        %v1818 = vmax.f32 %v1793, 0.0
        %v1819 = vmax.f32 %v1794, 0.0
        %v1820 = vmax.f32 %v1795, 0.0
        %v1821 = vmax.f32 %v1796, 0.0
        %v1822 = vpack.c.bf16 %v1798, %v1797
        %v1823 = vpack.c.bf16 %v1800, %v1799
        %v1824 = vpack.c.bf16 %v1802, %v1801
        %v1825 = vpack.c.bf16 %v1804, %v1803
        %v1826 = vpack.c.bf16 %v1806, %v1805
        %v1827 = vpack.c.bf16 %v1808, %v1807
        %v1828 = vpack.c.bf16 %v1810, %v1809
        %v1829 = vpack.c.bf16 %v1812, %v1811
        %v1830 = vpack.c.bf16 %v1814, %v1813
        %v1831 = vpack.c.bf16 %v1816, %v1815
        %v1832 = vpack.c.bf16 %v1818, %v1817
        %v1833 = vpack.c.bf16 %v1820, %v1819
        %v1834 = vpack.c.bf16 %v1821, %v1821
        %v1848 = vunpack.c.l.b16 %v1822
        %v1849 = vunpack.c.h.b16 %v1822
        %v1850 = vunpack.c.l.b16 %v1823
        %v1851 = vunpack.c.h.b16 %v1823
        %v1852 = vunpack.c.l.b16 %v1824
        %v1853 = vunpack.c.h.b16 %v1824
        %v1854 = vunpack.c.l.b16 %v1825
        %v1855 = vunpack.c.h.b16 %v1825
        %v1856 = vunpack.c.l.b16 %v1826
        %v1857 = vunpack.c.h.b16 %v1826
        %v1858 = vunpack.c.l.b16 %v1827
        %v1859 = vunpack.c.h.b16 %v1827
        %v1860 = vunpack.c.l.b16 %v1828
        %v1861 = vunpack.c.h.b16 %v1828
        %v1862 = vunpack.c.l.b16 %v1829
        %v1863 = vunpack.c.h.b16 %v1829
        %v1864 = vunpack.c.l.b16 %v1830
        %v1865 = vunpack.c.h.b16 %v1830
        %v1866 = vunpack.c.l.b16 %v1831
        %v1867 = vunpack.c.h.b16 %v1831
        %v1868 = vunpack.c.l.b16 %v1832
        %v1869 = vunpack.c.h.b16 %v1832
        %v1870 = vunpack.c.l.b16 %v1833
        %v1871 = vunpack.c.h.b16 %v1833
        %v1872 = vunpack.c.l.b16 %v1834
        %v1873 = vpack.c.b16 %v1848, %v1848
        %v1874 = vpack.c.b16 %v1849, %v1849
        %v1875 = vpack.c.b16 %v1850, %v1850
        %v1876 = vpack.c.b16 %v1851, %v1851
        %v1877 = vpack.c.b16 %v1852, %v1852
        %v1878 = vpack.c.b16 %v1853, %v1853
        %v1879 = vpack.c.b16 %v1854, %v1854
        %v1880 = vpack.c.b16 %v1855, %v1855
        %v1881 = vpack.c.b16 %v1856, %v1856
        %v1882 = vpack.c.b16 %v1857, %v1857
        %v1883 = vpack.c.b16 %v1858, %v1858
        %v1884 = vpack.c.b16 %v1859, %v1859
        %v1885 = vpack.c.b16 %v1860, %v1860
        %v1886 = vpack.c.b16 %v1861, %v1861
        %v1887 = vpack.c.b16 %v1862, %v1862
        %v1888 = vpack.c.b16 %v1863, %v1863
        %v1889 = vpack.c.b16 %v1864, %v1864
        %v1890 = vpack.c.b16 %v1865, %v1865
        %v1891 = vpack.c.b16 %v1866, %v1866
        %v1892 = vpack.c.b16 %v1867, %v1867
        %v1893 = vpack.c.b16 %v1868, %v1868
        %v1894 = vpack.c.b16 %v1869, %v1869
        %v1895 = vpack.c.b16 %v1870, %v1870
        %v1896 = vpack.c.b16 %v1871, %v1871
        %v1897 = vpack.c.b16 %v1872, %v1872
        %1923 = vst [vmem:[%s609] sm:$0xf] %v1873
        %1924 = vst [vmem:[%s609 + $0x4] sm:$0xf] %v1874
        %1925 = vst [vmem:[%s609 + $0x8] sm:$0xf] %v1875
        %1926 = vst [vmem:[%s609 + $0xc] sm:$0xf] %v1876
        %1927 = vst [vmem:[%s609 + $0x10] sm:$0xf] %v1877
        %1928 = vst [vmem:[%s609 + $0x14] sm:$0xf] %v1878
        %1929 = vst [vmem:[%s609 + $0x18] sm:$0xf] %v1879
        %1930 = vst [vmem:[%s609 + $0x1c] sm:$0xf] %v1880
        %1931 = vst [vmem:[%s609 + $0x20] sm:$0xf] %v1881
        %1932 = vst [vmem:[%s609 + $0x24] sm:$0xf] %v1882
        %1933 = vst [vmem:[%s609 + $0x28] sm:$0xf] %v1883
        %1934 = vst [vmem:[%s609 + $0x2c] sm:$0xf] %v1884
        %1935 = vst [vmem:[%s609 + $0x30] sm:$0xf] %v1885
        %1936 = vst [vmem:[%s609 + $0x34] sm:$0xf] %v1886
        %1937 = vst [vmem:[%s609 + $0x38] sm:$0xf] %v1887
        %1938 = vst [vmem:[%s609 + $0x3c] sm:$0xf] %v1888
        %1939 = vst [vmem:[%s609 + $0x40] sm:$0xf] %v1889
        %1940 = vst [vmem:[%s609 + $0x44] sm:$0xf] %v1890
        %1941 = vst [vmem:[%s609 + $0x48] sm:$0xf] %v1891
        %1942 = vst [vmem:[%s609 + $0x4c] sm:$0xf] %v1892
        %1943 = vst [vmem:[%s609 + $0x50] sm:$0xf] %v1893
        %1944 = vst [vmem:[%s609 + $0x54] sm:$0xf] %v1894
        %1945 = vst [vmem:[%s609 + $0x58] sm:$0xf] %v1895
        %1946 = vst [vmem:[%s609 + $0x5c] sm:$0xf] %v1896
        %1947 = vst [vmem:[%s609 + $0x60] sm:$0xf] %v1897
        %s1948 = smul.u32 25, %s14
        %p1949 = scmp.lt.s32.totalorder %s1948, 49
        %s1950 = scalar_select %p1949, %s1948, 49
        %s1951 = smul.addr %s1950, 4
        %s1952 = scalar_lea.vmem %s3, %s1951
        // Predicated region
        $region74: #{lenet_forward.3} parent=68 // pred_check
          %p1953 = pneg %p100
        $region75: #{lenet_forward.3} parent=68 // pred_check_branch
          %1955 = sbr.rel (%p1953) target = $region77
        $region76: #{lenet_forward.3} parent=68 // pred_region
          %s1956 = smul.u32 25, %s14
        $region77: #{lenet_forward.3} parent=68 // pred_fallthru
          _
      $region69: #{lenet_forward.3} parent=5 // pred_fallthru
        _
      %p1957 = scmp.le.s32.totalorder 2, %s9
      // Predicated region
      $region78: #{lenet_forward.3} parent=5 // pred_check
        %p1958 = pneg %p1957
      $region79: #{lenet_forward.3} parent=5 // pred_check_branch
        %1960 = sbr.rel (%p1958) target = $region81
      $region80: #{lenet_forward.3} parent=5 // pred_region
        %s1961 = ssub.s32 %s9, 2
        // Predicated region
        $region82: #{lenet_forward.3} parent=80 // pred_check
          %p1962 = pneg %p106
        $region83: #{lenet_forward.3} parent=80 // pred_check_branch
          %1964 = sbr.rel (%p1962) target = $region85
        $region84: #{lenet_forward.3} parent=80 // pred_region
          %s1965 = smul.u32 25, %s15
          %p1966 = scmp.lt.s32.totalorder %s1965, 49
          %s1967 = scalar_select %p1966, %s1965, 49
          %s1968 = smul.addr %s1967, 4
          %s1969 = scalar_lea.vmem %s3, %s1968
        $region85: #{lenet_forward.3} parent=80 // pred_fallthru
          _
      $region81: #{lenet_forward.3} parent=5 // pred_fallthru
        _
    $region6: #{lenet_forward.3} parent=1 // loop_footer
      %s13 = sadd.s32 1, %s9
    $region7: #{lenet_forward.3} parent=1 // loop_footer_branch
      %8 = sbr.rel target = $region3
    $region8: #{lenet_forward.3} parent=1 // loop_exit
      _

// kernel: lenet_forward.4
$region0: #{lenet_forward.4}
  #allocation0 [shape = 'u32[]', space=smem, size = 0x4, offset = 0x4, fixed_abs, tag = 'smem constant byte address 0x4 - core index']
  #allocation1 [shape = 'u32[144,128]{1,0:T(1,128)}', space=vmem, size = 0x12000, scoped, tag = 'internal scratch']
  %s0 = inlined_call_operand.vmem [shape: bf16[4,64,150], index: 0, kind: input, shape index: {}]
  %s1 = inlined_call_operand.vmem [shape: bf16[150,128], index: 1, kind: input, shape index: {}]
  %s2 = inlined_call_operand.vmem [shape: f32[1,128], index: 2, kind: input, shape index: {}]
  %s3 = inlined_call_operand.vmem [shape: bf16[64,128], index: 3, kind: output, shape index: {}]
  %s4 = sld [smem:[#allocation0]]
  $region83: #{lenet_forward.4} parent=0
    _
  %s6 = ssub.s32 1, %s4
  %s7 = scalar_select 0, %s6, %s4
  $region1: #{lenet_forward.4} parent=0
    #allocation2 [shape = 'u8[131072]{0}', space=vmem, size = 0x20000, scoped, tag = 'input window, operand 0']
    loop: start=0, step=1, limit=4
    $region2: #{lenet_forward.4} parent=1 // loop_pre_header
      _
    $region3: #{lenet_forward.4} parent=1 // loop_header
      %s9 = sphi 0, %s13
      %p10 = scmp.ge.s32.totalorder %s9, 4
      %s19 = sphi 0, %s21
      %s22 = sphi 0, %s19
      %s23 = sphi 0, %s22
      %s39 = sphi 0, %s23
      %s43 = sphi 0, %s43
      %s45 = sphi 0, %s43
      %s46 = sphi 0, %s45
      %s60 = sphi 0, %s46
      %s64 = sphi 0, %s64
      %s66 = sphi 0, %s64
      %s67 = sphi 0, %s66
      %s81 = sphi 0, %s67
      %s87 = sphi 0, %s89
      %s90 = sphi 0, %s87
      %s91 = sphi 0, %s90
      %s107 = sphi 0, %s91
    $region4: #{lenet_forward.4} parent=1 // loop_header_branch
      %12 = sbr.rel (%p10) target = $region8
    $region5: #{lenet_forward.4} parent=1 // loop_body
      %s14 = ssub.s32 %s9, 1
      %s15 = ssub.s32 %s9, 2
      %s16 = sadd.s32 %s9, 1
      %s17 = ssub.s32 %s9, %s16
      %p18 = scmp.eq.s32.totalorder %s17, 0
      %s20 = sadd.s32 %s19, 1
      %s21 = scalar_select %p18, %s19, %s20
      %p24 = pneg %p18
      %p25 = scmp.eq.s32.totalorder %s9, 1
      %p26 = por %p24, %p25
      %p27 = scmp.ne.s32.totalorder %s19, %s22
      %p28 = scmp.eq.s32.totalorder %s9, 0
      %p29 = por %p27, %p28
      %p30 = scmp.ne.s32.totalorder %s19, %s22
      %p31 = scmp.eq.s32.totalorder %s14, 1
      %p32 = por %p30, %p31
      %p33 = scmp.ne.s32.totalorder %s22, %s23
      %p34 = scmp.eq.s32.totalorder %s14, 0
      %p35 = por %p33, %p34
      %p36 = scmp.ne.s32.totalorder %s22, %s23
      %p37 = scmp.eq.s32.totalorder %s15, 1
      %p38 = por %p36, %p37
      %p40 = scmp.ne.s32.totalorder %s23, %s39
      %p41 = scmp.eq.s32.totalorder %s15, 0
      %p42 = por %p40, %p41
      %s44 = sadd.s32 %s43, 1
      %p47 = scmp.eq.s32.totalorder %s9, 1
      %p48 = scmp.ne.s32.totalorder %s43, %s45
      %p49 = scmp.eq.s32.totalorder %s9, 0
      %p50 = por %p48, %p49
      %p51 = scmp.ne.s32.totalorder %s43, %s45
      %p52 = scmp.eq.s32.totalorder %s14, 1
      %p53 = por %p51, %p52
      %p54 = scmp.ne.s32.totalorder %s45, %s46
      %p55 = scmp.eq.s32.totalorder %s14, 0
      %p56 = por %p54, %p55
      %p57 = scmp.ne.s32.totalorder %s45, %s46
      %p58 = scmp.eq.s32.totalorder %s15, 1
      %p59 = por %p57, %p58
      %p61 = scmp.ne.s32.totalorder %s46, %s60
      %p62 = scmp.eq.s32.totalorder %s15, 0
      %p63 = por %p61, %p62
      %s65 = sadd.s32 %s64, 1
      %p68 = scmp.eq.s32.totalorder %s9, 1
      %p69 = scmp.ne.s32.totalorder %s64, %s66
      %p70 = scmp.eq.s32.totalorder %s9, 0
      %p71 = por %p69, %p70
      %p72 = scmp.ne.s32.totalorder %s64, %s66
      %p73 = scmp.eq.s32.totalorder %s14, 1
      %p74 = por %p72, %p73
      %p75 = scmp.ne.s32.totalorder %s66, %s67
      %p76 = scmp.eq.s32.totalorder %s14, 0
      %p77 = por %p75, %p76
      %p78 = scmp.ne.s32.totalorder %s66, %s67
      %p79 = scmp.eq.s32.totalorder %s15, 1
      %p80 = por %p78, %p79
      %p82 = scmp.ne.s32.totalorder %s67, %s81
      %p83 = scmp.eq.s32.totalorder %s15, 0
      %p84 = por %p82, %p83
      %s85 = ssub.s32 %s9, %s16
      %p86 = scmp.eq.s32.totalorder %s85, 0
      %s88 = sadd.s32 %s87, 1
      %s89 = scalar_select %p86, %s87, %s88
      %p92 = pneg %p86
      %p93 = scmp.eq.s32.totalorder %s9, 1
      %p94 = por %p92, %p93
      %p95 = scmp.ne.s32.totalorder %s87, %s90
      %p96 = scmp.eq.s32.totalorder %s9, 0
      %p97 = por %p95, %p96
      %p98 = scmp.ne.s32.totalorder %s87, %s90
      %p99 = scmp.eq.s32.totalorder %s14, 1
      %p100 = por %p98, %p99
      %p101 = scmp.ne.s32.totalorder %s90, %s91
      %p102 = scmp.eq.s32.totalorder %s14, 0
      %p103 = por %p101, %p102
      %p104 = scmp.ne.s32.totalorder %s90, %s91
      %p105 = scmp.eq.s32.totalorder %s15, 1
      %p106 = por %p104, %p105
      %p108 = scmp.ne.s32.totalorder %s91, %s107
      %p109 = scmp.eq.s32.totalorder %s15, 0
      %p110 = por %p108, %p109
      %p111 = scmp.le.s32.totalorder 1, %s9
      %p112 = scmp.lt.s32.totalorder %s9, 3
      %p113 = pnand %p111, %p112
      %p114 = pneg %p113
      // Predicated region
      $region9: #{lenet_forward.4} parent=5 // pred_check
        _
      $region10: #{lenet_forward.4} parent=5 // pred_check_branch
        %116 = sbr.rel (%p113) target = $region12
      $region11: #{lenet_forward.4} parent=5 // pred_region
        %s117 = ssub.s32 %s9, 1
        // Predicated region
        $region13: #{lenet_forward.4} parent=11 // pred_check
          %p118 = pneg %p56
        $region14: #{lenet_forward.4} parent=11 // pred_check_branch
          %120 = sbr.rel (%p118) target = $region16
        $region15: #{lenet_forward.4} parent=11 // pred_region
          _
        $region16: #{lenet_forward.4} parent=11 // pred_fallthru
          _
        // Predicated region
        $region17: #{lenet_forward.4} parent=11 // pred_check
          %p121 = pneg %p77
        $region18: #{lenet_forward.4} parent=11 // pred_check_branch
          %123 = sbr.rel (%p121) target = $region20
        $region19: #{lenet_forward.4} parent=11 // pred_region
          _
        $region20: #{lenet_forward.4} parent=11 // pred_fallthru
          _
      $region12: #{lenet_forward.4} parent=5 // pred_fallthru
        _
      %p124 = scmp.lt.s32.totalorder %s9, 2
      // Predicated region
      $region21: #{lenet_forward.4} parent=5 // pred_check
        %p125 = pneg %p124
      $region22: #{lenet_forward.4} parent=5 // pred_check_branch
        %127 = sbr.rel (%p125) target = $region24
      $region23: #{lenet_forward.4} parent=5 // pred_region
        // Predicated region
        $region25: #{lenet_forward.4} parent=23 // pred_check
          %p128 = pneg %p29
        $region26: #{lenet_forward.4} parent=23 // pred_check_branch
          %130 = sbr.rel (%p128) target = $region28
        $region27: #{lenet_forward.4} parent=23 // pred_region
          %s131 = sand.u32 %s19, 1
          %s132 = sand.u32 %s19, 1
          %s133 = smul.addr %s132, 128
          %s134 = scalar_lea.vmem [#allocation2], %s133
          %s135 = smul.u32 4, %s9
          %s136 = smul.addr %s135, 2
          %s137 = smul.addr %s136, 4
          %s138 = scalar_lea.vmem %s0, %s137
          // Predicated region
          $region29: #{lenet_forward.4} parent=27 // pred_check
            _
          $region30: #{lenet_forward.4} parent=27 // pred_check_branch
            %140 = sbr.rel (0) target = $region32
          $region31: #{lenet_forward.4} parent=27 // pred_region
            // Predicated region
            $region33: #{lenet_forward.4} parent=31 // pred_check
              _
            $region34: #{lenet_forward.4} parent=31 // pred_check_branch
              %142 = sbr.rel (0) target = $region36
            $region35: #{lenet_forward.4} parent=31 // pred_region
              // Predicated region
              $region48: #{lenet_forward.4} parent=35 // pred_check
                _
              $region49: #{lenet_forward.4} parent=35 // pred_check_branch
                %187 = sbr.rel (0) target = $region51
              $region50: #{lenet_forward.4} parent=35 // pred_region
                loop: start=0, step=1, limit=1
                $region52: #{lenet_forward.4} parent=50 // loop_pre_header
                  _
                $region53: #{lenet_forward.4} parent=50 // loop_header
                  %s189 = sphi 0, %s193
                  %p190 = scmp.ge.s32.totalorder %s189, 1
                  %s194 = sphi %s138, %s138
                  %s195 = sphi %s134, %s134
                $region54: #{lenet_forward.4} parent=50 // loop_header_branch
                  %192 = sbr.rel (%p190) target = $region58
                $region55: #{lenet_forward.4} parent=50 // loop_body
                  %v196 = vld [vmem:[%s194] sm:$0xff]
                  %197 = vst [vmem:[%s195] sm:$0xff] %v196
                  %v198 = vld [vmem:[%s194 + $0x8] sm:$0xff]
                  %199 = vst [vmem:[%s195 + $0x8] sm:$0xff] %v198
                  %v200 = vld [vmem:[%s194 + $0x10] sm:$0xff]
                  %201 = vst [vmem:[%s195 + $0x10] sm:$0xff] %v200
                  %v202 = vld [vmem:[%s194 + $0x18] sm:$0xff]
                  %203 = vst [vmem:[%s195 + $0x18] sm:$0xff] %v202
                  %v204 = vld [vmem:[%s194 + $0x40] sm:$0xff]
                  %205 = vst [vmem:[%s195 + $0x20] sm:$0xff] %v204
                  %v206 = vld [vmem:[%s194 + $0x48] sm:$0xff]
                  %207 = vst [vmem:[%s195 + $0x28] sm:$0xff] %v206
                  %v208 = vld [vmem:[%s194 + $0x50] sm:$0xff]
                  %209 = vst [vmem:[%s195 + $0x30] sm:$0xff] %v208
                  %v210 = vld [vmem:[%s194 + $0x58] sm:$0xff]
                  %211 = vst [vmem:[%s195 + $0x38] sm:$0xff] %v210
                  %v212 = vld [vmem:[%s194 + $0x80] sm:$0xff]
                  %213 = vst [vmem:[%s195 + $0x40] sm:$0xff] %v212
                  %v214 = vld [vmem:[%s194 + $0x88] sm:$0xff]
                  %215 = vst [vmem:[%s195 + $0x48] sm:$0xff] %v214
                  %v216 = vld [vmem:[%s194 + $0x90] sm:$0xff]
                  %217 = vst [vmem:[%s195 + $0x50] sm:$0xff] %v216
                  %v218 = vld [vmem:[%s194 + $0x98] sm:$0xff]
                  %219 = vst [vmem:[%s195 + $0x58] sm:$0xff] %v218
                  %v220 = vld [vmem:[%s194 + $0xc0] sm:$0xff]
                  %221 = vst [vmem:[%s195 + $0x60] sm:$0xff] %v220
                  %v222 = vld [vmem:[%s194 + $0xc8] sm:$0xff]
                  %223 = vst [vmem:[%s195 + $0x68] sm:$0xff] %v222
                  %v224 = vld [vmem:[%s194 + $0xd0] sm:$0xff]
                  %225 = vst [vmem:[%s195 + $0x70] sm:$0xff] %v224
                  %v226 = vld [vmem:[%s194 + $0xd8] sm:$0xff]
                  %227 = vst [vmem:[%s195 + $0x78] sm:$0xff] %v226
                $region56: #{lenet_forward.4} parent=50 // loop_footer
                  %s193 = sadd.s32 1, %s189
                $region57: #{lenet_forward.4} parent=50 // loop_footer_branch
                  %188 = sbr.rel target = $region53
                $region58: #{lenet_forward.4} parent=50 // loop_exit
                  _
              $region51: #{lenet_forward.4} parent=35 // pred_fallthru
                _
              // Predicated region
              $region59: #{lenet_forward.4} parent=35 // pred_check
                _
              $region60: #{lenet_forward.4} parent=35 // pred_check_branch
                %229 = sbr.rel target = $region62
              $region61: #{lenet_forward.4} parent=35 // pred_region
                _
              $region62: #{lenet_forward.4} parent=35 // pred_fallthru
                _
            $region36: #{lenet_forward.4} parent=31 // pred_fallthru
              _
            // Predicated region
            $region37: #{lenet_forward.4} parent=31 // pred_check
              _
            $region38: #{lenet_forward.4} parent=31 // pred_check_branch
              %144 = sbr.rel target = $region40
            $region39: #{lenet_forward.4} parent=31 // pred_region
              loop: start=0, step=1, limit=1
              $region41: #{lenet_forward.4} parent=39 // loop_pre_header
                _
              $region42: #{lenet_forward.4} parent=39 // loop_header
                %s147 = sphi 0, %s151
                %p148 = scmp.ge.s32.totalorder %s147, 1
                %s152 = sphi %s138, %s138
                %s153 = sphi %s134, %s134
              $region43: #{lenet_forward.4} parent=39 // loop_header_branch
                %150 = sbr.rel (%p148) target = $region47
              $region44: #{lenet_forward.4} parent=39 // loop_body
                %v154 = vld [vmem:[%s152] sm:$0xff]
                %155 = vst [vmem:[%s153] sm:$0xff] %v154
                %v156 = vld [vmem:[%s152 + $0x8] sm:$0xff]
                %157 = vst [vmem:[%s153 + $0x8] sm:$0xff] %v156
                %v158 = vld [vmem:[%s152 + $0x10] sm:$0xff]
                %159 = vst [vmem:[%s153 + $0x10] sm:$0xff] %v158
                %v160 = vld [vmem:[%s152 + $0x18] sm:$0xff]
                %161 = vst [vmem:[%s153 + $0x18] sm:$0xff] %v160
                %v162 = vld [vmem:[%s152 + $0x40] sm:$0xff]
                %163 = vst [vmem:[%s153 + $0x20] sm:$0xff] %v162
                %v164 = vld [vmem:[%s152 + $0x48] sm:$0xff]
                %165 = vst [vmem:[%s153 + $0x28] sm:$0xff] %v164
                %v166 = vld [vmem:[%s152 + $0x50] sm:$0xff]
                %167 = vst [vmem:[%s153 + $0x30] sm:$0xff] %v166
                %v168 = vld [vmem:[%s152 + $0x58] sm:$0xff]
                %169 = vst [vmem:[%s153 + $0x38] sm:$0xff] %v168
                %v170 = vld [vmem:[%s152 + $0x80] sm:$0xff]
                %171 = vst [vmem:[%s153 + $0x40] sm:$0xff] %v170
                %v172 = vld [vmem:[%s152 + $0x88] sm:$0xff]
                %173 = vst [vmem:[%s153 + $0x48] sm:$0xff] %v172
                %v174 = vld [vmem:[%s152 + $0x90] sm:$0xff]
                %175 = vst [vmem:[%s153 + $0x50] sm:$0xff] %v174
                %v176 = vld [vmem:[%s152 + $0x98] sm:$0xff]
                %177 = vst [vmem:[%s153 + $0x58] sm:$0xff] %v176
                %v178 = vld [vmem:[%s152 + $0xc0] sm:$0xff]
                %179 = vst [vmem:[%s153 + $0x60] sm:$0xff] %v178
                %v180 = vld [vmem:[%s152 + $0xc8] sm:$0xff]
                %181 = vst [vmem:[%s153 + $0x68] sm:$0xff] %v180
                %v182 = vld [vmem:[%s152 + $0xd0] sm:$0xff]
                %183 = vst [vmem:[%s153 + $0x70] sm:$0xff] %v182
                %v184 = vld [vmem:[%s152 + $0xd8] sm:$0xff]
                %185 = vst [vmem:[%s153 + $0x78] sm:$0xff] %v184
              $region45: #{lenet_forward.4} parent=39 // loop_footer
                %s151 = sadd.s32 1, %s147
              $region46: #{lenet_forward.4} parent=39 // loop_footer_branch
                %146 = sbr.rel target = $region42
              $region47: #{lenet_forward.4} parent=39 // loop_exit
                _
            $region40: #{lenet_forward.4} parent=31 // pred_fallthru
              _
          $region32: #{lenet_forward.4} parent=27 // pred_fallthru
            _
          %230 = vnop
        $region28: #{lenet_forward.4} parent=23 // pred_fallthru
          _
      $region24: #{lenet_forward.4} parent=5 // pred_fallthru
        _
      %p231 = scmp.le.s32.totalorder 1, %s9
      %p232 = scmp.lt.s32.totalorder %s9, 3
      %p233 = pnand %p231, %p232
      %p234 = pneg %p233
      // Predicated region
      $region63: #{lenet_forward.4} parent=5 // pred_check
        _
      $region64: #{lenet_forward.4} parent=5 // pred_check_branch
        %236 = sbr.rel (%p233) target = $region66
      $region65: #{lenet_forward.4} parent=5 // pred_region
        %s237 = ssub.s32 %s9, 1
        %s238 = sand.u32 %s22, 1
        %s239 = sand.u32 %s22, 1
        %s240 = smul.addr %s239, 128
        %s241 = scalar_lea.vmem [#allocation2], %s240
        // Predicated region
        $region67: #{lenet_forward.4} parent=65 // pred_check
          %p242 = pneg %p35
        $region68: #{lenet_forward.4} parent=65 // pred_check_branch
          %244 = sbr.rel (%p242) target = $region70
        $region69: #{lenet_forward.4} parent=65 // pred_region
          _
        $region70: #{lenet_forward.4} parent=65 // pred_fallthru
          _
        %s245 = sand.u32 %s22, 1
        %s246 = sand.u32 %s22, 1
        %s247 = smul.addr %s246, 128
        %s248 = scalar_lea.vmem [#allocation2], %s247
        %p249 = pneg %p35
        %p250 = pneg %p32
        %p251 = pneg %p56
        %p252 = pneg %p53
        %p253 = pneg %p77
        %p254 = pneg %p74
        %p255 = pneg %p103
        %p256 = pneg %p100
        %s257 = smul.u32 4, %s14
        %p258 = scmp.lt.s32.totalorder %s257, 7
        %s259 = scalar_select %p258, %s257, 7
        %s260 = smul.addr %s259, 4
        %s261 = scalar_lea.vmem %s3, %s260
        %s262 = smul.u32 4, %s14
        %s263 = smul.u32 4, %s14
        %p264 = scmp.lt.s32.totalorder %s263, 7
        %s265 = scalar_select %p264, %s263, 7
        %s266 = smul.addr %s265, 4
        %s267 = scalar_lea.vmem %s3, %s266
        %s268 = smul.u32 4, %s14
        %v270 = vld [vmem:[%s1] sm:$0xf]
        %v271 = vld [vmem:[%s1 + $0x4] sm:$0xf]
        %v272 = vld [vmem:[%s1 + $0x8] sm:$0xf]
        %v273 = vld [vmem:[%s1 + $0xc] sm:$0xf]
        %v274 = vld [vmem:[%s1 + $0x10] sm:$0xf]
        %v275 = vld [vmem:[%s1 + $0x14] sm:$0xf]
        %v276 = vld [vmem:[%s1 + $0x18] sm:$0xf]
        %v277 = vld [vmem:[%s1 + $0x1c] sm:$0xf]
        %v278 = vld [vmem:[%s1 + $0x20] sm:$0xf]
        %v279 = vld [vmem:[%s1 + $0x24] sm:$0xf]
        %v280 = vld [vmem:[%s1 + $0x28] sm:$0xf]
        %v281 = vld [vmem:[%s1 + $0x2c] sm:$0xf]
        %v282 = vld [vmem:[%s1 + $0x30] sm:$0xf]
        %v283 = vld [vmem:[%s1 + $0x34] sm:$0xf]
        %v284 = vld [vmem:[%s1 + $0x38] sm:$0xf]
        %v285 = vld [vmem:[%s1 + $0x3c] sm:$0xf]
        %v286 = vld [vmem:[%s1 + $0x40] sm:$0xf]
        %v287 = vld [vmem:[%s1 + $0x44] sm:$0xf]
        %v288 = vld [vmem:[%s1 + $0x48] sm:$0x7]
        %v289 = vld [vmem:[%s241] sm:$0xff]
        %v290 = vld [vmem:[%s241 + $0x8] sm:$0xff]
        %v291 = vld [vmem:[%s241 + $0x10] sm:$0xff]
        %v292 = vld [vmem:[%s241 + $0x18] sm:$0xff]
        %v297 = vunpack.c.l.b16 %v289
        %v298 = vunpack.c.h.b16 %v289
        %v299 = vunpack.c.l.b16 %v290
        %v300 = vunpack.c.h.b16 %v290
        %v301 = vunpack.c.l.b16 %v291
        %v302 = vunpack.c.h.b16 %v291
        %v303 = vunpack.c.l.b16 %v292
        %v304 = vunpack.c.h.b16 %v292
        %v305 = vpack.c.b16 %v299, %v297
        %v306 = vpack.c.b16 %v300, %v298
        %v307 = vpack.c.b16 %v303, %v301
        %v308 = vpack.c.b16 %v304, %v302
        %v330 = vunpack.c.l.b16 %v270
        %v331 = vunpack.c.l.b16 %v271
        %v332 = vunpack.c.l.b16 %v272
        %v333 = vunpack.c.l.b16 %v273
        %v334 = vunpack.c.l.b16 %v274
        %v335 = vunpack.c.l.b16 %v275
        %v336 = vunpack.c.l.b16 %v276
        %v337 = vunpack.c.l.b16 %v277
        %v338 = vunpack.c.l.b16 %v278
        %v339 = vunpack.c.l.b16 %v279
        %v340 = vunpack.c.l.b16 %v280
        %v341 = vunpack.c.l.b16 %v281
        %v342 = vunpack.c.l.b16 %v282
        %v343 = vunpack.c.l.b16 %v283
        %v344 = vunpack.c.l.b16 %v284
        %v345 = vunpack.c.l.b16 %v285
        %v346 = vunpack.c.l.b16 %v286
        %v347 = vunpack.c.l.b16 %v287
        %v348 = vunpack.c.l.b16 %v288
        %v349 = vpack.c.b16 %v331, %v330
        %v350 = vpack.c.b16 %v333, %v332
        %v351 = vpack.c.b16 %v335, %v334
        %v352 = vpack.c.b16 %v337, %v336
        %v353 = vpack.c.b16 %v339, %v338
        %v354 = vpack.c.b16 %v341, %v340
        %v355 = vpack.c.b16 %v343, %v342
        %v356 = vpack.c.b16 %v345, %v344
        %v357 = vpack.c.b16 %v347, %v346
        %v358 = vpack.c.b16 %v348, %v348
        %vm368 = vcmask 179200
        %v370 = vsel %vm368, %v306, 0
        %v373 = vsel %vm368, %v308, 0
        %vm375 = vcmask 1042432
        %v377 = vsel %vm375, %v358, 0
        %379 = vmatprep.subr.bf16.mxu0 0
        %380 = vmatpush1.bf16.msra.mxu0 %v349
        %381 = vmatprep.subr.bf16.mxu0 0
        %382 = vmatpush1.bf16.msra.mxu0 %v350
        %383 = vmatprep.subr.bf16.mxu0 0
        %384 = vmatpush1.bf16.msra.mxu0 %v351
        %385 = vmatprep.subr.bf16.mxu0 0
        %386 = vmatpush1.bf16.msra.mxu0 %v352
        %387 = vmatprep.subr.bf16.mxu0 0
        %388 = vmatpush1.bf16.msra.mxu0 %v353
        %389 = vmatprep.subr.bf16.mxu0 0
        %390 = vmatpush1.bf16.msra.mxu0 %v354
        %391 = vmatprep.subr.bf16.mxu0 0
        %392 = vmatpush1.bf16.msra.mxu0 %v355
        %393 = vmatprep.subr.bf16.mxu0 0
        %394 = vmatpush1.bf16.msra.mxu0 %v356
        %395 = vmatprep.subr.bf16.mxu0 0
        %396 = vmatpush1.bf16.msra.mxu0 %v357
        %397 = vmatprep.subr.bf16.mxu0 0
        %398 = vmatpush1.bf16.msra.mxu0 %v377
        %399 = vmatprep.subr.bf16.mxu0 0
        %400 = vmatpush1.bf16.msra.mxu0 0
        %401 = vmatprep.subr.bf16.mxu0 0
        %402 = vmatpush1.bf16.msra.mxu0 0
        %403 = vmatprep.subr.bf16.mxu0 0
        %404 = vmatpush1.bf16.msra.mxu0 0
        %405 = vmatprep.subr.bf16.mxu0 0
        %406 = vmatpush1.bf16.msra.mxu0 0
        %407 = vmatprep.subr.bf16.mxu0 0
        %408 = vmatpush1.bf16.msra.mxu0 0
        %409 = vmatprep.subr.bf16.mxu0 0
        %410 = vmatpush1.bf16.msra.mxu0 0
        %411 = vmatprep.mubr.bf16.mxu0 %v370
        %412 = vmatmul.mubr.bf16.gmra.mrb[0].mxu0 %v305
        %v413 = vpop.f32.mrb[0].mxu0
        %v414 = vadd.f32 0.0, %v413
        %v415 = vpop.f32.mrb[0].mxu0
        %v416 = vpop.f32.mrb[0].mxu0
        %v417 = vadd.f32 0.0, %v416
        %v418 = vpop.f32.mrb[0].mxu0
        %419 = vmatprep.mubr.bf16.mxu0 %v373
        %420 = vmatmul.mubr.bf16.gmra.mrb[0].mxu0 %v307
        %v421 = vpop.f32.mrb[0].mxu0
        %v422 = vadd.f32 0.0, %v421
        %v423 = vpop.f32.mrb[0].mxu0
        %v424 = vpop.f32.mrb[0].mxu0
        %v425 = vadd.f32 0.0, %v424
        %v426 = vpop.f32.mrb[0].mxu0
        %427 = vdwg.mxu0
        %s428 = scalar_lea.vmem %s241, 32 [#allocation2]
        %v429 = vld [vmem:[%s428] sm:$0xff]
        %v430 = vld [vmem:[%s428 + $0x8] sm:$0xff]
        %v431 = vld [vmem:[%s428 + $0x10] sm:$0xff]
        %v432 = vld [vmem:[%s428 + $0x18] sm:$0xff]
        %v437 = vunpack.c.l.b16 %v429
        %v438 = vunpack.c.h.b16 %v429
        %v439 = vunpack.c.l.b16 %v430
        %v440 = vunpack.c.h.b16 %v430
        %v441 = vunpack.c.l.b16 %v431
        %v442 = vunpack.c.h.b16 %v431
        %v443 = vunpack.c.l.b16 %v432
        %v444 = vunpack.c.h.b16 %v432
        %v445 = vpack.c.b16 %v439, %v437
        %v446 = vpack.c.b16 %v440, %v438
        %v447 = vpack.c.b16 %v443, %v441
        %v448 = vpack.c.b16 %v444, %v442
        %v452 = vsel %vm368, %v446, 0
        %v455 = vsel %vm368, %v448, 0
        %457 = vmatprep.subr.bf16.mxu0 0
        %458 = vmatpush1.bf16.msra.mxu0 %v349
        %459 = vmatprep.subr.bf16.mxu0 0
        %460 = vmatpush1.bf16.msra.mxu0 %v350
        %461 = vmatprep.subr.bf16.mxu0 0
        %462 = vmatpush1.bf16.msra.mxu0 %v351
        %463 = vmatprep.subr.bf16.mxu0 0
        %464 = vmatpush1.bf16.msra.mxu0 %v352
        %465 = vmatprep.subr.bf16.mxu0 0
        %466 = vmatpush1.bf16.msra.mxu0 %v353
        %467 = vmatprep.subr.bf16.mxu0 0
        %468 = vmatpush1.bf16.msra.mxu0 %v354
        %469 = vmatprep.subr.bf16.mxu0 0
        %470 = vmatpush1.bf16.msra.mxu0 %v355
        %471 = vmatprep.subr.bf16.mxu0 0
        %472 = vmatpush1.bf16.msra.mxu0 %v356
        %473 = vmatprep.subr.bf16.mxu0 0
        %474 = vmatpush1.bf16.msra.mxu0 %v357
        %475 = vmatprep.subr.bf16.mxu0 0
        %476 = vmatpush1.bf16.msra.mxu0 %v377
        %477 = vmatprep.subr.bf16.mxu0 0
        %478 = vmatpush1.bf16.msra.mxu0 0
        %479 = vmatprep.subr.bf16.mxu0 0
        %480 = vmatpush1.bf16.msra.mxu0 0
        %481 = vmatprep.subr.bf16.mxu0 0
        %482 = vmatpush1.bf16.msra.mxu0 0
        %483 = vmatprep.subr.bf16.mxu0 0
        %484 = vmatpush1.bf16.msra.mxu0 0
        %485 = vmatprep.subr.bf16.mxu0 0
        %486 = vmatpush1.bf16.msra.mxu0 0
        %487 = vmatprep.subr.bf16.mxu0 0
        %488 = vmatpush1.bf16.msra.mxu0 0
        %489 = vmatprep.mubr.bf16.mxu0 %v452
        %490 = vmatmul.mubr.bf16.gmra.mrb[0].mxu0 %v445
        %v491 = vpop.f32.mrb[0].mxu0
        %v492 = vadd.f32 0.0, %v491
        %v493 = vpop.f32.mrb[0].mxu0
        %v494 = vpop.f32.mrb[0].mxu0
        %v495 = vadd.f32 0.0, %v494
        %v496 = vpop.f32.mrb[0].mxu0
        %497 = vmatprep.mubr.bf16.mxu0 %v455
        %498 = vmatmul.mubr.bf16.gmra.mrb[0].mxu0 %v447
        %v499 = vpop.f32.mrb[0].mxu0
        %v500 = vadd.f32 0.0, %v499
        %v501 = vpop.f32.mrb[0].mxu0
        %v502 = vpop.f32.mrb[0].mxu0
        %v503 = vadd.f32 0.0, %v502
        %v504 = vpop.f32.mrb[0].mxu0
        %505 = vdwg.mxu0
        %v506 = vmax.f32 %v414, %v492
        %v507 = vmax.f32 %v417, %v495
        %v508 = vmax.f32 %v422, %v500
        %v509 = vmax.f32 %v425, %v503
        %s510 = scalar_lea.vmem %s241, 64 [#allocation2]
        %v511 = vld [vmem:[%s510] sm:$0xff]
        %v512 = vld [vmem:[%s510 + $0x8] sm:$0xff]
        %v513 = vld [vmem:[%s510 + $0x10] sm:$0xff]
        %v514 = vld [vmem:[%s510 + $0x18] sm:$0xff]
        %v519 = vunpack.c.l.b16 %v511
        %v520 = vunpack.c.h.b16 %v511
        %v521 = vunpack.c.l.b16 %v512
        %v522 = vunpack.c.h.b16 %v512
        %v523 = vunpack.c.l.b16 %v513
        %v524 = vunpack.c.h.b16 %v513
        %v525 = vunpack.c.l.b16 %v514
        %v526 = vunpack.c.h.b16 %v514
        %v527 = vpack.c.b16 %v521, %v519
        %v528 = vpack.c.b16 %v522, %v520
        %v529 = vpack.c.b16 %v525, %v523
        %v530 = vpack.c.b16 %v526, %v524
        %v534 = vsel %vm368, %v528, 0
        %v537 = vsel %vm368, %v530, 0
        %539 = vmatprep.subr.bf16.mxu0 0
        %540 = vmatpush1.bf16.msra.mxu0 %v349
        %541 = vmatprep.subr.bf16.mxu0 0
        %542 = vmatpush1.bf16.msra.mxu0 %v350
        %543 = vmatprep.subr.bf16.mxu0 0
        %544 = vmatpush1.bf16.msra.mxu0 %v351
        %545 = vmatprep.subr.bf16.mxu0 0
        %546 = vmatpush1.bf16.msra.mxu0 %v352
        %547 = vmatprep.subr.bf16.mxu0 0
        %548 = vmatpush1.bf16.msra.mxu0 %v353
        %549 = vmatprep.subr.bf16.mxu0 0
        %550 = vmatpush1.bf16.msra.mxu0 %v354
        %551 = vmatprep.subr.bf16.mxu0 0
        %552 = vmatpush1.bf16.msra.mxu0 %v355
        %553 = vmatprep.subr.bf16.mxu0 0
        %554 = vmatpush1.bf16.msra.mxu0 %v356
        %555 = vmatprep.subr.bf16.mxu0 0
        %556 = vmatpush1.bf16.msra.mxu0 %v357
        %557 = vmatprep.subr.bf16.mxu0 0
        %558 = vmatpush1.bf16.msra.mxu0 %v377
        %559 = vmatprep.subr.bf16.mxu0 0
        %560 = vmatpush1.bf16.msra.mxu0 0
        %561 = vmatprep.subr.bf16.mxu0 0
        %562 = vmatpush1.bf16.msra.mxu0 0
        %563 = vmatprep.subr.bf16.mxu0 0
        %564 = vmatpush1.bf16.msra.mxu0 0
        %565 = vmatprep.subr.bf16.mxu0 0
        %566 = vmatpush1.bf16.msra.mxu0 0
        %567 = vmatprep.subr.bf16.mxu0 0
        %568 = vmatpush1.bf16.msra.mxu0 0
        %569 = vmatprep.subr.bf16.mxu0 0
        %570 = vmatpush1.bf16.msra.mxu0 0
        %571 = vmatprep.mubr.bf16.mxu0 %v534
        %572 = vmatmul.mubr.bf16.gmra.mrb[0].mxu0 %v527
        %v573 = vpop.f32.mrb[0].mxu0
        %v574 = vadd.f32 0.0, %v573
        %v575 = vpop.f32.mrb[0].mxu0
        %v576 = vpop.f32.mrb[0].mxu0
        %v577 = vadd.f32 0.0, %v576
        %v578 = vpop.f32.mrb[0].mxu0
        %579 = vmatprep.mubr.bf16.mxu0 %v537
        %580 = vmatmul.mubr.bf16.gmra.mrb[0].mxu0 %v529
        %v581 = vpop.f32.mrb[0].mxu0
        %v582 = vadd.f32 0.0, %v581
        %v583 = vpop.f32.mrb[0].mxu0
        %v584 = vpop.f32.mrb[0].mxu0
        %v585 = vadd.f32 0.0, %v584
        %v586 = vpop.f32.mrb[0].mxu0
        %587 = vdwg.mxu0
        %v588 = vmax.f32 %v506, %v574
        %v589 = vmax.f32 %v507, %v577
        %v590 = vmax.f32 %v508, %v582
        %v591 = vmax.f32 %v509, %v585
        %s592 = scalar_lea.vmem %s241, 96 [#allocation2]
        %v593 = vld [vmem:[%s592] sm:$0xff]
        %v594 = vld [vmem:[%s592 + $0x8] sm:$0xff]
        %v595 = vld [vmem:[%s592 + $0x10] sm:$0xff]
        %v596 = vld [vmem:[%s592 + $0x18] sm:$0xff]
        %v601 = vunpack.c.l.b16 %v593
        %v602 = vunpack.c.h.b16 %v593
        %v603 = vunpack.c.l.b16 %v594
        %v604 = vunpack.c.h.b16 %v594
        %v605 = vunpack.c.l.b16 %v595
        %v606 = vunpack.c.h.b16 %v595
        %v607 = vunpack.c.l.b16 %v596
        %v608 = vunpack.c.h.b16 %v596
        %v609 = vpack.c.b16 %v603, %v601
        %v610 = vpack.c.b16 %v604, %v602
        %v611 = vpack.c.b16 %v607, %v605
        %v612 = vpack.c.b16 %v608, %v606
        %v616 = vsel %vm368, %v610, 0
        %v619 = vsel %vm368, %v612, 0
        %621 = vmatprep.subr.bf16.mxu0 0
        %622 = vmatpush1.bf16.msra.mxu0 %v349
        %623 = vmatprep.subr.bf16.mxu0 0
        %624 = vmatpush1.bf16.msra.mxu0 %v350
        %625 = vmatprep.subr.bf16.mxu0 0
        %626 = vmatpush1.bf16.msra.mxu0 %v351
        %627 = vmatprep.subr.bf16.mxu0 0
        %628 = vmatpush1.bf16.msra.mxu0 %v352
        %629 = vmatprep.subr.bf16.mxu0 0
        %630 = vmatpush1.bf16.msra.mxu0 %v353
        %631 = vmatprep.subr.bf16.mxu0 0
        %632 = vmatpush1.bf16.msra.mxu0 %v354
        %633 = vmatprep.subr.bf16.mxu0 0
        %634 = vmatpush1.bf16.msra.mxu0 %v355
        %635 = vmatprep.subr.bf16.mxu0 0
        %636 = vmatpush1.bf16.msra.mxu0 %v356
        %637 = vmatprep.subr.bf16.mxu0 0
        %638 = vmatpush1.bf16.msra.mxu0 %v357
        %639 = vmatprep.subr.bf16.mxu0 0
        %640 = vmatpush1.bf16.msra.mxu0 %v377
        %641 = vmatprep.subr.bf16.mxu0 0
        %642 = vmatpush1.bf16.msra.mxu0 0
        %643 = vmatprep.subr.bf16.mxu0 0
        %644 = vmatpush1.bf16.msra.mxu0 0
        %645 = vmatprep.subr.bf16.mxu0 0
        %646 = vmatpush1.bf16.msra.mxu0 0
        %647 = vmatprep.subr.bf16.mxu0 0
        %648 = vmatpush1.bf16.msra.mxu0 0
        %649 = vmatprep.subr.bf16.mxu0 0
        %650 = vmatpush1.bf16.msra.mxu0 0
        %651 = vmatprep.subr.bf16.mxu0 0
        %652 = vmatpush1.bf16.msra.mxu0 0
        %653 = vmatprep.mubr.bf16.mxu0 %v616
        %654 = vmatmul.mubr.bf16.gmra.mrb[0].mxu0 %v609
        %v655 = vpop.f32.mrb[0].mxu0
        %v656 = vadd.f32 0.0, %v655
        %v657 = vpop.f32.mrb[0].mxu0
        %v658 = vpop.f32.mrb[0].mxu0
        %v659 = vadd.f32 0.0, %v658
        %v660 = vpop.f32.mrb[0].mxu0
        %661 = vmatprep.mubr.bf16.mxu0 %v619
        %662 = vmatmul.mubr.bf16.gmra.mrb[0].mxu0 %v611
        %v663 = vpop.f32.mrb[0].mxu0
        %v664 = vadd.f32 0.0, %v663
        %v665 = vpop.f32.mrb[0].mxu0
        %v666 = vpop.f32.mrb[0].mxu0
        %v667 = vadd.f32 0.0, %v666
        %v668 = vpop.f32.mrb[0].mxu0
        %669 = vdwg.mxu0
        %v670 = vmax.f32 %v588, %v656
        %v671 = vmax.f32 %v589, %v659
        %v672 = vmax.f32 %v590, %v664
        %v673 = vmax.f32 %v591, %v667
        %v674 = vld [vmem:[%s2] sm:$0x1]
        %v676 = vlaneseq
        %v677 = vshrl.u32 %v676, 7
        %v678 = vsub.s32 0, %v677
        %v679 = vrot.slane %v674, %v678
        %v681 = vadd.f32 %v670, %v679
        %v682 = vadd.f32 %v671, %v679
        %v683 = vadd.f32 %v672, %v679
        %v684 = vadd.f32 %v673, %v679
        %v685 = vmax.f32 %v681, 0.0
        %v686 = vmax.f32 %v682, 0.0
        %v687 = vmax.f32 %v683, 0.0
        %v688 = vmax.f32 %v684, 0.0
        %v689 = vpack.c.bf16 %v686, %v685
        %v690 = vpack.c.bf16 %v688, %v687
        %v693 = vunpack.c.l.b16 %v689
        %v694 = vunpack.c.h.b16 %v689
        %v695 = vunpack.c.l.b16 %v690
        %v696 = vunpack.c.h.b16 %v690
        %v697 = vpack.c.b16 %v693, %v693
        %v698 = vpack.c.b16 %v694, %v694
        %v699 = vpack.c.b16 %v695, %v695
        %v700 = vpack.c.b16 %v696, %v696
        %705 = vst [vmem:[%s267] sm:$0xf] %v697
        %706 = vst [vmem:[%s267 + $0x4] sm:$0xf] %v698
        %707 = vst [vmem:[%s267 + $0x8] sm:$0xf] %v699
        %708 = vst [vmem:[%s267 + $0xc] sm:$0xf] %v700
        %s709 = smul.u32 4, %s14
        %p710 = scmp.lt.s32.totalorder %s709, 7
        %s711 = scalar_select %p710, %s709, 7
        %s712 = smul.addr %s711, 4
        %s713 = scalar_lea.vmem %s3, %s712
        // Predicated region
        $region71: #{lenet_forward.4} parent=65 // pred_check
          %p714 = pneg %p100
        $region72: #{lenet_forward.4} parent=65 // pred_check_branch
          %716 = sbr.rel (%p714) target = $region74
        $region73: #{lenet_forward.4} parent=65 // pred_region
          %s717 = smul.u32 4, %s14
        $region74: #{lenet_forward.4} parent=65 // pred_fallthru
          _
      $region66: #{lenet_forward.4} parent=5 // pred_fallthru
        _
      %p718 = scmp.le.s32.totalorder 2, %s9
      // Predicated region
      $region75: #{lenet_forward.4} parent=5 // pred_check
        %p719 = pneg %p718
      $region76: #{lenet_forward.4} parent=5 // pred_check_branch
        %721 = sbr.rel (%p719) target = $region78
      $region77: #{lenet_forward.4} parent=5 // pred_region
        %s722 = ssub.s32 %s9, 2
        // Predicated region
        $region79: #{lenet_forward.4} parent=77 // pred_check
          %p723 = pneg %p106
        $region80: #{lenet_forward.4} parent=77 // pred_check_branch
          %725 = sbr.rel (%p723) target = $region82
        $region81: #{lenet_forward.4} parent=77 // pred_region
          %s726 = smul.u32 4, %s15
          %p727 = scmp.lt.s32.totalorder %s726, 7
          %s728 = scalar_select %p727, %s726, 7
          %s729 = smul.addr %s728, 4
          %s730 = scalar_lea.vmem %s3, %s729
        $region82: #{lenet_forward.4} parent=77 // pred_fallthru
          _
      $region78: #{lenet_forward.4} parent=5 // pred_fallthru
        _
    $region6: #{lenet_forward.4} parent=1 // loop_footer
      %s13 = sadd.s32 1, %s9
    $region7: #{lenet_forward.4} parent=1 // loop_footer_branch
      %8 = sbr.rel target = $region3
    $region8: #{lenet_forward.4} parent=1 // loop_exit
      _

// kernel: lenet_forward.5
$region0: #{lenet_forward.5}
  #allocation0 [shape = 'u32[]', space=smem, size = 0x4, offset = 0x4, fixed_abs, tag = 'smem constant byte address 0x4 - core index']
  #allocation1 [shape = 'u32[144,128]{1,0:T(1,128)}', space=vmem, size = 0x12000, scoped, tag = 'internal scratch']
  %s0 = inlined_call_operand.vmem [shape: bf16[8,400], index: 0, kind: input, shape index: {}]
  %s1 = inlined_call_operand.vmem [shape: bf16[400,128], index: 1, kind: input, shape index: {}]
  %s2 = inlined_call_operand.vmem [shape: f32[1,128], index: 2, kind: input, shape index: {}]
  %s3 = inlined_call_operand.vmem [shape: bf16[128,128], index: 3, kind: input, shape index: {}]
  %s4 = inlined_call_operand.vmem [shape: f32[1,128], index: 4, kind: input, shape index: {}]
  %s5 = inlined_call_operand.vmem [shape: bf16[128,128], index: 5, kind: input, shape index: {}]
  %s6 = inlined_call_operand.vmem [shape: f32[1,128], index: 6, kind: input, shape index: {}]
  %s7 = inlined_call_operand.vmem [shape: f32[8,128], index: 7, kind: output, shape index: {}]
  %s8 = sld [smem:[#allocation0]]
  $region38: #{lenet_forward.5} parent=0
    _
  %s10 = ssub.s32 1, %s8
  %s11 = scalar_select 0, %s10, %s8
  // Predicated region
  $region2: #{lenet_forward.5} parent=0 // pred_check
    _
  $region3: #{lenet_forward.5} parent=0 // pred_check_branch
    %13 = sbr.rel (0) target = $region5
  $region4: #{lenet_forward.5} parent=0 // pred_region
    _
  $region5: #{lenet_forward.5} parent=0 // pred_fallthru
    _
  // Predicated region
  $region6: #{lenet_forward.5} parent=0 // pred_check
    _
  $region7: #{lenet_forward.5} parent=0 // pred_check_branch
    %15 = sbr.rel (0) target = $region9
  $region8: #{lenet_forward.5} parent=0 // pred_region
    _
  $region9: #{lenet_forward.5} parent=0 // pred_fallthru
    _
  // Predicated region
  $region10: #{lenet_forward.5} parent=0 // pred_check
    _
  $region11: #{lenet_forward.5} parent=0 // pred_check_branch
    %17 = sbr.rel (0) target = $region13
  $region12: #{lenet_forward.5} parent=0 // pred_region
    _
  $region13: #{lenet_forward.5} parent=0 // pred_fallthru
    _
  // Predicated region
  $region14: #{lenet_forward.5} parent=0 // pred_check
    _
  $region15: #{lenet_forward.5} parent=0 // pred_check_branch
    %19 = sbr.rel (0) target = $region17
  $region16: #{lenet_forward.5} parent=0 // pred_region
    _
  $region17: #{lenet_forward.5} parent=0 // pred_fallthru
    _
  // Predicated region
  $region18: #{lenet_forward.5} parent=0 // pred_check
    _
  $region19: #{lenet_forward.5} parent=0 // pred_check_branch
    %21 = sbr.rel (0) target = $region21
  $region20: #{lenet_forward.5} parent=0 // pred_region
    _
  $region21: #{lenet_forward.5} parent=0 // pred_fallthru
    _
  // Predicated region
  $region22: #{lenet_forward.5} parent=0 // pred_check
    _
  $region23: #{lenet_forward.5} parent=0 // pred_check_branch
    %23 = sbr.rel (0) target = $region25
  $region24: #{lenet_forward.5} parent=0 // pred_region
    _
  $region25: #{lenet_forward.5} parent=0 // pred_fallthru
    _
  // Predicated region
  $region26: #{lenet_forward.5} parent=0 // pred_check
    _
  $region27: #{lenet_forward.5} parent=0 // pred_check_branch
    %25 = sbr.rel (0) target = $region29
  $region28: #{lenet_forward.5} parent=0 // pred_region
    _
  $region29: #{lenet_forward.5} parent=0 // pred_fallthru
    _
  %v27 = vld [vmem:[%s0] sm:$0xff]
  %v28 = vld [vmem:[%s0 + $0x8] sm:$0xff]
  %v29 = vld [vmem:[%s1] sm:$0xf]
  %v30 = vld [vmem:[%s1 + $0x4] sm:$0xf]
  %v31 = vld [vmem:[%s1 + $0x8] sm:$0xf]
  %v32 = vld [vmem:[%s1 + $0xc] sm:$0xf]
  %v33 = vld [vmem:[%s1 + $0x10] sm:$0xf]
  %v34 = vld [vmem:[%s1 + $0x14] sm:$0xf]
  %v35 = vld [vmem:[%s1 + $0x18] sm:$0xf]
  %v36 = vld [vmem:[%s1 + $0x1c] sm:$0xf]
  %v37 = vld [vmem:[%s1 + $0x20] sm:$0xf]
  %v38 = vld [vmem:[%s1 + $0x24] sm:$0xf]
  %v39 = vld [vmem:[%s1 + $0x28] sm:$0xf]
  %v40 = vld [vmem:[%s1 + $0x2c] sm:$0xf]
  %v41 = vld [vmem:[%s1 + $0x30] sm:$0xf]
  %v42 = vld [vmem:[%s1 + $0x34] sm:$0xf]
  %v43 = vld [vmem:[%s1 + $0x38] sm:$0xf]
  %v44 = vld [vmem:[%s1 + $0x3c] sm:$0xf]
  %v45 = vld [vmem:[%s1 + $0x40] sm:$0xf]
  %v46 = vld [vmem:[%s1 + $0x44] sm:$0xf]
  %v47 = vld [vmem:[%s1 + $0x48] sm:$0xf]
  %v48 = vld [vmem:[%s1 + $0x4c] sm:$0xf]
  %v49 = vld [vmem:[%s1 + $0x50] sm:$0xf]
  %v50 = vld [vmem:[%s1 + $0x54] sm:$0xf]
  %v51 = vld [vmem:[%s1 + $0x58] sm:$0xf]
  %v52 = vld [vmem:[%s1 + $0x5c] sm:$0xf]
  %v53 = vld [vmem:[%s1 + $0x60] sm:$0xf]
  %v54 = vld [vmem:[%s1 + $0x64] sm:$0xf]
  %v55 = vld [vmem:[%s1 + $0x68] sm:$0xf]
  %v56 = vld [vmem:[%s1 + $0x6c] sm:$0xf]
  %v57 = vld [vmem:[%s1 + $0x70] sm:$0xf]
  %v58 = vld [vmem:[%s1 + $0x74] sm:$0xf]
  %v59 = vld [vmem:[%s1 + $0x78] sm:$0xf]
  %v60 = vld [vmem:[%s1 + $0x7c] sm:$0xf]
  %v61 = vld [vmem:[%s1 + $0x80] sm:$0xf]
  %v62 = vld [vmem:[%s1 + $0x84] sm:$0xf]
  %v63 = vld [vmem:[%s1 + $0x88] sm:$0xf]
  %v64 = vld [vmem:[%s1 + $0x8c] sm:$0xf]
  %v65 = vld [vmem:[%s1 + $0x90] sm:$0xf]
  %v66 = vld [vmem:[%s1 + $0x94] sm:$0xf]
  %v67 = vld [vmem:[%s1 + $0x98] sm:$0xf]
  %v68 = vld [vmem:[%s1 + $0x9c] sm:$0xf]
  %v69 = vld [vmem:[%s1 + $0xa0] sm:$0xf]
  %v70 = vld [vmem:[%s1 + $0xa4] sm:$0xf]
  %v71 = vld [vmem:[%s1 + $0xa8] sm:$0xf]
  %v72 = vld [vmem:[%s1 + $0xac] sm:$0xf]
  %v73 = vld [vmem:[%s1 + $0xb0] sm:$0xf]
  %v74 = vld [vmem:[%s1 + $0xb4] sm:$0xf]
  %v75 = vld [vmem:[%s1 + $0xb8] sm:$0xf]
  %v76 = vld [vmem:[%s1 + $0xbc] sm:$0xf]
  %v77 = vld [vmem:[%s1 + $0xc0] sm:$0xf]
  %v78 = vld [vmem:[%s1 + $0xc4] sm:$0xf]
  %v79 = vld [vmem:[%s2] sm:$0x1]
  %v81 = vlaneseq
  %v82 = vshrl.u32 %v81, 7
  %v83 = vsub.s32 0, %v82
  %v84 = vrot.slane %v79, %v83
  %v88 = vunpack.c.l.b16 %v27
  %v89 = vunpack.c.h.b16 %v27
  %v90 = vunpack.c.l.b16 %v28
  %v91 = vunpack.c.h.b16 %v28
  %v92 = vpack.c.b16 %v88, %v88
  %v93 = vpack.c.b16 %v89, %v89
  %v94 = vpack.c.b16 %v90, %v90
  %v95 = vpack.c.b16 %v91, %v91
  %v149 = vunpack.c.l.b16 %v29
  %v150 = vunpack.c.l.b16 %v30
  %v151 = vunpack.c.l.b16 %v31
  %v152 = vunpack.c.l.b16 %v32
  %v153 = vunpack.c.l.b16 %v33
  %v154 = vunpack.c.l.b16 %v34
  %v155 = vunpack.c.l.b16 %v35
  %v156 = vunpack.c.l.b16 %v36
  %v157 = vunpack.c.l.b16 %v37
  %v158 = vunpack.c.l.b16 %v38
  %v159 = vunpack.c.l.b16 %v39
  %v160 = vunpack.c.l.b16 %v40
  %v161 = vunpack.c.l.b16 %v41
  %v162 = vunpack.c.l.b16 %v42
  %v163 = vunpack.c.l.b16 %v43
  %v164 = vunpack.c.l.b16 %v44
  %v165 = vunpack.c.l.b16 %v45
  %v166 = vunpack.c.l.b16 %v46
  %v167 = vunpack.c.l.b16 %v47
  %v168 = vunpack.c.l.b16 %v48
  %v169 = vunpack.c.l.b16 %v49
  %v170 = vunpack.c.l.b16 %v50
  %v171 = vunpack.c.l.b16 %v51
  %v172 = vunpack.c.l.b16 %v52
  %v173 = vunpack.c.l.b16 %v53
  %v174 = vunpack.c.l.b16 %v54
  %v175 = vunpack.c.l.b16 %v55
  %v176 = vunpack.c.l.b16 %v56
  %v177 = vunpack.c.l.b16 %v57
  %v178 = vunpack.c.l.b16 %v58
  %v179 = vunpack.c.l.b16 %v59
  %v180 = vunpack.c.l.b16 %v60
  %v181 = vunpack.c.l.b16 %v61
  %v182 = vunpack.c.l.b16 %v62
  %v183 = vunpack.c.l.b16 %v63
  %v184 = vunpack.c.l.b16 %v64
  %v185 = vunpack.c.l.b16 %v65
  %v186 = vunpack.c.l.b16 %v66
  %v187 = vunpack.c.l.b16 %v67
  %v188 = vunpack.c.l.b16 %v68
  %v189 = vunpack.c.l.b16 %v69
  %v190 = vunpack.c.l.b16 %v70
  %v191 = vunpack.c.l.b16 %v71
  %v192 = vunpack.c.l.b16 %v72
  %v193 = vunpack.c.l.b16 %v73
  %v194 = vunpack.c.l.b16 %v74
  %v195 = vunpack.c.l.b16 %v75
  %v196 = vunpack.c.l.b16 %v76
  %v197 = vunpack.c.l.b16 %v77
  %v198 = vunpack.c.l.b16 %v78
  %v199 = vpack.c.b16 %v150, %v149
  %v200 = vpack.c.b16 %v152, %v151
  %v201 = vpack.c.b16 %v154, %v153
  %v202 = vpack.c.b16 %v156, %v155
  %v203 = vpack.c.b16 %v158, %v157
  %v204 = vpack.c.b16 %v160, %v159
  %v205 = vpack.c.b16 %v162, %v161
  %v206 = vpack.c.b16 %v164, %v163
  %v207 = vpack.c.b16 %v166, %v165
  %v208 = vpack.c.b16 %v168, %v167
  %v209 = vpack.c.b16 %v170, %v169
  %v210 = vpack.c.b16 %v172, %v171
  %v211 = vpack.c.b16 %v174, %v173
  %v212 = vpack.c.b16 %v176, %v175
  %v213 = vpack.c.b16 %v178, %v177
  %v214 = vpack.c.b16 %v180, %v179
  %v215 = vpack.c.b16 %v182, %v181
  %v216 = vpack.c.b16 %v184, %v183
  %v217 = vpack.c.b16 %v186, %v185
  %v218 = vpack.c.b16 %v188, %v187
  %v219 = vpack.c.b16 %v190, %v189
  %v220 = vpack.c.b16 %v192, %v191
  %v221 = vpack.c.b16 %v194, %v193
  %v222 = vpack.c.b16 %v196, %v195
  %v223 = vpack.c.b16 %v198, %v197
  %vm249 = vcmask 130048
  %v251 = vsel %vm249, %v95, 0
  %253 = vmatprep.subr.bf16.mxu0 0
  %254 = vmatpush1.bf16.msra.mxu0 %v199
  %255 = vmatprep.subr.bf16.mxu0 0
  %256 = vmatpush1.bf16.msra.mxu0 %v200
  %257 = vmatprep.subr.bf16.mxu0 0
  %258 = vmatpush1.bf16.msra.mxu0 %v201
  %259 = vmatprep.subr.bf16.mxu0 0
  %260 = vmatpush1.bf16.msra.mxu0 %v202
  %261 = vmatprep.subr.bf16.mxu0 0
  %262 = vmatpush1.bf16.msra.mxu0 %v203
  %263 = vmatprep.subr.bf16.mxu0 0
  %264 = vmatpush1.bf16.msra.mxu0 %v204
  %265 = vmatprep.subr.bf16.mxu0 0
  %266 = vmatpush1.bf16.msra.mxu0 %v205
  %267 = vmatprep.subr.bf16.mxu0 0
  %268 = vmatpush1.bf16.msra.mxu0 %v206
  %269 = vmatprep.subr.bf16.mxu0 0
  %270 = vmatpush1.bf16.msra.mxu0 %v207
  %271 = vmatprep.subr.bf16.mxu0 0
  %272 = vmatpush1.bf16.msra.mxu0 %v208
  %273 = vmatprep.subr.bf16.mxu0 0
  %274 = vmatpush1.bf16.msra.mxu0 %v209
  %275 = vmatprep.subr.bf16.mxu0 0
  %276 = vmatpush1.bf16.msra.mxu0 %v210
  %277 = vmatprep.subr.bf16.mxu0 0
  %278 = vmatpush1.bf16.msra.mxu0 %v211
  %279 = vmatprep.subr.bf16.mxu0 0
  %280 = vmatpush1.bf16.msra.mxu0 %v212
  %281 = vmatprep.subr.bf16.mxu0 0
  %282 = vmatpush1.bf16.msra.mxu0 %v213
  %283 = vmatprep.subr.bf16.mxu0 0
  %284 = vmatpush1.bf16.msra.mxu0 %v214
  %285 = vmatprep.mubr.bf16.mxu0 %v93
  %286 = vmatmul.mubr.bf16.gmra.mrb[0].mxu0 %v92
  %v287 = vpop.f32.mrb[0].mxu0
  %v288 = vadd.f32 %v84, %v287
  %v289 = vpop.f32.mrb[0].mxu0
  %v290 = vpop.f32.mrb[0].mxu0
  %v291 = vpop.f32.mrb[0].mxu0
  %292 = vdwg.mxu0
  %293 = vmatprep.subr.bf16.mxu0 0
  %294 = vmatpush1.bf16.msra.mxu0 %v215
  %295 = vmatprep.subr.bf16.mxu0 0
  %296 = vmatpush1.bf16.msra.mxu0 %v216
  %297 = vmatprep.subr.bf16.mxu0 0
  %298 = vmatpush1.bf16.msra.mxu0 %v217
  %299 = vmatprep.subr.bf16.mxu0 0
  %300 = vmatpush1.bf16.msra.mxu0 %v218
  %301 = vmatprep.subr.bf16.mxu0 0
  %302 = vmatpush1.bf16.msra.mxu0 %v219
  %303 = vmatprep.subr.bf16.mxu0 0
  %304 = vmatpush1.bf16.msra.mxu0 %v220
  %305 = vmatprep.subr.bf16.mxu0 0
  %306 = vmatpush1.bf16.msra.mxu0 %v221
  %307 = vmatprep.subr.bf16.mxu0 0
  %308 = vmatpush1.bf16.msra.mxu0 %v222
  %309 = vmatprep.subr.bf16.mxu0 0
  %310 = vmatpush1.bf16.msra.mxu0 %v223
  %311 = vmatprep.subr.bf16.mxu0 0
  %312 = vmatpush1.bf16.msra.mxu0 0
  %313 = vmatprep.subr.bf16.mxu0 0
  %314 = vmatpush1.bf16.msra.mxu0 0
  %315 = vmatprep.subr.bf16.mxu0 0
  %316 = vmatpush1.bf16.msra.mxu0 0
  %317 = vmatprep.subr.bf16.mxu0 0
  %318 = vmatpush1.bf16.msra.mxu0 0
  %319 = vmatprep.subr.bf16.mxu0 0
  %320 = vmatpush1.bf16.msra.mxu0 0
  %321 = vmatprep.subr.bf16.mxu0 0
  %322 = vmatpush1.bf16.msra.mxu0 0
  %323 = vmatprep.subr.bf16.mxu0 0
  %324 = vmatpush1.bf16.msra.mxu0 0
  %325 = vmatprep.mubr.bf16.mxu0 %v251
  %326 = vmatmul.mubr.bf16.gmra.mrb[0].mxu0 %v94
  %v327 = vpop.f32.mrb[0].mxu0
  %v328 = vadd.f32 %v288, %v327
  %v329 = vpop.f32.mrb[0].mxu0
  %v330 = vpop.f32.mrb[0].mxu0
  %v331 = vpop.f32.mrb[0].mxu0
  %332 = vdwg.mxu0
  %v333 = vmax.f32 %v328, 0.0
  %v334 = vpack.c.bf16 %v333, %v333
  %v335 = vld [vmem:[%s3] sm:$0xf]
  %v336 = vld [vmem:[%s3 + $0x4] sm:$0xf]
  %v337 = vld [vmem:[%s3 + $0x8] sm:$0xf]
  %v338 = vld [vmem:[%s3 + $0xc] sm:$0xf]
  %v339 = vld [vmem:[%s3 + $0x10] sm:$0xf]
  %v340 = vld [vmem:[%s3 + $0x14] sm:$0xf]
  %v341 = vld [vmem:[%s3 + $0x18] sm:$0xf]
  %v342 = vld [vmem:[%s3 + $0x1c] sm:$0xf]
  %v343 = vld [vmem:[%s3 + $0x20] sm:$0xf]
  %v344 = vld [vmem:[%s3 + $0x24] sm:$0xf]
  %v345 = vld [vmem:[%s3 + $0x28] sm:$0xf]
  %v346 = vld [vmem:[%s3 + $0x2c] sm:$0xf]
  %v347 = vld [vmem:[%s3 + $0x30] sm:$0xf]
  %v348 = vld [vmem:[%s3 + $0x34] sm:$0xf]
  %v349 = vld [vmem:[%s3 + $0x38] sm:$0xf]
  %v350 = vld [vmem:[%s3 + $0x3c] sm:$0xf]
  %v351 = vld [vmem:[%s4] sm:$0x1]
  %v353 = vlaneseq
  %v354 = vshrl.u32 %v353, 7
  %v355 = vsub.s32 0, %v354
  %v356 = vrot.slane %v351, %v355
  %v374 = vunpack.c.l.b16 %v335
  %v375 = vunpack.c.l.b16 %v336
  %v376 = vunpack.c.l.b16 %v337
  %v377 = vunpack.c.l.b16 %v338
  %v378 = vunpack.c.l.b16 %v339
  %v379 = vunpack.c.l.b16 %v340
  %v380 = vunpack.c.l.b16 %v341
  %v381 = vunpack.c.l.b16 %v342
  %v382 = vunpack.c.l.b16 %v343
  %v383 = vunpack.c.l.b16 %v344
  %v384 = vunpack.c.l.b16 %v345
  %v385 = vunpack.c.l.b16 %v346
  %v386 = vunpack.c.l.b16 %v347
  %v387 = vunpack.c.l.b16 %v348
  %v388 = vunpack.c.l.b16 %v349
  %v389 = vunpack.c.l.b16 %v350
  %v390 = vpack.c.b16 %v375, %v374
  %v391 = vpack.c.b16 %v377, %v376
  %v392 = vpack.c.b16 %v379, %v378
  %v393 = vpack.c.b16 %v381, %v380
  %v394 = vpack.c.b16 %v383, %v382
  %v395 = vpack.c.b16 %v385, %v384
  %v396 = vpack.c.b16 %v387, %v386
  %v397 = vpack.c.b16 %v389, %v388
  %406 = vmatprep.subr.bf16.mxu0 0
  %407 = vmatpush1.bf16.msra.mxu0 %v390
  %408 = vmatprep.subr.bf16.mxu0 0
  %409 = vmatpush1.bf16.msra.mxu0 %v391
  %410 = vmatprep.subr.bf16.mxu0 0
  %411 = vmatpush1.bf16.msra.mxu0 %v392
  %412 = vmatprep.subr.bf16.mxu0 0
  %413 = vmatpush1.bf16.msra.mxu0 %v393
  %414 = vmatprep.subr.bf16.mxu0 0
  %415 = vmatpush1.bf16.msra.mxu0 %v394
  %416 = vmatprep.subr.bf16.mxu0 0
  %417 = vmatpush1.bf16.msra.mxu0 %v395
  %418 = vmatprep.subr.bf16.mxu0 0
  %419 = vmatpush1.bf16.msra.mxu0 %v396
  %420 = vmatprep.subr.bf16.mxu0 0
  %421 = vmatpush1.bf16.msra.mxu0 %v397
  %422 = vmatprep.subr.bf16.mxu0 0
  %423 = vmatpush1.bf16.msra.mxu0 0
  %424 = vmatprep.subr.bf16.mxu0 0
  %425 = vmatpush1.bf16.msra.mxu0 0
  %426 = vmatprep.subr.bf16.mxu0 0
  %427 = vmatpush1.bf16.msra.mxu0 0
  %428 = vmatprep.subr.bf16.mxu0 0
  %429 = vmatpush1.bf16.msra.mxu0 0
  %430 = vmatprep.subr.bf16.mxu0 0
  %431 = vmatpush1.bf16.msra.mxu0 0
  %432 = vmatprep.subr.bf16.mxu0 0
  %433 = vmatpush1.bf16.msra.mxu0 0
  %434 = vmatprep.subr.bf16.mxu0 0
  %435 = vmatpush1.bf16.msra.mxu0 0
  %436 = vmatprep.subr.bf16.mxu0 0
  %437 = vmatpush1.bf16.msra.mxu0 0
  %438 = vmatprep.mubr.bf16.mxu0 0
  %439 = vmatmul.mubr.bf16.gmra.mrb[0].mxu0 %v334
  %v440 = vpop.f32.mrb[0].mxu0
  %v441 = vadd.f32 %v356, %v440
  %v442 = vpop.f32.mrb[0].mxu0
  %v443 = vpop.f32.mrb[0].mxu0
  %v444 = vpop.f32.mrb[0].mxu0
  %445 = vdwg.mxu0
  %v446 = vmax.f32 %v441, 0.0
  %v447 = vpack.c.bf16 %v446, %v446
  %v448 = vld [vmem:[%s5] sm:$0xf]
  %v449 = vld [vmem:[%s5 + $0x4] sm:$0xf]
  %v450 = vld [vmem:[%s5 + $0x8] sm:$0xf]
  %v451 = vld [vmem:[%s5 + $0xc] sm:$0xf]
  %v452 = vld [vmem:[%s5 + $0x10] sm:$0xf]
  %v453 = vld [vmem:[%s5 + $0x14] sm:$0xf]
  %v454 = vld [vmem:[%s5 + $0x18] sm:$0xf]
  %v455 = vld [vmem:[%s5 + $0x1c] sm:$0xf]
  %v456 = vld [vmem:[%s5 + $0x20] sm:$0xf]
  %v457 = vld [vmem:[%s5 + $0x24] sm:$0xf]
  %v458 = vld [vmem:[%s5 + $0x28] sm:$0xf]
  %v459 = vld [vmem:[%s5 + $0x2c] sm:$0xf]
  %v460 = vld [vmem:[%s5 + $0x30] sm:$0xf]
  %v461 = vld [vmem:[%s5 + $0x34] sm:$0xf]
  %v462 = vld [vmem:[%s5 + $0x38] sm:$0xf]
  %v463 = vld [vmem:[%s5 + $0x3c] sm:$0xf]
  %v464 = vld [vmem:[%s6] sm:$0x1]
  %v466 = vlaneseq
  %v467 = vshrl.u32 %v466, 7
  %v468 = vsub.s32 0, %v467
  %v469 = vrot.slane %v464, %v468
  %v487 = vunpack.c.l.b16 %v448
  %v488 = vunpack.c.l.b16 %v449
  %v489 = vunpack.c.l.b16 %v450
  %v490 = vunpack.c.l.b16 %v451
  %v491 = vunpack.c.l.b16 %v452
  %v492 = vunpack.c.l.b16 %v453
  %v493 = vunpack.c.l.b16 %v454
  %v494 = vunpack.c.l.b16 %v455
  %v495 = vunpack.c.l.b16 %v456
  %v496 = vunpack.c.l.b16 %v457
  %v497 = vunpack.c.l.b16 %v458
  %v498 = vunpack.c.l.b16 %v459
  %v499 = vunpack.c.l.b16 %v460
  %v500 = vunpack.c.l.b16 %v461
  %v501 = vunpack.c.l.b16 %v462
  %v502 = vunpack.c.l.b16 %v463
  %v503 = vpack.c.b16 %v488, %v487
  %v504 = vpack.c.b16 %v490, %v489
  %v505 = vpack.c.b16 %v492, %v491
  %v506 = vpack.c.b16 %v494, %v493
  %v507 = vpack.c.b16 %v496, %v495
  %v508 = vpack.c.b16 %v498, %v497
  %v509 = vpack.c.b16 %v500, %v499
  %v510 = vpack.c.b16 %v502, %v501
  %519 = vmatprep.subr.bf16.mxu0 0
  %520 = vmatpush1.bf16.msra.mxu0 %v503
  %521 = vmatprep.subr.bf16.mxu0 0
  %522 = vmatpush1.bf16.msra.mxu0 %v504
  %523 = vmatprep.subr.bf16.mxu0 0
  %524 = vmatpush1.bf16.msra.mxu0 %v505
  %525 = vmatprep.subr.bf16.mxu0 0
  %526 = vmatpush1.bf16.msra.mxu0 %v506
  %527 = vmatprep.subr.bf16.mxu0 0
  %528 = vmatpush1.bf16.msra.mxu0 %v507
  %529 = vmatprep.subr.bf16.mxu0 0
  %530 = vmatpush1.bf16.msra.mxu0 %v508
  %531 = vmatprep.subr.bf16.mxu0 0
  %532 = vmatpush1.bf16.msra.mxu0 %v509
  %533 = vmatprep.subr.bf16.mxu0 0
  %534 = vmatpush1.bf16.msra.mxu0 %v510
  %535 = vmatprep.subr.bf16.mxu0 0
  %536 = vmatpush1.bf16.msra.mxu0 0
  %537 = vmatprep.subr.bf16.mxu0 0
  %538 = vmatpush1.bf16.msra.mxu0 0
  %539 = vmatprep.subr.bf16.mxu0 0
  %540 = vmatpush1.bf16.msra.mxu0 0
  %541 = vmatprep.subr.bf16.mxu0 0
  %542 = vmatpush1.bf16.msra.mxu0 0
  %543 = vmatprep.subr.bf16.mxu0 0
  %544 = vmatpush1.bf16.msra.mxu0 0
  %545 = vmatprep.subr.bf16.mxu0 0
  %546 = vmatpush1.bf16.msra.mxu0 0
  %547 = vmatprep.subr.bf16.mxu0 0
  %548 = vmatpush1.bf16.msra.mxu0 0
  %549 = vmatprep.subr.bf16.mxu0 0
  %550 = vmatpush1.bf16.msra.mxu0 0
  %551 = vmatprep.mubr.bf16.mxu0 0
  %552 = vmatmul.mubr.bf16.gmra.mrb[0].mxu0 %v447
  %v553 = vpop.f32.mrb[0].mxu0
  %v554 = vadd.f32 %v469, %v553
  %v555 = vpop.f32.mrb[0].mxu0
  %v556 = vpop.f32.mrb[0].mxu0
  %v557 = vpop.f32.mrb[0].mxu0
  %558 = vdwg.mxu0
  %559 = vst [vmem:[%s7] sm:$0xff] %v554
  // Predicated region
  $region30: #{lenet_forward.5} parent=0 // pred_check
    _
  $region31: #{lenet_forward.5} parent=0 // pred_check_branch
    %561 = sbr.rel (0) target = $region33
  $region32: #{lenet_forward.5} parent=0 // pred_region
    _
  $region33: #{lenet_forward.5} parent=0 // pred_fallthru
    _
  // Predicated region
  $region34: #{lenet_forward.5} parent=0 // pred_check
    _
  $region35: #{lenet_forward.5} parent=0 // pred_check_branch
    %563 = sbr.rel (0) target = $region37
  $region36: #{lenet_forward.5} parent=0 // pred_region
    _
  $region37: #{lenet_forward.5} parent=0 // pred_fallthru
    _

</llo_original>
